<compile_context>
chip_gen: v5e
topology: v5e:2x2
jax: 0.10.0
libtpu: 0.0.40
codegen_flags: <defaults>
</compile_context>

<pallas_src>
import functools

import jax
import jax.numpy as jnp
from jax import lax
from jax.experimental import pallas as pl
from jax.experimental.pallas import tpu as pltpu

HIDDEN = 256        # internal width of the encoder (fixed by the module)
HEADS = 4           # GATConv heads (concat=False -> mean over heads)
LEAKY_SLOPE = 0.2   # PyG GATConv default negative_slope
LN_EPS = 1e-5       # nn.LayerNorm default eps
NEG_INF = -1e9


def hierarchical_graph_encoder_kernel(
        x_ref, adj_ref,
        w1_ref, w2_ref,                      # node_encoder weights (bf16)
        wgat_ext_ref, wa_src_t_ref,          # GAT ext weight (1/H folded + dst cols), src att (bf16)
        wg1_ref, wg2_ref,                    # GCNConv x2 weights (bf16)
        wp1_ref, wp2_ref,                    # projection weights (bf16, wp2 lane-padded)
        b256_ref, bE_ref,                    # packed biases / LN affine (f32)
        out_ref,                             # [G, E_pad] f32
        xh_stack_ref,                        # VMEM scratch [H*GN, 256] bf16
        *, e_valid):
    f32 = jnp.float32
    bf16 = jnp.bfloat16

    x = x_ref[...]                           # [GN, F]  f32
    adj = adj_ref[...]                       # [GN, GN] bf16 block-diag, self-loops included
    gn = x.shape[0]
    n_graphs = out_ref.shape[0]
    n_per_graph = gn // n_graphs

    # packed small params
    b256 = b256_ref[...]                                     # [6, 256]
    bE = bE_ref[...]                                          # [3, E_pad]
    b1, b2, b_gat = b256[0:1, :], b256[1:2, :], b256[2:3, :]
    b_g1, b_g2, b_p1 = b256[3:4, :], b256[4:5, :], b256[5:6, :]
    b_p2, ln_gamma, ln_beta = bE[0:1, :], bE[1:2, :], bE[2:3, :]

    # ---- node_encoder: Linear(F,256) -> ReLU -> Dropout(id) -> Linear(256,256) ----
    h = jnp.dot(x.astype(bf16), w1_ref[...], preferred_element_type=f32) + b1
    h = jnp.maximum(h, 0.0)
    h = jnp.dot(h.astype(bf16), w2_ref[...], preferred_element_type=f32) + b2   # [GN, 256] f32
    h_bf = h.astype(bf16)

    # ---- local path: GATConv(256 -> 256, heads=4, concat=False) ----
    # one matmul gives per-head features (pre-scaled by 1/H) AND per-head dst scores
    big = jnp.dot(h_bf, wgat_ext_ref[...], preferred_element_type=f32)   # [GN, H*256 + 128]
    xh_all = big[:, :HEADS * HIDDEN].astype(bf16)                         # scaled by 1/H
    dst_all = big[:, HEADS * HIDDEN:]                                     # [GN, 128], first H lanes valid
    src_scores = lax.dot_general(wa_src_t_ref[...], h_bf,
                                 (((1,), (1,)), ((), ())),
                                 preferred_element_type=f32)              # [H, GN]
    # softmax only over neighbours j of i (block-diag adj keeps graphs separate)
    mask_bias = jnp.where(adj > 0.5, 0.0, NEG_INF).astype(f32)            # [GN, GN]

    alphas = []
    for hd in range(HEADS):
        e = dst_all[:, hd:hd + 1] + src_scores[hd:hd + 1, :]   # e[i,j] = a_dst[i] + a_src[j]
        e = jnp.where(e > 0, e, LEAKY_SLOPE * e)                # LeakyReLU(0.2)
        e = e + mask_bias
        e = e - jnp.max(e, axis=-1, keepdims=True)              # f32 softmax
        p = jnp.exp(e)
        inv = pl.reciprocal(jnp.sum(p, axis=-1, keepdims=True), approx=True)   # EUP, not VALU
        alphas.append((p * inv).astype(bf16))
        # row-stack this head's transformed features into the scratch
        xh_stack_ref[hd * gn:(hd + 1) * gn, :] = xh_all[:, hd * HIDDEN:(hd + 1) * HIDDEN]
    # fused aggregation: [GN, H*GN] @ [H*GN, 256]; 1/H already folded -> mean over heads
    alpha_cat = jnp.concatenate(alphas, axis=-1)
    gat = jnp.dot(alpha_cat, xh_stack_ref[...], preferred_element_type=f32)
    x_local = jnp.maximum(gat + b_gat, 0.0)

    # ---- global path: GCNConv x2 with D^-1/2 (A+I) D^-1/2 normalization ----
    # (matches PyG gcn_norm for symmetric/undirected adjacency)
    adj_f = adj.astype(f32)
    deg_i = jnp.sum(adj_f, axis=1, keepdims=True)     # [GN, 1]
    deg_j = jnp.sum(adj_f, axis=0, keepdims=True)     # [1, GN]
    a_hat_bf = (adj_f * lax.rsqrt(deg_i) * lax.rsqrt(deg_j)).astype(bf16)

    g = jnp.dot(h_bf, wg1_ref[...], preferred_element_type=f32)
    g = jnp.dot(a_hat_bf, g.astype(bf16), preferred_element_type=f32) + b_g1
    g = jnp.maximum(g, 0.0)
    g = jnp.dot(g.astype(bf16), wg2_ref[...], preferred_element_type=f32)
    g = jnp.dot(a_hat_bf, g.astype(bf16), preferred_element_type=f32) + b_g2
    x_global = jnp.maximum(g, 0.0)

    # ---- combine + per-graph global_mean_pool (block pooling matmul) ----
    x_comb = (x_local + x_global).astype(bf16)                 # [GN, 256]
    gidx = lax.broadcasted_iota(jnp.int32, (n_graphs, gn), 0)
    cidx = lax.broadcasted_iota(jnp.int32, (n_graphs, gn), 1)
    in_graph = jnp.logical_and(cidx >= gidx * n_per_graph,
                               cidx < (gidx + 1) * n_per_graph)
    pool = jnp.where(in_graph, 1.0, 0.0).astype(bf16)          # [G, GN], exact 0/1
    pooled = jnp.dot(pool, x_comb, preferred_element_type=f32) * (1.0 / n_per_graph)   # [G, 256]

    # ---- projection: Linear(256,256) -> ReLU -> Dropout(id) -> Linear(256,E_pad) ----
    p1 = jnp.maximum(
        jnp.dot(pooled.astype(bf16), wp1_ref[...], preferred_element_type=f32) + b_p1, 0.0)
    emb = jnp.dot(p1.astype(bf16), wp2_ref[...], preferred_element_type=f32) + b_p2   # [G, E_pad]

    # ---- LayerNorm over the valid embedding dims (padding lanes are exact zeros) ----
    e_pad = emb.shape[-1]
    lane = lax.broadcasted_iota(jnp.int32, (1, e_pad), 1)
    vmask = (lane < e_valid).astype(f32)
    mu = jnp.sum(emb, axis=-1, keepdims=True) * (1.0 / e_valid)
    centered = (emb - mu) * vmask
    var = jnp.sum(centered * centered, axis=-1, keepdims=True) * (1.0 / e_valid)
    out_ref[...] = centered * lax.rsqrt(var + LN_EPS) * ln_gamma + ln_beta


def edge_index_to_adj(edge_index, num_nodes):
    """Dense adjacency: adj[dst, src] = 1.0, plus self-loops (add_self_loops=True)."""
    src, dst = edge_index[0], edge_index[1]
    adj = jnp.zeros((num_nodes, num_nodes), jnp.float32)
    adj = adj.at[dst, src].set(1.0)
    adj = jnp.maximum(adj, jnp.eye(num_nodes, dtype=jnp.float32))
    return adj


def init_params(key, node_feature_dim, embedding_dim, scale=0.05):
    ks = jax.random.split(key, 16)
    nrm = lambda k, s: (scale * jax.random.normal(k, s)).astype(jnp.float32)
    return {
        # node_encoder
        "w1": nrm(ks[0], (node_feature_dim, HIDDEN)), "b1": nrm(ks[1], (1, HIDDEN)),
        "w2": nrm(ks[2], (HIDDEN, HIDDEN)),           "b2": nrm(ks[3], (1, HIDDEN)),
        # GATConv (lin bias=False; bias of size out_channels since concat=False)
        "w_gat": nrm(ks[4], (HIDDEN, HEADS * HIDDEN)),
        "att_src": nrm(ks[5], (HEADS, HIDDEN)),
        "att_dst": nrm(ks[6], (HEADS, HIDDEN)),
        "b_gat": nrm(ks[7], (1, HIDDEN)),
        # GCNConv x2
        "w_gcn1": nrm(ks[8], (HIDDEN, HIDDEN)),  "b_gcn1": nrm(ks[9], (1, HIDDEN)),
        "w_gcn2": nrm(ks[10], (HIDDEN, HIDDEN)), "b_gcn2": nrm(ks[11], (1, HIDDEN)),
        # projection
        "w_proj1": nrm(ks[12], (HIDDEN, HIDDEN)),        "b_proj1": nrm(ks[13], (1, HIDDEN)),
        "w_proj2": nrm(ks[14], (HIDDEN, embedding_dim)), "b_proj2": nrm(ks[15], (1, embedding_dim)),
        # layer norm (affine init like nn.LayerNorm)
        "ln_gamma": jnp.ones((1, embedding_dim), jnp.float32),
        "ln_beta": jnp.zeros((1, embedding_dim), jnp.float32),
    }


def _const_index_map(ndim):
    return lambda s: (0,) * ndim


def hierarchical_graph_encoder_batched(x_b, adj_b, params, *, target_rows=256):
    """Batched forward: x_b [B, N, F], adj_b [B, N, N] -> [B, embedding_dim].

    Packs G graphs per grid step block-diagonally so every MXU op sees up to
    `target_rows` rows (256 fills one v6e/v7x MXU tile; pass 128 on v5e).
    Weights are bf16 and VMEM-resident across grid steps via constant
    index_maps; the grid axis is "parallel".
    """
    B, N, F = x_b.shape
    E = params["ln_gamma"].shape[-1]
    E_pad = max(128, ((E + 127) // 128) * 128)
    bf16 = jnp.bfloat16
    f32 = jnp.float32

    # ---- graphs-per-step: fill ~target_rows, keep >= 2 grid steps when possible ----
    g_cap = max(1, target_rows // N)
    G = min(g_cap, B)
    if B >= 2:
        G = max(1, min(G, -(-B // 2)))     # >= 2 steps -> both v7x TensorCores busy
    S = -(-B // G)
    B_pad = S * G
    GN = G * N

    # pad batch with isolated dummy graphs (identity adjacency keeps degrees >= 1)
    if B_pad != B:
        pad = B_pad - B
        x_b = jnp.concatenate([x_b, jnp.zeros((pad, N, F), x_b.dtype)], axis=0)
        adj_b = jnp.concatenate(
            [adj_b, jnp.broadcast_to(jnp.eye(N, dtype=adj_b.dtype), (pad, N, N))], axis=0)

    # block-diagonal packing: G graphs per grid step
    x_packed = x_b.reshape(S, GN, F).astype(f32)
    adj_g = adj_b.reshape(S, G, N, N).astype(f32)
    eye_g = jnp.eye(G, dtype=f32)
    adj_big = (eye_g[None, :, None, :, None] * adj_g[:, :, :, None, :]
               ).reshape(S, GN, GN).astype(bf16)              # 0/1 exact in bf16

    # ---- fold attention vectors, 1/HEADS scale and dst-score columns into one GAT weight ----
    wgat = params["w_gat"].astype(f32)                        # [256, H*256]
    wgat_heads = wgat.reshape(HIDDEN, HEADS, HIDDEN)
    wa_src_t = jnp.einsum("khd,hd->hk", wgat_heads, params["att_src"])   # [H, 256]
    wa_dst = jnp.einsum("khd,hd->kh", wgat_heads, params["att_dst"])     # [256, H]
    wa_dst_pad = jnp.zeros((HIDDEN, 128), f32).at[:, :HEADS].set(wa_dst)
    wgat_ext = jnp.concatenate([wgat * (1.0 / HEADS), wa_dst_pad], axis=1)  # [256, H*256+128]

    # lane-dense output: pad embedding dim
    wp2 = jnp.zeros((HIDDEN, E_pad), f32).at[:, :E].set(params["w_proj2"].astype(f32))

    def _pad_e(v):
        return jnp.zeros((1, E_pad), f32).at[:, :E].set(v.astype(f32))

    weights = (
        params["w1"].astype(bf16), params["w2"].astype(bf16),
        wgat_ext.astype(bf16), wa_src_t.astype(bf16),
        params["w_gcn1"].astype(bf16), params["w_gcn2"].astype(bf16),
        params["w_proj1"].astype(bf16), wp2.astype(bf16),
    )
    # Pack all tiny bias / affine tensors into two refs.
    b256 = jnp.concatenate(
        [params["b1"], params["b2"], params["b_gat"],
         params["b_gcn1"], params["b_gcn2"], params["b_proj1"]], axis=0).astype(f32)   # [6, 256]
    bE = jnp.concatenate(
        [_pad_e(params["b_proj2"]), _pad_e(params["ln_gamma"]), _pad_e(params["ln_beta"])],
        axis=0)                                                                         # [3, E_pad]

    small = (b256, bE)
    args = (x_packed, adj_big) + weights + small

    in_specs = [
        pl.BlockSpec((None, GN, F), lambda s: (s, 0, 0)),    # node features: per-group block
        pl.BlockSpec((None, GN, GN), lambda s: (s, 0, 0)),   # block-diag adjacency (bf16)
    ]
    for a in weights + small:
        in_specs.append(pl.BlockSpec(a.shape, _const_index_map(a.ndim)))

    kernel = functools.partial(hierarchical_graph_encoder_kernel, e_valid=E)

    out = pl.pallas_call(
        kernel,
        out_shape=jax.ShapeDtypeStruct((S, G, E_pad), f32),
        grid=(S,),
        in_specs=in_specs,
        out_specs=pl.BlockSpec((None, G, E_pad), lambda s: (s, 0, 0)),
        scratch_shapes=[pltpu.VMEM((HEADS * GN, HIDDEN), bf16)],   # row-stacked per-head features
        compiler_params=pltpu.CompilerParams(
            dimension_semantics=("parallel",)),
    )(*args)
    return out.reshape(B_pad, E_pad)[:B, :E]


def hierarchical_graph_encoder(x, edge_index, params):
    """Single-graph wrapper matching the PyTorch forward (batch=None)."""
    n = x.shape[0]
    adj = edge_index_to_adj(edge_index, n)
    return hierarchical_graph_encoder_batched(x[None], adj[None], params)


# ---------------- pure-JAX f32 reference (for correctness checking) ----------------
def _reference_single(x, adj, params):
    h = jnp.maximum(x @ params["w1"] + params["b1"], 0.0)
    h = h @ params["w2"] + params["b2"]
    wgat_heads = params["w_gat"].reshape(HIDDEN, HEADS, HIDDEN)
    mask = adj > 0.5
    heads_out = []
    for hd in range(HEADS):
        xh = h @ wgat_heads[:, hd, :]
        a_dst = xh @ params["att_dst"][hd]
        a_src = xh @ params["att_src"][hd]
        e = a_dst[:, None] + a_src[None, :]
        e = jnp.where(e > 0, e, LEAKY_SLOPE * e)
        e = jnp.where(mask, e, -jnp.inf)
        e = e - jnp.max(e, axis=-1, keepdims=True)
        p = jnp.exp(e)
        heads_out.append((p / jnp.sum(p, axis=-1, keepdims=True)) @ xh)
    x_local = jnp.maximum(sum(heads_out) / HEADS + params["b_gat"], 0.0)
    deg_i = adj.sum(axis=1, keepdims=True)
    deg_j = adj.sum(axis=0, keepdims=True)
    a_hat = adj / jnp.sqrt(deg_i) / jnp.sqrt(deg_j)
    g = jnp.maximum(a_hat @ (h @ params["w_gcn1"]) + params["b_gcn1"], 0.0)
    g = jnp.maximum(a_hat @ (g @ params["w_gcn2"]) + params["b_gcn2"], 0.0)
    pooled = jnp.mean(x_local + g, axis=0, keepdims=True)
    p1 = jnp.maximum(pooled @ params["w_proj1"] + params["b_proj1"], 0.0)
    emb = p1 @ params["w_proj2"] + params["b_proj2"]
    mu = emb.mean(axis=-1, keepdims=True)
    var = ((emb - mu) ** 2).mean(axis=-1, keepdims=True)
    return (emb - mu) / jnp.sqrt(var + LN_EPS) * params["ln_gamma"] + params["ln_beta"]


if __name__ == "__main__":
    NODE_FEATURE_DIM = 32
    EMBEDDING_DIM = 64
    N_NODES = 16
    N_GRAPHS = 4

    key = jax.random.PRNGKey(0)
    k_x, k_p = jax.random.split(key)

    x_b = jax.random.normal(k_x, (N_GRAPHS, N_NODES, NODE_FEATURE_DIM), jnp.float32)

    # ring graph and ring + skip-2-chord graph (undirected, no explicit self-loops)
    src = jnp.arange(N_NODES, dtype=jnp.int32)
    ring_dst = (src + 1) % N_NODES
    ei_ring = jnp.stack([jnp.concatenate([src, ring_dst]),
                         jnp.concatenate([ring_dst, src])], axis=0)
    chord_dst = (src + 2) % N_NODES
    ei_chord = jnp.stack([jnp.concatenate([src, ring_dst, src, chord_dst]),
                          jnp.concatenate([ring_dst, src, chord_dst, src])], axis=0)
    adj_ring = edge_index_to_adj(ei_ring, N_NODES)
    adj_chord = edge_index_to_adj(ei_chord, N_NODES)
    adj_b = jnp.stack([adj_ring, adj_chord, adj_chord, adj_ring], axis=0)

    params = init_params(k_p, NODE_FEATURE_DIM, EMBEDDING_DIM)

    # TODO(synk): training-mode dropout has no in-kernel equivalent here; eval-mode (identity) is used.
    out = jax.block_until_ready(hierarchical_graph_encoder_batched(x_b, adj_b, params))
    assert out.shape == (N_GRAPHS, EMBEDDING_DIM)
    assert bool(jnp.all(jnp.isfinite(out)))

    # pure-JAX f32 reference (per graph) — bf16 kernel should agree closely
    ref = jnp.concatenate(
        [_reference_single(x_b[i], adj_b[i], params) for i in range(N_GRAPHS)], axis=0)
    max_err = float(jnp.max(jnp.abs(out - ref)))
    assert max_err < 0.2, f"kernel vs reference max abs error too large: {max_err}"

    # single-graph API (same as the PyTorch module with batch=None)
    out_single = jax.block_until_ready(hierarchical_graph_encoder(x_b[0], ei_ring, params))
    assert out_single.shape == (1, EMBEDDING_DIM)
    assert bool(jnp.all(jnp.isfinite(out_single)))

    print("KERNEL_OK")
</pallas_src>

<mosaic_0001>
module attributes {stable_mosaic.version = 11 : i64} {
  func.func @hierarchical_graph_encoder_kernel(%arg0: i32, %arg1: memref<1x32x32xf32, #tpu.memory_space<vmem>>, %arg2: memref<1x32x32xbf16, #tpu.memory_space<vmem>>, %arg3: memref<32x256xbf16, #tpu.memory_space<vmem>>, %arg4: memref<256x256xbf16, #tpu.memory_space<vmem>>, %arg5: memref<256x1152xbf16, #tpu.memory_space<vmem>>, %arg6: memref<4x256xbf16, #tpu.memory_space<vmem>>, %arg7: memref<256x256xbf16, #tpu.memory_space<vmem>>, %arg8: memref<256x256xbf16, #tpu.memory_space<vmem>>, %arg9: memref<256x256xbf16, #tpu.memory_space<vmem>>, %arg10: memref<256x128xbf16, #tpu.memory_space<vmem>>, %arg11: memref<6x256xf32, #tpu.memory_space<vmem>>, %arg12: memref<3x128xf32, #tpu.memory_space<vmem>>, %arg13: memref<1x2x128xf32, #tpu.memory_space<vmem>>, %arg14: memref<128x256xbf16, #tpu.memory_space<vmem>>) attributes {dimension_semantics = [#tpu.dimension_semantics<parallel>], iteration_bounds = array<i64: 2>, scalar_prefetch = 0 : i64, scratch_operands = 1 : i64, tpu.core_type = #tpu.core_type<tc>, window_params = [{transform_indices = @transform_0, window_bounds = array<i64: 1, 32, 32>}, {transform_indices = @transform_1, window_bounds = array<i64: 1, 32, 32>}, {pipeline_mode = #tpu.pipeline_mode<synchronous>, transform_indices = @transform_2, window_bounds = array<i64: 32, 256>}, {pipeline_mode = #tpu.pipeline_mode<synchronous>, transform_indices = @transform_3, window_bounds = array<i64: 256, 256>}, {pipeline_mode = #tpu.pipeline_mode<synchronous>, transform_indices = @transform_4, window_bounds = array<i64: 256, 1152>}, {pipeline_mode = #tpu.pipeline_mode<synchronous>, transform_indices = @transform_5, window_bounds = array<i64: 4, 256>}, {pipeline_mode = #tpu.pipeline_mode<synchronous>, transform_indices = @transform_6, window_bounds = array<i64: 256, 256>}, {pipeline_mode = #tpu.pipeline_mode<synchronous>, transform_indices = @transform_7, window_bounds = array<i64: 256, 256>}, {pipeline_mode = #tpu.pipeline_mode<synchronous>, transform_indices = @transform_8, window_bounds = array<i64: 256, 256>}, {pipeline_mode = #tpu.pipeline_mode<synchronous>, transform_indices = @transform_9, window_bounds = array<i64: 256, 128>}, {pipeline_mode = #tpu.pipeline_mode<synchronous>, transform_indices = @transform_10, window_bounds = array<i64: 6, 256>}, {pipeline_mode = #tpu.pipeline_mode<synchronous>, transform_indices = @transform_11, window_bounds = array<i64: 3, 128>}, {transform_indices = @transform_12, window_bounds = array<i64: 1, 2, 128>}]} {
    %c0 = arith.constant 0 : index
    %c0_0 = arith.constant 0 : index
    %c0_1 = arith.constant 0 : index
    %0 = vector.load %arg1[%c0, %c0_0, %c0_1] : memref<1x32x32xf32, #tpu.memory_space<vmem>>, vector<1x32x32xf32>
    %1 = vector.shape_cast %0 : vector<1x32x32xf32> to vector<32x32xf32>
    %c0_2 = arith.constant 0 : index
    %c0_3 = arith.constant 0 : index
    %c0_4 = arith.constant 0 : index
    %2 = vector.load %arg2[%c0_2, %c0_3, %c0_4] : memref<1x32x32xbf16, #tpu.memory_space<vmem>>, vector<1x32x32xbf16>
    %3 = vector.shape_cast %2 : vector<1x32x32xbf16> to vector<32x32xbf16>
    %c0_5 = arith.constant 0 : index
    %c0_6 = arith.constant 0 : index
    %4 = vector.load %arg11[%c0_5, %c0_6] : memref<6x256xf32, #tpu.memory_space<vmem>>, vector<6x256xf32>
    %c0_7 = arith.constant 0 : index
    %c0_8 = arith.constant 0 : index
    %5 = vector.load %arg12[%c0_7, %c0_8] : memref<3x128xf32, #tpu.memory_space<vmem>>, vector<3x128xf32>
    %6 = vector.extract_strided_slice %4 {offsets = [0, 0], sizes = [1, 256], strides = [1, 1]} : vector<6x256xf32> to vector<1x256xf32>
    %7 = vector.extract_strided_slice %4 {offsets = [1, 0], sizes = [1, 256], strides = [1, 1]} : vector<6x256xf32> to vector<1x256xf32>
    %8 = vector.extract_strided_slice %4 {offsets = [2, 0], sizes = [1, 256], strides = [1, 1]} : vector<6x256xf32> to vector<1x256xf32>
    %9 = vector.extract_strided_slice %4 {offsets = [3, 0], sizes = [1, 256], strides = [1, 1]} : vector<6x256xf32> to vector<1x256xf32>
    %10 = vector.extract_strided_slice %4 {offsets = [4, 0], sizes = [1, 256], strides = [1, 1]} : vector<6x256xf32> to vector<1x256xf32>
    %11 = vector.extract_strided_slice %4 {offsets = [5, 0], sizes = [1, 256], strides = [1, 1]} : vector<6x256xf32> to vector<1x256xf32>
    %12 = vector.extract_strided_slice %5 {offsets = [0, 0], sizes = [1, 128], strides = [1, 1]} : vector<3x128xf32> to vector<1x128xf32>
    %13 = vector.extract_strided_slice %5 {offsets = [1, 0], sizes = [1, 128], strides = [1, 1]} : vector<3x128xf32> to vector<1x128xf32>
    %14 = vector.extract_strided_slice %5 {offsets = [2, 0], sizes = [1, 128], strides = [1, 1]} : vector<3x128xf32> to vector<1x128xf32>
    %15 = arith.truncf %1 : vector<32x32xf32> to vector<32x32xbf16>
    %c0_9 = arith.constant 0 : index
    %c0_10 = arith.constant 0 : index
    %16 = vector.load %arg3[%c0_9, %c0_10] : memref<32x256xbf16, #tpu.memory_space<vmem>>, vector<32x256xbf16>
    %cst = arith.constant dense<0.000000e+00> : vector<32x256xf32>
    %17 = tpu.matmul %15, %16, %cst {dimension_numbers = #tpu.dot_dimension_numbers<[1], [0], [0], [1], [0, 0, 1, 1], [], []>} : vector<32x32xbf16>, vector<32x256xbf16>, vector<32x256xf32> -> vector<32x256xf32>
    %18 = vector.broadcast %6 : vector<1x256xf32> to vector<32x256xf32>
    %19 = arith.addf %17, %18 : vector<32x256xf32>
    %cst_11 = arith.constant 0.000000e+00 : f32
    %20 = vector.broadcast %cst_11 : f32 to vector<32x256xf32>
    %21 = arith.maximumf %19, %20 : vector<32x256xf32>
    %22 = arith.truncf %21 : vector<32x256xf32> to vector<32x256xbf16>
    %c0_12 = arith.constant 0 : index
    %c0_13 = arith.constant 0 : index
    %23 = vector.load %arg4[%c0_12, %c0_13] : memref<256x256xbf16, #tpu.memory_space<vmem>>, vector<256x256xbf16>
    %cst_14 = arith.constant dense<0.000000e+00> : vector<32x256xf32>
    %24 = tpu.matmul %22, %23, %cst_14 {dimension_numbers = #tpu.dot_dimension_numbers<[1], [0], [0], [1], [0, 0, 1, 1], [], []>} : vector<32x256xbf16>, vector<256x256xbf16>, vector<32x256xf32> -> vector<32x256xf32>
    %25 = vector.broadcast %7 : vector<1x256xf32> to vector<32x256xf32>
    %26 = arith.addf %24, %25 : vector<32x256xf32>
    %27 = arith.truncf %26 : vector<32x256xf32> to vector<32x256xbf16>
    %c0_15 = arith.constant 0 : index
    %c0_16 = arith.constant 0 : index
    %28 = vector.load %arg5[%c0_15, %c0_16] : memref<256x1152xbf16, #tpu.memory_space<vmem>>, vector<256x1152xbf16>
    %cst_17 = arith.constant dense<0.000000e+00> : vector<32x1152xf32>
    %29 = tpu.matmul %27, %28, %cst_17 {dimension_numbers = #tpu.dot_dimension_numbers<[1], [0], [0], [1], [0, 0, 1, 1], [], []>} : vector<32x256xbf16>, vector<256x1152xbf16>, vector<32x1152xf32> -> vector<32x1152xf32>
    %30 = vector.extract_strided_slice %29 {offsets = [0, 0], sizes = [32, 1024], strides = [1, 1]} : vector<32x1152xf32> to vector<32x1024xf32>
    %31 = arith.truncf %30 : vector<32x1024xf32> to vector<32x1024xbf16>
    %32 = vector.extract_strided_slice %29 {offsets = [0, 1024], sizes = [32, 128], strides = [1, 1]} : vector<32x1152xf32> to vector<32x128xf32>
    %c0_18 = arith.constant 0 : index
    %c0_19 = arith.constant 0 : index
    %33 = vector.load %arg6[%c0_18, %c0_19] : memref<4x256xbf16, #tpu.memory_space<vmem>>, vector<4x256xbf16>
    %cst_20 = arith.constant dense<0.000000e+00> : vector<4x32xf32>
    %34 = tpu.matmul %33, %27, %cst_20 {dimension_numbers = #tpu.dot_dimension_numbers<[1], [1], [0], [0], [0, 0, 1, 0], [], []>} : vector<4x256xbf16>, vector<32x256xbf16>, vector<4x32xf32> -> vector<4x32xf32>
    %cst_21 = arith.constant 5.000000e-01 : bf16
    %35 = vector.broadcast %cst_21 : bf16 to vector<32x32xbf16>
    %36 = arith.cmpf ogt, %3, %35 : vector<32x32xbf16>
    %cst_22 = arith.constant 0.000000e+00 : f32
    %cst_23 = arith.constant -1.000000e+09 : f32
    %37 = vector.broadcast %cst_22 : f32 to vector<32x32xf32>
    %38 = vector.broadcast %cst_23 : f32 to vector<32x32xf32>
    %39 = arith.select %36, %37, %38 : vector<32x32xi1>, vector<32x32xf32>
    %40 = vector.extract_strided_slice %32 {offsets = [0, 0], sizes = [32, 1], strides = [1, 1]} : vector<32x128xf32> to vector<32x1xf32>
    %41 = vector.extract_strided_slice %34 {offsets = [0, 0], sizes = [1, 32], strides = [1, 1]} : vector<4x32xf32> to vector<1x32xf32>
    %42 = vector.broadcast %40 : vector<32x1xf32> to vector<32x32xf32>
    %43 = vector.broadcast %41 : vector<1x32xf32> to vector<32x32xf32>
    %44 = arith.addf %42, %43 : vector<32x32xf32>
    %cst_24 = arith.constant 0.000000e+00 : f32
    %45 = vector.broadcast %cst_24 : f32 to vector<32x32xf32>
    %46 = arith.cmpf ogt, %44, %45 : vector<32x32xf32>
    %cst_25 = arith.constant 2.000000e-01 : f32
    %47 = vector.broadcast %cst_25 : f32 to vector<32x32xf32>
    %48 = arith.mulf %47, %44 : vector<32x32xf32>
    %49 = arith.select %46, %44, %48 : vector<32x32xi1>, vector<32x32xf32>
    %50 = arith.addf %49, %39 : vector<32x32xf32>
    %cst_26 = arith.constant dense<0xFF800000> : vector<32xf32>
    %51 = vector.multi_reduction <maximumf>, %50, %cst_26 [1] : vector<32x32xf32> to vector<32xf32>
    %52 = vector.shape_cast %51 : vector<32xf32> to vector<32x1xf32>
    %53 = vector.broadcast %52 : vector<32x1xf32> to vector<32x32xf32>
    %54 = arith.subf %50, %53 : vector<32x32xf32>
    %55 = math.exp %54 : vector<32x32xf32>
    %cst_27 = arith.constant dense<0.000000e+00> : vector<32xf32>
    %56 = vector.multi_reduction <add>, %55, %cst_27 [1] : vector<32x32xf32> to vector<32xf32>
    %57 = vector.shape_cast %56 : vector<32xf32> to vector<32x1xf32>
    %58 = tpu.reciprocal %57 {approx = true} : vector<32x1xf32> -> vector<32x1xf32>
    %59 = vector.broadcast %58 : vector<32x1xf32> to vector<32x32xf32>
    %60 = arith.mulf %55, %59 : vector<32x32xf32>
    %61 = arith.truncf %60 : vector<32x32xf32> to vector<32x32xbf16>
    %62 = vector.extract_strided_slice %31 {offsets = [0, 0], sizes = [32, 256], strides = [1, 1]} : vector<32x1024xbf16> to vector<32x256xbf16>
    %c0_28 = arith.constant 0 : index
    %c0_29 = arith.constant 0 : index
    %63 = vector.load %arg14[%c0_28, %c0_29] : memref<128x256xbf16, #tpu.memory_space<vmem>>, vector<32x256xbf16>
    tpu.vector_store %arg14[%c0_28, %c0_29], %62 {strides = array<i32>} : memref<128x256xbf16, #tpu.memory_space<vmem>>, vector<32x256xbf16>,
    %64 = vector.extract_strided_slice %32 {offsets = [0, 1], sizes = [32, 1], strides = [1, 1]} : vector<32x128xf32> to vector<32x1xf32>
    %65 = vector.extract_strided_slice %34 {offsets = [1, 0], sizes = [1, 32], strides = [1, 1]} : vector<4x32xf32> to vector<1x32xf32>
    %66 = vector.broadcast %64 : vector<32x1xf32> to vector<32x32xf32>
    %67 = vector.broadcast %65 : vector<1x32xf32> to vector<32x32xf32>
    %68 = arith.addf %66, %67 : vector<32x32xf32>
    %cst_30 = arith.constant 0.000000e+00 : f32
    %69 = vector.broadcast %cst_30 : f32 to vector<32x32xf32>
    %70 = arith.cmpf ogt, %68, %69 : vector<32x32xf32>
    %cst_31 = arith.constant 2.000000e-01 : f32
    %71 = vector.broadcast %cst_31 : f32 to vector<32x32xf32>
    %72 = arith.mulf %71, %68 : vector<32x32xf32>
    %73 = arith.select %70, %68, %72 : vector<32x32xi1>, vector<32x32xf32>
    %74 = arith.addf %73, %39 : vector<32x32xf32>
    %cst_32 = arith.constant dense<0xFF800000> : vector<32xf32>
    %75 = vector.multi_reduction <maximumf>, %74, %cst_32 [1] : vector<32x32xf32> to vector<32xf32>
    %76 = vector.shape_cast %75 : vector<32xf32> to vector<32x1xf32>
    %77 = vector.broadcast %76 : vector<32x1xf32> to vector<32x32xf32>
    %78 = arith.subf %74, %77 : vector<32x32xf32>
    %79 = math.exp %78 : vector<32x32xf32>
    %cst_33 = arith.constant dense<0.000000e+00> : vector<32xf32>
    %80 = vector.multi_reduction <add>, %79, %cst_33 [1] : vector<32x32xf32> to vector<32xf32>
    %81 = vector.shape_cast %80 : vector<32xf32> to vector<32x1xf32>
    %82 = tpu.reciprocal %81 {approx = true} : vector<32x1xf32> -> vector<32x1xf32>
    %83 = vector.broadcast %82 : vector<32x1xf32> to vector<32x32xf32>
    %84 = arith.mulf %79, %83 : vector<32x32xf32>
    %85 = arith.truncf %84 : vector<32x32xf32> to vector<32x32xbf16>
    %86 = vector.extract_strided_slice %31 {offsets = [0, 256], sizes = [32, 256], strides = [1, 1]} : vector<32x1024xbf16> to vector<32x256xbf16>
    %c32 = arith.constant 32 : index
    %c0_34 = arith.constant 0 : index
    %87 = vector.load %arg14[%c32, %c0_34] : memref<128x256xbf16, #tpu.memory_space<vmem>>, vector<32x256xbf16>
    tpu.vector_store %arg14[%c32, %c0_34], %86 {strides = array<i32>} : memref<128x256xbf16, #tpu.memory_space<vmem>>, vector<32x256xbf16>,
    %88 = vector.extract_strided_slice %32 {offsets = [0, 2], sizes = [32, 1], strides = [1, 1]} : vector<32x128xf32> to vector<32x1xf32>
    %89 = vector.extract_strided_slice %34 {offsets = [2, 0], sizes = [1, 32], strides = [1, 1]} : vector<4x32xf32> to vector<1x32xf32>
    %90 = vector.broadcast %88 : vector<32x1xf32> to vector<32x32xf32>
    %91 = vector.broadcast %89 : vector<1x32xf32> to vector<32x32xf32>
    %92 = arith.addf %90, %91 : vector<32x32xf32>
    %cst_35 = arith.constant 0.000000e+00 : f32
    %93 = vector.broadcast %cst_35 : f32 to vector<32x32xf32>
    %94 = arith.cmpf ogt, %92, %93 : vector<32x32xf32>
    %cst_36 = arith.constant 2.000000e-01 : f32
    %95 = vector.broadcast %cst_36 : f32 to vector<32x32xf32>
    %96 = arith.mulf %95, %92 : vector<32x32xf32>
    %97 = arith.select %94, %92, %96 : vector<32x32xi1>, vector<32x32xf32>
    %98 = arith.addf %97, %39 : vector<32x32xf32>
    %cst_37 = arith.constant dense<0xFF800000> : vector<32xf32>
    %99 = vector.multi_reduction <maximumf>, %98, %cst_37 [1] : vector<32x32xf32> to vector<32xf32>
    %100 = vector.shape_cast %99 : vector<32xf32> to vector<32x1xf32>
    %101 = vector.broadcast %100 : vector<32x1xf32> to vector<32x32xf32>
    %102 = arith.subf %98, %101 : vector<32x32xf32>
    %103 = math.exp %102 : vector<32x32xf32>
    %cst_38 = arith.constant dense<0.000000e+00> : vector<32xf32>
    %104 = vector.multi_reduction <add>, %103, %cst_38 [1] : vector<32x32xf32> to vector<32xf32>
    %105 = vector.shape_cast %104 : vector<32xf32> to vector<32x1xf32>
    %106 = tpu.reciprocal %105 {approx = true} : vector<32x1xf32> -> vector<32x1xf32>
    %107 = vector.broadcast %106 : vector<32x1xf32> to vector<32x32xf32>
    %108 = arith.mulf %103, %107 : vector<32x32xf32>
    %109 = arith.truncf %108 : vector<32x32xf32> to vector<32x32xbf16>
    %110 = vector.extract_strided_slice %31 {offsets = [0, 512], sizes = [32, 256], strides = [1, 1]} : vector<32x1024xbf16> to vector<32x256xbf16>
    %c64 = arith.constant 64 : index
    %c0_39 = arith.constant 0 : index
    %111 = vector.load %arg14[%c64, %c0_39] : memref<128x256xbf16, #tpu.memory_space<vmem>>, vector<32x256xbf16>
    tpu.vector_store %arg14[%c64, %c0_39], %110 {strides = array<i32>} : memref<128x256xbf16, #tpu.memory_space<vmem>>, vector<32x256xbf16>,
    %112 = vector.extract_strided_slice %32 {offsets = [0, 3], sizes = [32, 1], strides = [1, 1]} : vector<32x128xf32> to vector<32x1xf32>
    %113 = vector.extract_strided_slice %34 {offsets = [3, 0], sizes = [1, 32], strides = [1, 1]} : vector<4x32xf32> to vector<1x32xf32>
    %114 = vector.broadcast %112 : vector<32x1xf32> to vector<32x32xf32>
    %115 = vector.broadcast %113 : vector<1x32xf32> to vector<32x32xf32>
    %116 = arith.addf %114, %115 : vector<32x32xf32>
    %cst_40 = arith.constant 0.000000e+00 : f32
    %117 = vector.broadcast %cst_40 : f32 to vector<32x32xf32>
    %118 = arith.cmpf ogt, %116, %117 : vector<32x32xf32>
    %cst_41 = arith.constant 2.000000e-01 : f32
    %119 = vector.broadcast %cst_41 : f32 to vector<32x32xf32>
    %120 = arith.mulf %119, %116 : vector<32x32xf32>
    %121 = arith.select %118, %116, %120 : vector<32x32xi1>, vector<32x32xf32>
    %122 = arith.addf %121, %39 : vector<32x32xf32>
    %cst_42 = arith.constant dense<0xFF800000> : vector<32xf32>
    %123 = vector.multi_reduction <maximumf>, %122, %cst_42 [1] : vector<32x32xf32> to vector<32xf32>
    %124 = vector.shape_cast %123 : vector<32xf32> to vector<32x1xf32>
    %125 = vector.broadcast %124 : vector<32x1xf32> to vector<32x32xf32>
    %126 = arith.subf %122, %125 : vector<32x32xf32>
    %127 = math.exp %126 : vector<32x32xf32>
    %cst_43 = arith.constant dense<0.000000e+00> : vector<32xf32>
    %128 = vector.multi_reduction <add>, %127, %cst_43 [1] : vector<32x32xf32> to vector<32xf32>
    %129 = vector.shape_cast %128 : vector<32xf32> to vector<32x1xf32>
    %130 = tpu.reciprocal %129 {approx = true} : vector<32x1xf32> -> vector<32x1xf32>
    %131 = vector.broadcast %130 : vector<32x1xf32> to vector<32x32xf32>
    %132 = arith.mulf %127, %131 : vector<32x32xf32>
    %133 = arith.truncf %132 : vector<32x32xf32> to vector<32x32xbf16>
    %134 = vector.extract_strided_slice %31 {offsets = [0, 768], sizes = [32, 256], strides = [1, 1]} : vector<32x1024xbf16> to vector<32x256xbf16>
    %c96 = arith.constant 96 : index
    %c0_44 = arith.constant 0 : index
    %135 = vector.load %arg14[%c96, %c0_44] : memref<128x256xbf16, #tpu.memory_space<vmem>>, vector<32x256xbf16>
    tpu.vector_store %arg14[%c96, %c0_44], %134 {strides = array<i32>} : memref<128x256xbf16, #tpu.memory_space<vmem>>, vector<32x256xbf16>,
    %136 = tpu.concatenate %61, %85, %109, %133 in 1 : vector<32x32xbf16>, vector<32x32xbf16>, vector<32x32xbf16>, vector<32x32xbf16> -> vector<32x128xbf16>
    %c0_45 = arith.constant 0 : index
    %c0_46 = arith.constant 0 : index
    %137 = vector.load %arg14[%c0_45, %c0_46] : memref<128x256xbf16, #tpu.memory_space<vmem>>, vector<128x256xbf16>
    %cst_47 = arith.constant dense<0.000000e+00> : vector<32x256xf32>
    %138 = tpu.matmul %136, %137, %cst_47 {dimension_numbers = #tpu.dot_dimension_numbers<[1], [0], [0], [1], [0, 0, 1, 1], [], []>} : vector<32x128xbf16>, vector<128x256xbf16>, vector<32x256xf32> -> vector<32x256xf32>
    %139 = vector.broadcast %8 : vector<1x256xf32> to vector<32x256xf32>
    %140 = arith.addf %138, %139 : vector<32x256xf32>
    %cst_48 = arith.constant 0.000000e+00 : f32
    %141 = vector.broadcast %cst_48 : f32 to vector<32x256xf32>
    %142 = arith.maximumf %140, %141 : vector<32x256xf32>
    %143 = arith.extf %3 : vector<32x32xbf16> to vector<32x32xf32>
    %cst_49 = arith.constant dense<0.000000e+00> : vector<32xf32>
    %144 = vector.multi_reduction <add>, %143, %cst_49 [1] : vector<32x32xf32> to vector<32xf32>
    %145 = vector.shape_cast %144 : vector<32xf32> to vector<32x1xf32>
    %cst_50 = arith.constant dense<0.000000e+00> : vector<32xf32>
    %146 = vector.multi_reduction <add>, %143, %cst_50 [0] : vector<32x32xf32> to vector<32xf32>
    %147 = vector.shape_cast %146 : vector<32xf32> to vector<1x32xf32>
    %148 = math.rsqrt %145 : vector<32x1xf32>
    %149 = vector.broadcast %148 : vector<32x1xf32> to vector<32x32xf32>
    %150 = arith.mulf %143, %149 : vector<32x32xf32>
    %151 = math.rsqrt %147 : vector<1x32xf32>
    %152 = vector.broadcast %151 : vector<1x32xf32> to vector<32x32xf32>
    %153 = arith.mulf %150, %152 : vector<32x32xf32>
    %154 = arith.truncf %153 : vector<32x32xf32> to vector<32x32xbf16>
    %c0_51 = arith.constant 0 : index
    %c0_52 = arith.constant 0 : index
    %155 = vector.load %arg7[%c0_51, %c0_52] : memref<256x256xbf16, #tpu.memory_space<vmem>>, vector<256x256xbf16>
    %cst_53 = arith.constant dense<0.000000e+00> : vector<32x256xf32>
    %156 = tpu.matmul %27, %155, %cst_53 {dimension_numbers = #tpu.dot_dimension_numbers<[1], [0], [0], [1], [0, 0, 1, 1], [], []>} : vector<32x256xbf16>, vector<256x256xbf16>, vector<32x256xf32> -> vector<32x256xf32>
    %157 = arith.truncf %156 : vector<32x256xf32> to vector<32x256xbf16>
    %cst_54 = arith.constant dense<0.000000e+00> : vector<32x256xf32>
    %158 = tpu.matmul %154, %157, %cst_54 {dimension_numbers = #tpu.dot_dimension_numbers<[1], [0], [0], [1], [0, 0, 1, 1], [], []>} : vector<32x32xbf16>, vector<32x256xbf16>, vector<32x256xf32> -> vector<32x256xf32>
    %159 = vector.broadcast %9 : vector<1x256xf32> to vector<32x256xf32>
    %160 = arith.addf %158, %159 : vector<32x256xf32>
    %cst_55 = arith.constant 0.000000e+00 : f32
    %161 = vector.broadcast %cst_55 : f32 to vector<32x256xf32>
    %162 = arith.maximumf %160, %161 : vector<32x256xf32>
    %163 = arith.truncf %162 : vector<32x256xf32> to vector<32x256xbf16>
    %c0_56 = arith.constant 0 : index
    %c0_57 = arith.constant 0 : index
    %164 = vector.load %arg8[%c0_56, %c0_57] : memref<256x256xbf16, #tpu.memory_space<vmem>>, vector<256x256xbf16>
    %cst_58 = arith.constant dense<0.000000e+00> : vector<32x256xf32>
    %165 = tpu.matmul %163, %164, %cst_58 {dimension_numbers = #tpu.dot_dimension_numbers<[1], [0], [0], [1], [0, 0, 1, 1], [], []>} : vector<32x256xbf16>, vector<256x256xbf16>, vector<32x256xf32> -> vector<32x256xf32>
    %166 = arith.truncf %165 : vector<32x256xf32> to vector<32x256xbf16>
    %cst_59 = arith.constant dense<0.000000e+00> : vector<32x256xf32>
    %167 = tpu.matmul %154, %166, %cst_59 {dimension_numbers = #tpu.dot_dimension_numbers<[1], [0], [0], [1], [0, 0, 1, 1], [], []>} : vector<32x32xbf16>, vector<32x256xbf16>, vector<32x256xf32> -> vector<32x256xf32>
    %168 = vector.broadcast %10 : vector<1x256xf32> to vector<32x256xf32>
    %169 = arith.addf %167, %168 : vector<32x256xf32>
    %cst_60 = arith.constant 0.000000e+00 : f32
    %170 = vector.broadcast %cst_60 : f32 to vector<32x256xf32>
    %171 = arith.maximumf %169, %170 : vector<32x256xf32>
    %172 = arith.addf %142, %171 : vector<32x256xf32>
    %173 = arith.truncf %172 : vector<32x256xf32> to vector<32x256xbf16>
    %174 = tpu.iota {dimensions = array<i32: 0>} : vector<2x32xi32>
    %175 = tpu.iota {dimensions = array<i32: 1>} : vector<2x32xi32>
    %c16_i32 = arith.constant 16 : i32
    %176 = vector.broadcast %c16_i32 : i32 to vector<2x32xi32>
    %177 = arith.muli %174, %176 : vector<2x32xi32>
    %178 = arith.cmpi sge, %175, %177 : vector<2x32xi32>
    %c1_i32 = arith.constant 1 : i32
    %179 = vector.broadcast %c1_i32 : i32 to vector<2x32xi32>
    %180 = arith.addi %174, %179 : vector<2x32xi32>
    %c16_i32_61 = arith.constant 16 : i32
    %181 = vector.broadcast %c16_i32_61 : i32 to vector<2x32xi32>
    %182 = arith.muli %180, %181 : vector<2x32xi32>
    %183 = arith.cmpi slt, %175, %182 : vector<2x32xi32>
    %184 = arith.andi %178, %183 : vector<2x32xi1>
    %cst_62 = arith.constant 1.000000e+00 : f32
    %cst_63 = arith.constant 0.000000e+00 : f32
    %185 = vector.broadcast %cst_62 : f32 to vector<2x32xf32>
    %186 = vector.broadcast %cst_63 : f32 to vector<2x32xf32>
    %187 = arith.select %184, %185, %186 : vector<2x32xi1>, vector<2x32xf32>
    %188 = arith.truncf %187 : vector<2x32xf32> to vector<2x32xbf16>
    %cst_64 = arith.constant dense<0.000000e+00> : vector<2x256xf32>
    %189 = tpu.matmul %188, %173, %cst_64 {dimension_numbers = #tpu.dot_dimension_numbers<[1], [0], [0], [1], [0, 0, 1, 1], [], []>} : vector<2x32xbf16>, vector<32x256xbf16>, vector<2x256xf32> -> vector<2x256xf32>
    %cst_65 = arith.constant 6.250000e-02 : f32
    %190 = vector.broadcast %cst_65 : f32 to vector<2x256xf32>
    %191 = arith.mulf %189, %190 : vector<2x256xf32>
    %192 = arith.truncf %191 : vector<2x256xf32> to vector<2x256xbf16>
    %c0_66 = arith.constant 0 : index
    %c0_67 = arith.constant 0 : index
    %193 = vector.load %arg9[%c0_66, %c0_67] : memref<256x256xbf16, #tpu.memory_space<vmem>>, vector<256x256xbf16>
    %cst_68 = arith.constant dense<0.000000e+00> : vector<2x256xf32>
    %194 = tpu.matmul %192, %193, %cst_68 {dimension_numbers = #tpu.dot_dimension_numbers<[1], [0], [0], [1], [0, 0, 1, 1], [], []>} : vector<2x256xbf16>, vector<256x256xbf16>, vector<2x256xf32> -> vector<2x256xf32>
    %195 = vector.broadcast %11 : vector<1x256xf32> to vector<2x256xf32>
    %196 = arith.addf %194, %195 : vector<2x256xf32>
    %cst_69 = arith.constant 0.000000e+00 : f32
    %197 = vector.broadcast %cst_69 : f32 to vector<2x256xf32>
    %198 = arith.maximumf %196, %197 : vector<2x256xf32>
    %199 = arith.truncf %198 : vector<2x256xf32> to vector<2x256xbf16>
    %c0_70 = arith.constant 0 : index
    %c0_71 = arith.constant 0 : index
    %200 = vector.load %arg10[%c0_70, %c0_71] : memref<256x128xbf16, #tpu.memory_space<vmem>>, vector<256x128xbf16>
    %cst_72 = arith.constant dense<0.000000e+00> : vector<2x128xf32>
    %201 = tpu.matmul %199, %200, %cst_72 {dimension_numbers = #tpu.dot_dimension_numbers<[1], [0], [0], [1], [0, 0, 1, 1], [], []>} : vector<2x256xbf16>, vector<256x128xbf16>, vector<2x128xf32> -> vector<2x128xf32>
    %202 = vector.broadcast %12 : vector<1x128xf32> to vector<2x128xf32>
    %203 = arith.addf %201, %202 : vector<2x128xf32>
    %204 = tpu.iota {dimensions = array<i32: 1>} : vector<1x128xi32>
    %c64_i32 = arith.constant 64 : i32
    %205 = vector.broadcast %c64_i32 : i32 to vector<1x128xi32>
    %206 = arith.cmpi slt, %204, %205 : vector<1x128xi32>
    %207 = arith.extui %206 : vector<1x128xi1> to vector<1x128xi32>
    %208 = arith.sitofp %207 : vector<1x128xi32> to vector<1x128xf32>
    %cst_73 = arith.constant dense<0.000000e+00> : vector<2xf32>
    %209 = vector.multi_reduction <add>, %203, %cst_73 [1] : vector<2x128xf32> to vector<2xf32>
    %210 = vector.shape_cast %209 : vector<2xf32> to vector<2x1xf32>
    %cst_74 = arith.constant 1.562500e-02 : f32
    %211 = vector.broadcast %cst_74 : f32 to vector<2x1xf32>
    %212 = arith.mulf %210, %211 : vector<2x1xf32>
    %213 = vector.broadcast %212 : vector<2x1xf32> to vector<2x128xf32>
    %214 = arith.subf %203, %213 : vector<2x128xf32>
    %215 = vector.broadcast %208 : vector<1x128xf32> to vector<2x128xf32>
    %216 = arith.mulf %214, %215 : vector<2x128xf32>
    %217 = arith.mulf %216, %216 : vector<2x128xf32>
    %cst_75 = arith.constant dense<0.000000e+00> : vector<2xf32>
    %218 = vector.multi_reduction <add>, %217, %cst_75 [1] : vector<2x128xf32> to vector<2xf32>
    %219 = vector.shape_cast %218 : vector<2xf32> to vector<2x1xf32>
    %cst_76 = arith.constant 1.562500e-02 : f32
    %220 = vector.broadcast %cst_76 : f32 to vector<2x1xf32>
    %221 = arith.mulf %219, %220 : vector<2x1xf32>
    %cst_77 = arith.constant 9.99999974E-6 : f32
    %222 = vector.broadcast %cst_77 : f32 to vector<2x1xf32>
    %223 = arith.addf %221, %222 : vector<2x1xf32>
    %224 = math.rsqrt %223 : vector<2x1xf32>
    %225 = vector.broadcast %224 : vector<2x1xf32> to vector<2x128xf32>
    %226 = arith.mulf %216, %225 : vector<2x128xf32>
    %227 = vector.broadcast %13 : vector<1x128xf32> to vector<2x128xf32>
    %228 = arith.mulf %226, %227 : vector<2x128xf32>
    %229 = vector.broadcast %14 : vector<1x128xf32> to vector<2x128xf32>
    %230 = arith.addf %228, %229 : vector<2x128xf32>
    %c0_78 = arith.constant 0 : index
    %c0_79 = arith.constant 0 : index
    %c0_80 = arith.constant 0 : index
    %231 = vector.load %arg13[%c0_78, %c0_79, %c0_80] : memref<1x2x128xf32, #tpu.memory_space<vmem>>, vector<1x2x128xf32>
    %232 = vector.shape_cast %231 : vector<1x2x128xf32> to vector<2x128xf32>
    %233 = vector.shape_cast %230 : vector<2x128xf32> to vector<1x2x128xf32>
    tpu.vector_store %arg13[%c0_78, %c0_79, %c0_80], %233 {strides = array<i32>} : memref<1x2x128xf32, #tpu.memory_space<vmem>>, vector<1x2x128xf32>,
    return
  }
  func.func @transform_0(%arg0: i32) -> (i32, i32, i32) {
    %c0_i32 = arith.constant 0 : i32
    %c0_i32_0 = arith.constant 0 : i32
    %c0_i32_1 = arith.constant 0 : i32
    return %arg0, %c0_i32, %c0_i32_0 : i32, i32, i32
  }
  func.func @transform_1(%arg0: i32) -> (i32, i32, i32) {
    %c0_i32 = arith.constant 0 : i32
    %c0_i32_0 = arith.constant 0 : i32
    %c0_i32_1 = arith.constant 0 : i32
    return %arg0, %c0_i32, %c0_i32_0 : i32, i32, i32
  }
  func.func @transform_2(%arg0: i32) -> (i32, i32) {
    %c0_i32 = arith.constant 0 : i32
    %c0_i32_0 = arith.constant 0 : i32
    %c0_i32_1 = arith.constant 0 : i32
    return %c0_i32, %c0_i32_0 : i32, i32
  }
  func.func @transform_3(%arg0: i32) -> (i32, i32) {
    %c0_i32 = arith.constant 0 : i32
    %c0_i32_0 = arith.constant 0 : i32
    %c0_i32_1 = arith.constant 0 : i32
    return %c0_i32, %c0_i32_0 : i32, i32
  }
  func.func @transform_4(%arg0: i32) -> (i32, i32) {
    %c0_i32 = arith.constant 0 : i32
    %c0_i32_0 = arith.constant 0 : i32
    %c0_i32_1 = arith.constant 0 : i32
    return %c0_i32, %c0_i32_0 : i32, i32
  }
  func.func @transform_5(%arg0: i32) -> (i32, i32) {
    %c0_i32 = arith.constant 0 : i32
    %c0_i32_0 = arith.constant 0 : i32
    %c0_i32_1 = arith.constant 0 : i32
    return %c0_i32, %c0_i32_0 : i32, i32
  }
  func.func @transform_6(%arg0: i32) -> (i32, i32) {
    %c0_i32 = arith.constant 0 : i32
    %c0_i32_0 = arith.constant 0 : i32
    %c0_i32_1 = arith.constant 0 : i32
    return %c0_i32, %c0_i32_0 : i32, i32
  }
  func.func @transform_7(%arg0: i32) -> (i32, i32) {
    %c0_i32 = arith.constant 0 : i32
    %c0_i32_0 = arith.constant 0 : i32
    %c0_i32_1 = arith.constant 0 : i32
    return %c0_i32, %c0_i32_0 : i32, i32
  }
  func.func @transform_8(%arg0: i32) -> (i32, i32) {
    %c0_i32 = arith.constant 0 : i32
    %c0_i32_0 = arith.constant 0 : i32
    %c0_i32_1 = arith.constant 0 : i32
    return %c0_i32, %c0_i32_0 : i32, i32
  }
  func.func @transform_9(%arg0: i32) -> (i32, i32) {
    %c0_i32 = arith.constant 0 : i32
    %c0_i32_0 = arith.constant 0 : i32
    %c0_i32_1 = arith.constant 0 : i32
    return %c0_i32, %c0_i32_0 : i32, i32
  }
  func.func @transform_10(%arg0: i32) -> (i32, i32) {
    %c0_i32 = arith.constant 0 : i32
    %c0_i32_0 = arith.constant 0 : i32
    %c0_i32_1 = arith.constant 0 : i32
    return %c0_i32, %c0_i32_0 : i32, i32
  }
  func.func @transform_11(%arg0: i32) -> (i32, i32) {
    %c0_i32 = arith.constant 0 : i32
    %c0_i32_0 = arith.constant 0 : i32
    %c0_i32_1 = arith.constant 0 : i32
    return %c0_i32, %c0_i32_0 : i32, i32
  }
  func.func @transform_12(%arg0: i32) -> (i32, i32, i32) {
    %c0_i32 = arith.constant 0 : i32
    %c0_i32_0 = arith.constant 0 : i32
    %c0_i32_1 = arith.constant 0 : i32
    return %arg0, %c0_i32, %c0_i32_0 : i32, i32, i32
  }
}

</mosaic_0001>

<llo_original>
// kernel: tpu_custom_call.1
$region0: #{tpu_custom_call.1}
  #allocation0 [shape = 'u32[]', space=smem, size = 0x4, offset = 0x4, fixed_abs, tag = 'smem constant byte address 0x4 - core index']
  #allocation1 [shape = 'u32[72,128]{1,0:T(1,128)}', space=vmem, size = 0x9000, scoped, tag = 'internal scratch']
  #allocation2 [shape = 'bf16[128,256]{1,0:T(8,128)(2,1)}', space=vmem, size = 0x10000, scoped, tag = 'scratch operand']
  %s0 = inlined_call_operand.hbm [shape: f32[2,32,32], index: 0, kind: input, shape index: {}]
  %s1 = inlined_call_operand.hbm [shape: bf16[2,32,32], index: 1, kind: input, shape index: {}]
  %s2 = inlined_call_operand.hbm [shape: bf16[32,256], index: 2, kind: input, shape index: {}]
  %s3 = inlined_call_operand.hbm [shape: bf16[256,256], index: 3, kind: input, shape index: {}]
  %s4 = inlined_call_operand.hbm [shape: bf16[256,1152], index: 4, kind: input, shape index: {}]
  %s5 = inlined_call_operand.vmem [shape: bf16[4,256], index: 5, kind: input, shape index: {}]
  %s6 = inlined_call_operand.hbm [shape: bf16[256,256], index: 6, kind: input, shape index: {}]
  %s7 = inlined_call_operand.hbm [shape: bf16[256,256], index: 7, kind: input, shape index: {}]
  %s8 = inlined_call_operand.hbm [shape: bf16[256,256], index: 8, kind: input, shape index: {}]
  %s9 = inlined_call_operand.hbm [shape: bf16[256,128], index: 9, kind: input, shape index: {}]
  %s10 = inlined_call_operand.hbm [shape: f32[6,256], index: 10, kind: input, shape index: {}]
  %s11 = inlined_call_operand.vmem [shape: f32[3,128], index: 11, kind: input, shape index: {}]
  %s12 = inlined_call_operand.hbm [shape: f32[2,2,128], index: 12, kind: output, shape index: {}]
  %s13 = sld [smem:[#allocation0]]
  $region121: #{tpu_custom_call.1} parent=0
    _
  %s15 = ssub.s32 1, %s13
  %s16 = scalar_select 0, %s15, %s13
  $region1: #{tpu_custom_call.1} parent=0
    #allocation3 [shape = 'u8[32768]{0}', space=vmem, size = 0x8000, scoped, tag = 'input window, operand 0']
    #allocation4 [shape = 's32[2]{0}', space=sflag, size = 0x8, scoped, tag = 'scoped memory for tpu_custom_call.1']
    #allocation5 [shape = 's32[2]{0}', space=sflag, size = 0x8, scoped, tag = 'scoped memory for tpu_custom_call.1']
    #allocation6 [shape = 'u8[16384]{0}', space=vmem, size = 0x4000, scoped, tag = 'input window, operand 1']
    #allocation7 [shape = 's32[2]{0}', space=sflag, size = 0x8, scoped, tag = 'scoped memory for tpu_custom_call.1']
    #allocation8 [shape = 'u8[16384]{0}', space=vmem, size = 0x4000, scoped, tag = 'input window, operand 2, single buffered']
    #allocation9 [shape = 'u8[131072]{0}', space=vmem, size = 0x20000, scoped, tag = 'input window, operand 3, single buffered']
    #allocation10 [shape = 's32[1]{0}', space=sflag, size = 0x4, scoped, tag = 'scoped memory for tpu_custom_call.1']
    #allocation11 [shape = 'u8[589824]{0}', space=vmem, size = 0x90000, scoped, tag = 'input window, operand 4, single buffered']
    #allocation12 [shape = 'u8[131072]{0}', space=vmem, size = 0x20000, scoped, tag = 'input window, operand 6, single buffered']
    #allocation13 [shape = 's32[1]{0}', space=sflag, size = 0x4, scoped, tag = 'scoped memory for tpu_custom_call.1']
    #allocation14 [shape = 'u8[131072]{0}', space=vmem, size = 0x20000, scoped, tag = 'input window, operand 7, single buffered']
    #allocation15 [shape = 'u8[131072]{0}', space=vmem, size = 0x20000, scoped, tag = 'input window, operand 8, single buffered']
    #allocation16 [shape = 's32[1]{0}', space=sflag, size = 0x4, scoped, tag = 'scoped memory for tpu_custom_call.1']
    #allocation17 [shape = 'u8[65536]{0}', space=vmem, size = 0x10000, scoped, tag = 'input window, operand 9, single buffered']
    #allocation18 [shape = 'u8[8192]{0}', space=vmem, size = 0x2000, scoped, tag = 'input window, operand 10, single buffered']
    #allocation19 [shape = 's32[1]{0}', space=sflag, size = 0x4, scoped, tag = 'scoped memory for tpu_custom_call.1']
    #allocation20 [shape = 'u8[2048]{0}', space=vmem, size = 0x800, scoped, tag = 'output window, operand 0']
    %17 = vsyncpa [#allocation4], 0
    %s18 = scalar_lea.sflag [#allocation4], 1
    %19 = vsyncpa %s18, 0
    %20 = vsyncpa [#allocation7], 0
    %s21 = scalar_lea.sflag [#allocation7], 1
    %22 = vsyncpa %s21, 0
    %23 = vsyncpa [#allocation10], 0
    %24 = vsyncpa [#allocation13], 0
    %25 = vsyncpa [#allocation16], 0
    %26 = vsyncpa [#allocation19], 0
    %27 = vsyncpa [#allocation5], 0
    %s28 = scalar_lea.sflag [#allocation5], 1
    %29 = vsyncpa %s28, 0
    loop: start=0, step=1, limit=4
    $region2: #{tpu_custom_call.1} parent=1 // loop_pre_header
      _
    $region3: #{tpu_custom_call.1} parent=1 // loop_header
      %s31 = sphi 0, %s35
      %p32 = scmp.ge.s32.totalorder %s31, 4
      %s41 = sphi 0, %s43
      %s44 = sphi 0, %s41
      %s45 = sphi 0, %s44
      %s61 = sphi 0, %s45
      %s67 = sphi 0, %s69
      %s70 = sphi 0, %s67
      %s71 = sphi 0, %s70
      %s87 = sphi 0, %s71
      %s91 = sphi 0, %s91
      %s93 = sphi 0, %s91
      %s94 = sphi 0, %s93
      %s108 = sphi 0, %s94
      %s112 = sphi 0, %s112
      %s114 = sphi 0, %s112
      %s115 = sphi 0, %s114
      %s129 = sphi 0, %s115
      %s133 = sphi 0, %s133
      %s135 = sphi 0, %s133
      %s136 = sphi 0, %s135
      %s150 = sphi 0, %s136
      %s154 = sphi 0, %s154
      %s156 = sphi 0, %s154
      %s157 = sphi 0, %s156
      %s171 = sphi 0, %s157
      %s175 = sphi 0, %s175
      %s177 = sphi 0, %s175
      %s178 = sphi 0, %s177
      %s192 = sphi 0, %s178
      %s196 = sphi 0, %s196
      %s198 = sphi 0, %s196
      %s199 = sphi 0, %s198
      %s213 = sphi 0, %s199
      %s217 = sphi 0, %s217
      %s219 = sphi 0, %s217
      %s220 = sphi 0, %s219
      %s234 = sphi 0, %s220
      %s238 = sphi 0, %s238
      %s240 = sphi 0, %s238
      %s241 = sphi 0, %s240
      %s255 = sphi 0, %s241
      %s259 = sphi 0, %s259
      %s261 = sphi 0, %s259
      %s262 = sphi 0, %s261
      %s276 = sphi 0, %s262
      %s280 = sphi 0, %s280
      %s282 = sphi 0, %s280
      %s283 = sphi 0, %s282
      %s297 = sphi 0, %s283
      %s303 = sphi 0, %s305
      %s306 = sphi 0, %s303
      %s307 = sphi 0, %s306
      %s323 = sphi 0, %s307
    $region4: #{tpu_custom_call.1} parent=1 // loop_header_branch
      %34 = sbr.rel (%p32) target = $region8
    $region5: #{tpu_custom_call.1} parent=1 // loop_body
      %s36 = ssub.s32 %s31, 1
      %s37 = ssub.s32 %s31, 2
      %s38 = sadd.s32 %s31, 1
      %s39 = ssub.s32 %s31, %s38
      %p40 = scmp.eq.s32.totalorder %s39, 0
      %s42 = sadd.s32 %s41, 1
      %s43 = scalar_select %p40, %s41, %s42
      %p46 = pneg %p40
      %p47 = scmp.eq.s32.totalorder %s31, 1
      %p48 = por %p46, %p47
      %p49 = scmp.ne.s32.totalorder %s41, %s44
      %p50 = scmp.eq.s32.totalorder %s31, 0
      %p51 = por %p49, %p50
      %p52 = scmp.ne.s32.totalorder %s41, %s44
      %p53 = scmp.eq.s32.totalorder %s36, 1
      %p54 = por %p52, %p53
      %p55 = scmp.ne.s32.totalorder %s44, %s45
      %p56 = scmp.eq.s32.totalorder %s36, 0
      %p57 = por %p55, %p56
      %p58 = scmp.ne.s32.totalorder %s44, %s45
      %p59 = scmp.eq.s32.totalorder %s37, 1
      %p60 = por %p58, %p59
      %p62 = scmp.ne.s32.totalorder %s45, %s61
      %p63 = scmp.eq.s32.totalorder %s37, 0
      %p64 = por %p62, %p63
      %s65 = ssub.s32 %s31, %s38
      %p66 = scmp.eq.s32.totalorder %s65, 0
      %s68 = sadd.s32 %s67, 1
      %s69 = scalar_select %p66, %s67, %s68
      %p72 = pneg %p66
      %p73 = scmp.eq.s32.totalorder %s31, 1
      %p74 = por %p72, %p73
      %p75 = scmp.ne.s32.totalorder %s67, %s70
      %p76 = scmp.eq.s32.totalorder %s31, 0
      %p77 = por %p75, %p76
      %p78 = scmp.ne.s32.totalorder %s67, %s70
      %p79 = scmp.eq.s32.totalorder %s36, 1
      %p80 = por %p78, %p79
      %p81 = scmp.ne.s32.totalorder %s70, %s71
      %p82 = scmp.eq.s32.totalorder %s36, 0
      %p83 = por %p81, %p82
      %p84 = scmp.ne.s32.totalorder %s70, %s71
      %p85 = scmp.eq.s32.totalorder %s37, 1
      %p86 = por %p84, %p85
      %p88 = scmp.ne.s32.totalorder %s71, %s87
      %p89 = scmp.eq.s32.totalorder %s37, 0
      %p90 = por %p88, %p89
      %s92 = sadd.s32 %s91, 1
      %p95 = scmp.eq.s32.totalorder %s31, 1
      %p96 = scmp.ne.s32.totalorder %s91, %s93
      %p97 = scmp.eq.s32.totalorder %s31, 0
      %p98 = por %p96, %p97
      %p99 = scmp.ne.s32.totalorder %s91, %s93
      %p100 = scmp.eq.s32.totalorder %s36, 1
      %p101 = por %p99, %p100
      %p102 = scmp.ne.s32.totalorder %s93, %s94
      %p103 = scmp.eq.s32.totalorder %s36, 0
      %p104 = por %p102, %p103
      %p105 = scmp.ne.s32.totalorder %s93, %s94
      %p106 = scmp.eq.s32.totalorder %s37, 1
      %p107 = por %p105, %p106
      %p109 = scmp.ne.s32.totalorder %s94, %s108
      %p110 = scmp.eq.s32.totalorder %s37, 0
      %p111 = por %p109, %p110
      %s113 = sadd.s32 %s112, 1
      %p116 = scmp.eq.s32.totalorder %s31, 1
      %p117 = scmp.ne.s32.totalorder %s112, %s114
      %p118 = scmp.eq.s32.totalorder %s31, 0
      %p119 = por %p117, %p118
      %p120 = scmp.ne.s32.totalorder %s112, %s114
      %p121 = scmp.eq.s32.totalorder %s36, 1
      %p122 = por %p120, %p121
      %p123 = scmp.ne.s32.totalorder %s114, %s115
      %p124 = scmp.eq.s32.totalorder %s36, 0
      %p125 = por %p123, %p124
      %p126 = scmp.ne.s32.totalorder %s114, %s115
      %p127 = scmp.eq.s32.totalorder %s37, 1
      %p128 = por %p126, %p127
      %p130 = scmp.ne.s32.totalorder %s115, %s129
      %p131 = scmp.eq.s32.totalorder %s37, 0
      %p132 = por %p130, %p131
      %s134 = sadd.s32 %s133, 1
      %p137 = scmp.eq.s32.totalorder %s31, 1
      %p138 = scmp.ne.s32.totalorder %s133, %s135
      %p139 = scmp.eq.s32.totalorder %s31, 0
      %p140 = por %p138, %p139
      %p141 = scmp.ne.s32.totalorder %s133, %s135
      %p142 = scmp.eq.s32.totalorder %s36, 1
      %p143 = por %p141, %p142
      %p144 = scmp.ne.s32.totalorder %s135, %s136
      %p145 = scmp.eq.s32.totalorder %s36, 0
      %p146 = por %p144, %p145
      %p147 = scmp.ne.s32.totalorder %s135, %s136
      %p148 = scmp.eq.s32.totalorder %s37, 1
      %p149 = por %p147, %p148
      %p151 = scmp.ne.s32.totalorder %s136, %s150
      %p152 = scmp.eq.s32.totalorder %s37, 0
      %p153 = por %p151, %p152
      %s155 = sadd.s32 %s154, 1
      %p158 = scmp.eq.s32.totalorder %s31, 1
      %p159 = scmp.ne.s32.totalorder %s154, %s156
      %p160 = scmp.eq.s32.totalorder %s31, 0
      %p161 = por %p159, %p160
      %p162 = scmp.ne.s32.totalorder %s154, %s156
      %p163 = scmp.eq.s32.totalorder %s36, 1
      %p164 = por %p162, %p163
      %p165 = scmp.ne.s32.totalorder %s156, %s157
      %p166 = scmp.eq.s32.totalorder %s36, 0
      %p167 = por %p165, %p166
      %p168 = scmp.ne.s32.totalorder %s156, %s157
      %p169 = scmp.eq.s32.totalorder %s37, 1
      %p170 = por %p168, %p169
      %p172 = scmp.ne.s32.totalorder %s157, %s171
      %p173 = scmp.eq.s32.totalorder %s37, 0
      %p174 = por %p172, %p173
      %s176 = sadd.s32 %s175, 1
      %p179 = scmp.eq.s32.totalorder %s31, 1
      %p180 = scmp.ne.s32.totalorder %s175, %s177
      %p181 = scmp.eq.s32.totalorder %s31, 0
      %p182 = por %p180, %p181
      %p183 = scmp.ne.s32.totalorder %s175, %s177
      %p184 = scmp.eq.s32.totalorder %s36, 1
      %p185 = por %p183, %p184
      %p186 = scmp.ne.s32.totalorder %s177, %s178
      %p187 = scmp.eq.s32.totalorder %s36, 0
      %p188 = por %p186, %p187
      %p189 = scmp.ne.s32.totalorder %s177, %s178
      %p190 = scmp.eq.s32.totalorder %s37, 1
      %p191 = por %p189, %p190
      %p193 = scmp.ne.s32.totalorder %s178, %s192
      %p194 = scmp.eq.s32.totalorder %s37, 0
      %p195 = por %p193, %p194
      %s197 = sadd.s32 %s196, 1
      %p200 = scmp.eq.s32.totalorder %s31, 1
      %p201 = scmp.ne.s32.totalorder %s196, %s198
      %p202 = scmp.eq.s32.totalorder %s31, 0
      %p203 = por %p201, %p202
      %p204 = scmp.ne.s32.totalorder %s196, %s198
      %p205 = scmp.eq.s32.totalorder %s36, 1
      %p206 = por %p204, %p205
      %p207 = scmp.ne.s32.totalorder %s198, %s199
      %p208 = scmp.eq.s32.totalorder %s36, 0
      %p209 = por %p207, %p208
      %p210 = scmp.ne.s32.totalorder %s198, %s199
      %p211 = scmp.eq.s32.totalorder %s37, 1
      %p212 = por %p210, %p211
      %p214 = scmp.ne.s32.totalorder %s199, %s213
      %p215 = scmp.eq.s32.totalorder %s37, 0
      %p216 = por %p214, %p215
      %s218 = sadd.s32 %s217, 1
      %p221 = scmp.eq.s32.totalorder %s31, 1
      %p222 = scmp.ne.s32.totalorder %s217, %s219
      %p223 = scmp.eq.s32.totalorder %s31, 0
      %p224 = por %p222, %p223
      %p225 = scmp.ne.s32.totalorder %s217, %s219
      %p226 = scmp.eq.s32.totalorder %s36, 1
      %p227 = por %p225, %p226
      %p228 = scmp.ne.s32.totalorder %s219, %s220
      %p229 = scmp.eq.s32.totalorder %s36, 0
      %p230 = por %p228, %p229
      %p231 = scmp.ne.s32.totalorder %s219, %s220
      %p232 = scmp.eq.s32.totalorder %s37, 1
      %p233 = por %p231, %p232
      %p235 = scmp.ne.s32.totalorder %s220, %s234
      %p236 = scmp.eq.s32.totalorder %s37, 0
      %p237 = por %p235, %p236
      %s239 = sadd.s32 %s238, 1
      %p242 = scmp.eq.s32.totalorder %s31, 1
      %p243 = scmp.ne.s32.totalorder %s238, %s240
      %p244 = scmp.eq.s32.totalorder %s31, 0
      %p245 = por %p243, %p244
      %p246 = scmp.ne.s32.totalorder %s238, %s240
      %p247 = scmp.eq.s32.totalorder %s36, 1
      %p248 = por %p246, %p247
      %p249 = scmp.ne.s32.totalorder %s240, %s241
      %p250 = scmp.eq.s32.totalorder %s36, 0
      %p251 = por %p249, %p250
      %p252 = scmp.ne.s32.totalorder %s240, %s241
      %p253 = scmp.eq.s32.totalorder %s37, 1
      %p254 = por %p252, %p253
      %p256 = scmp.ne.s32.totalorder %s241, %s255
      %p257 = scmp.eq.s32.totalorder %s37, 0
      %p258 = por %p256, %p257
      %s260 = sadd.s32 %s259, 1
      %p263 = scmp.eq.s32.totalorder %s31, 1
      %p264 = scmp.ne.s32.totalorder %s259, %s261
      %p265 = scmp.eq.s32.totalorder %s31, 0
      %p266 = por %p264, %p265
      %p267 = scmp.ne.s32.totalorder %s259, %s261
      %p268 = scmp.eq.s32.totalorder %s36, 1
      %p269 = por %p267, %p268
      %p270 = scmp.ne.s32.totalorder %s261, %s262
      %p271 = scmp.eq.s32.totalorder %s36, 0
      %p272 = por %p270, %p271
      %p273 = scmp.ne.s32.totalorder %s261, %s262
      %p274 = scmp.eq.s32.totalorder %s37, 1
      %p275 = por %p273, %p274
      %p277 = scmp.ne.s32.totalorder %s262, %s276
      %p278 = scmp.eq.s32.totalorder %s37, 0
      %p279 = por %p277, %p278
      %s281 = sadd.s32 %s280, 1
      %p284 = scmp.eq.s32.totalorder %s31, 1
      %p285 = scmp.ne.s32.totalorder %s280, %s282
      %p286 = scmp.eq.s32.totalorder %s31, 0
      %p287 = por %p285, %p286
      %p288 = scmp.ne.s32.totalorder %s280, %s282
      %p289 = scmp.eq.s32.totalorder %s36, 1
      %p290 = por %p288, %p289
      %p291 = scmp.ne.s32.totalorder %s282, %s283
      %p292 = scmp.eq.s32.totalorder %s36, 0
      %p293 = por %p291, %p292
      %p294 = scmp.ne.s32.totalorder %s282, %s283
      %p295 = scmp.eq.s32.totalorder %s37, 1
      %p296 = por %p294, %p295
      %p298 = scmp.ne.s32.totalorder %s283, %s297
      %p299 = scmp.eq.s32.totalorder %s37, 0
      %p300 = por %p298, %p299
      %s301 = ssub.s32 %s31, %s38
      %p302 = scmp.eq.s32.totalorder %s301, 0
      %s304 = sadd.s32 %s303, 1
      %s305 = scalar_select %p302, %s303, %s304
      %p308 = pneg %p302
      %p309 = scmp.eq.s32.totalorder %s31, 1
      %p310 = por %p308, %p309
      %p311 = scmp.ne.s32.totalorder %s303, %s306
      %p312 = scmp.eq.s32.totalorder %s31, 0
      %p313 = por %p311, %p312
      %p314 = scmp.ne.s32.totalorder %s303, %s306
      %p315 = scmp.eq.s32.totalorder %s36, 1
      %p316 = por %p314, %p315
      %p317 = scmp.ne.s32.totalorder %s306, %s307
      %p318 = scmp.eq.s32.totalorder %s36, 0
      %p319 = por %p317, %p318
      %p320 = scmp.ne.s32.totalorder %s306, %s307
      %p321 = scmp.eq.s32.totalorder %s37, 1
      %p322 = por %p320, %p321
      %p324 = scmp.ne.s32.totalorder %s307, %s323
      %p325 = scmp.eq.s32.totalorder %s37, 0
      %p326 = por %p324, %p325
      %p327 = scmp.le.s32.totalorder 1, %s31
      %p328 = scmp.lt.s32.totalorder %s31, 3
      %p329 = pnand %p327, %p328
      %p330 = pneg %p329
      // Predicated region
      $region9: #{tpu_custom_call.1} parent=5 // pred_check
        _
      $region10: #{tpu_custom_call.1} parent=5 // pred_check_branch
        %332 = sbr.rel (%p329) target = $region12
      $region11: #{tpu_custom_call.1} parent=5 // pred_region
        %s333 = ssub.s32 %s31, 1
        // Predicated region
        $region13: #{tpu_custom_call.1} parent=11 // pred_check
          %p334 = pneg %p104
        $region14: #{tpu_custom_call.1} parent=11 // pred_check_branch
          %336 = sbr.rel (%p334) target = $region16
        $region15: #{tpu_custom_call.1} parent=11 // pred_region
          %338 = vsyncadd [#allocation7], 0
          %s339 = sshll.u32 %s2, 4
          %s340 = int_to_ptr.hbm [resolvable:$true] %s339
          %s341 = sshll.u32 [#allocation8], 4
          %s342 = int_to_ptr.vmem [resolvable:$true] %s341
          %347 = dma.hbm_to_vmem [thread:$0]  %s340, 512, %s342, [#allocation7], 128, 128, 8
        $region16: #{tpu_custom_call.1} parent=11 // pred_fallthru
          _
        // Predicated region
        $region17: #{tpu_custom_call.1} parent=11 // pred_check
          %p348 = pneg %p125
        $region18: #{tpu_custom_call.1} parent=11 // pred_check_branch
          %350 = sbr.rel (%p348) target = $region20
        $region19: #{tpu_custom_call.1} parent=11 // pred_region
          %352 = vsyncadd [#allocation10], 0
          %s353 = sshll.u32 %s3, 4
          %s354 = int_to_ptr.hbm [resolvable:$true] %s353
          %s355 = sshll.u32 [#allocation9], 4
          %s356 = int_to_ptr.vmem [resolvable:$true] %s355
          %361 = dma.hbm_to_vmem [thread:$0]  %s354, 4096, %s356, [#allocation10], 128, 128, 8
        $region20: #{tpu_custom_call.1} parent=11 // pred_fallthru
          _
        // Predicated region
        $region21: #{tpu_custom_call.1} parent=11 // pred_check
          %p362 = pneg %p146
        $region22: #{tpu_custom_call.1} parent=11 // pred_check_branch
          %364 = sbr.rel (%p362) target = $region24
        $region23: #{tpu_custom_call.1} parent=11 // pred_region
          %366 = vsyncadd [#allocation10], 0
          %s367 = sshll.u32 %s4, 4
          %s368 = int_to_ptr.hbm [resolvable:$true] %s367
          %s369 = sshll.u32 [#allocation11], 4
          %s370 = int_to_ptr.vmem [resolvable:$true] %s369
          %375 = dma.hbm_to_vmem [thread:$0]  %s368, 18432, %s370, [#allocation10], 576, 576, 36
        $region24: #{tpu_custom_call.1} parent=11 // pred_fallthru
          _
        // Predicated region
        $region25: #{tpu_custom_call.1} parent=11 // pred_check
          %p376 = pneg %p167
        $region26: #{tpu_custom_call.1} parent=11 // pred_check_branch
          %378 = sbr.rel (%p376) target = $region28
        $region27: #{tpu_custom_call.1} parent=11 // pred_region
          _
        $region28: #{tpu_custom_call.1} parent=11 // pred_fallthru
          _
        // Predicated region
        $region29: #{tpu_custom_call.1} parent=11 // pred_check
          %p379 = pneg %p188
        $region30: #{tpu_custom_call.1} parent=11 // pred_check_branch
          %381 = sbr.rel (%p379) target = $region32
        $region31: #{tpu_custom_call.1} parent=11 // pred_region
          %383 = vsyncadd [#allocation13], 0
          %s384 = sshll.u32 %s6, 4
          %s385 = int_to_ptr.hbm [resolvable:$true] %s384
          %s386 = sshll.u32 [#allocation12], 4
          %s387 = int_to_ptr.vmem [resolvable:$true] %s386
          %392 = dma.hbm_to_vmem [thread:$0]  %s385, 4096, %s387, [#allocation13], 128, 128, 8
        $region32: #{tpu_custom_call.1} parent=11 // pred_fallthru
          _
        // Predicated region
        $region33: #{tpu_custom_call.1} parent=11 // pred_check
          %p393 = pneg %p209
        $region34: #{tpu_custom_call.1} parent=11 // pred_check_branch
          %395 = sbr.rel (%p393) target = $region36
        $region35: #{tpu_custom_call.1} parent=11 // pred_region
          %397 = vsyncadd [#allocation13], 0
          %s398 = sshll.u32 %s7, 4
          %s399 = int_to_ptr.hbm [resolvable:$true] %s398
          %s400 = sshll.u32 [#allocation14], 4
          %s401 = int_to_ptr.vmem [resolvable:$true] %s400
          %406 = dma.hbm_to_vmem [thread:$0]  %s399, 4096, %s401, [#allocation13], 128, 128, 8
        $region36: #{tpu_custom_call.1} parent=11 // pred_fallthru
          _
        // Predicated region
        $region37: #{tpu_custom_call.1} parent=11 // pred_check
          %p407 = pneg %p230
        $region38: #{tpu_custom_call.1} parent=11 // pred_check_branch
          %409 = sbr.rel (%p407) target = $region40
        $region39: #{tpu_custom_call.1} parent=11 // pred_region
          %411 = vsyncadd [#allocation16], 0
          %s412 = sshll.u32 %s8, 4
          %s413 = int_to_ptr.hbm [resolvable:$true] %s412
          %s414 = sshll.u32 [#allocation15], 4
          %s415 = int_to_ptr.vmem [resolvable:$true] %s414
          %420 = dma.hbm_to_vmem [thread:$0]  %s413, 4096, %s415, [#allocation16], 128, 128, 8
        $region40: #{tpu_custom_call.1} parent=11 // pred_fallthru
          _
        // Predicated region
        $region41: #{tpu_custom_call.1} parent=11 // pred_check
          %p421 = pneg %p251
        $region42: #{tpu_custom_call.1} parent=11 // pred_check_branch
          %423 = sbr.rel (%p421) target = $region44
        $region43: #{tpu_custom_call.1} parent=11 // pred_region
          %425 = vsyncadd [#allocation16], 0
          %s426 = sshll.u32 %s9, 4
          %s427 = int_to_ptr.hbm [resolvable:$true] %s426
          %s428 = sshll.u32 [#allocation17], 4
          %s429 = int_to_ptr.vmem [resolvable:$true] %s428
          %434 = dma.hbm_to_vmem [thread:$0]  %s427, 2048, %s429, [#allocation16], 64, 64, 4
        $region44: #{tpu_custom_call.1} parent=11 // pred_fallthru
          _
        // Predicated region
        $region45: #{tpu_custom_call.1} parent=11 // pred_check
          %p435 = pneg %p272
        $region46: #{tpu_custom_call.1} parent=11 // pred_check_branch
          %437 = sbr.rel (%p435) target = $region48
        $region47: #{tpu_custom_call.1} parent=11 // pred_region
          %439 = vsyncadd [#allocation19], 0
          %s441 = sshll.u32 %s10, 4
          %s442 = int_to_ptr.hbm [resolvable:$true] %s441
          %s443 = sshll.u32 [#allocation18], 4
          %s444 = int_to_ptr.vmem [resolvable:$true] %s443
          %446 = dma.hbm_to_vmem [thread:$0]  %s442, 256, %s444, [#allocation19]
        $region48: #{tpu_custom_call.1} parent=11 // pred_fallthru
          _
        // Predicated region
        $region49: #{tpu_custom_call.1} parent=11 // pred_check
          %p447 = pneg %p293
        $region50: #{tpu_custom_call.1} parent=11 // pred_check_branch
          %449 = sbr.rel (%p447) target = $region52
        $region51: #{tpu_custom_call.1} parent=11 // pred_region
          _
        $region52: #{tpu_custom_call.1} parent=11 // pred_fallthru
          _
      $region12: #{tpu_custom_call.1} parent=5 // pred_fallthru
        _
      %p450 = scmp.lt.s32.totalorder %s31, 2
      // Predicated region
      $region53: #{tpu_custom_call.1} parent=5 // pred_check
        %p451 = pneg %p450
      $region54: #{tpu_custom_call.1} parent=5 // pred_check_branch
        %453 = sbr.rel (%p451) target = $region56
      $region55: #{tpu_custom_call.1} parent=5 // pred_region
        // Predicated region
        $region57: #{tpu_custom_call.1} parent=55 // pred_check
          %p454 = pneg %p51
        $region58: #{tpu_custom_call.1} parent=55 // pred_check_branch
          %456 = sbr.rel (%p454) target = $region60
        $region59: #{tpu_custom_call.1} parent=55 // pred_region
          %s457 = sand.u32 %s41, 1
          %s458 = scalar_lea.sflag [#allocation4], %s457
          %s459 = sand.u32 %s41, 1
          %s460 = smul.addr %s459, 32
          %s461 = scalar_lea.vmem [#allocation3], %s460
          %463 = vsyncadd %s458, 0
          %s464 = smul.addr %s31, 4
          %s465 = smul.addr %s464, 8
          %s466 = scalar_lea.hbm %s0, %s465
          %s467 = sshll.u32 %s466, 4
          %s468 = int_to_ptr.hbm [resolvable:$true] %s467
          %s469 = sshll.u32 %s461, 4
          %s470 = int_to_ptr.vmem [resolvable:$true] %s469
          %475 = dma.hbm_to_vmem [thread:$0]  %s468, 512, %s470, %s458, 128, 128, 8
        $region60: #{tpu_custom_call.1} parent=55 // pred_fallthru
          _
        // Predicated region
        $region61: #{tpu_custom_call.1} parent=55 // pred_check
          %p476 = pneg %p77
        $region62: #{tpu_custom_call.1} parent=55 // pred_check_branch
          %478 = sbr.rel (%p476) target = $region64
        $region63: #{tpu_custom_call.1} parent=55 // pred_region
          %s479 = sand.u32 %s31, 1
          %s480 = scalar_lea.sflag [#allocation7], %s479
          %s481 = sand.u32 %s67, 1
          %s482 = smul.addr %s481, 16
          %s483 = scalar_lea.vmem [#allocation6], %s482
          %485 = vsyncadd %s480, 0
          %s486 = smul.addr %s31, 4
          %s487 = smul.addr %s486, 4
          %s488 = scalar_lea.hbm %s1, %s487
          %s489 = sshll.u32 %s488, 4
          %s490 = int_to_ptr.hbm [resolvable:$true] %s489
          %s491 = sshll.u32 %s483, 4
          %s492 = int_to_ptr.vmem [resolvable:$true] %s491
          %497 = dma.hbm_to_vmem [thread:$0]  %s490, 256, %s492, %s480, 64, 64, 4
        $region64: #{tpu_custom_call.1} parent=55 // pred_fallthru
          _
      $region56: #{tpu_custom_call.1} parent=5 // pred_fallthru
        _
      %p498 = scmp.le.s32.totalorder 1, %s31
      %p499 = scmp.lt.s32.totalorder %s31, 3
      %p500 = pnand %p498, %p499
      %p501 = pneg %p500
      // Predicated region
      $region65: #{tpu_custom_call.1} parent=5 // pred_check
        _
      $region66: #{tpu_custom_call.1} parent=5 // pred_check_branch
        %503 = sbr.rel (%p500) target = $region68
      $region67: #{tpu_custom_call.1} parent=5 // pred_region
        %s504 = ssub.s32 %s31, 1
        %s505 = sand.u32 %s44, 1
        %s506 = scalar_lea.sflag [#allocation4], %s505
        %s507 = sand.u32 %s44, 1
        %s508 = smul.addr %s507, 32
        %s509 = scalar_lea.vmem [#allocation3], %s508
        // Predicated region
        $region69: #{tpu_custom_call.1} parent=67 // pred_check
          %p510 = pneg %p57
        $region70: #{tpu_custom_call.1} parent=67 // pred_check_branch
          %512 = sbr.rel (%p510) target = $region72
        $region71: #{tpu_custom_call.1} parent=67 // pred_region
          %514 = dma.done %s506, 512
        $region72: #{tpu_custom_call.1} parent=67 // pred_fallthru
          _
        %s515 = sand.u32 %s36, 1
        %s516 = scalar_lea.sflag [#allocation7], %s515
        %s517 = sand.u32 %s70, 1
        %s518 = smul.addr %s517, 16
        %s519 = scalar_lea.vmem [#allocation6], %s518
        // Predicated region
        $region73: #{tpu_custom_call.1} parent=67 // pred_check
          %p520 = pneg %p83
        $region74: #{tpu_custom_call.1} parent=67 // pred_check_branch
          %522 = sbr.rel (%p520) target = $region76
        $region75: #{tpu_custom_call.1} parent=67 // pred_region
          %524 = dma.done %s516, 256
        $region76: #{tpu_custom_call.1} parent=67 // pred_fallthru
          _
        // Predicated region
        $region77: #{tpu_custom_call.1} parent=67 // pred_check
          %p525 = pneg %p104
        $region78: #{tpu_custom_call.1} parent=67 // pred_check_branch
          %527 = sbr.rel (%p525) target = $region80
        $region79: #{tpu_custom_call.1} parent=67 // pred_region
          %529 = dma.done [#allocation7], 512
        $region80: #{tpu_custom_call.1} parent=67 // pred_fallthru
          _
        // Predicated region
        $region81: #{tpu_custom_call.1} parent=67 // pred_check
          %p530 = pneg %p125
        $region82: #{tpu_custom_call.1} parent=67 // pred_check_branch
          %532 = sbr.rel (%p530) target = $region84
        $region83: #{tpu_custom_call.1} parent=67 // pred_region
          %534 = dma.done [#allocation10], 4096
        $region84: #{tpu_custom_call.1} parent=67 // pred_fallthru
          _
        // Predicated region
        $region85: #{tpu_custom_call.1} parent=67 // pred_check
          %p535 = pneg %p146
        $region86: #{tpu_custom_call.1} parent=67 // pred_check_branch
          %537 = sbr.rel (%p535) target = $region88
        $region87: #{tpu_custom_call.1} parent=67 // pred_region
          %539 = dma.done [#allocation10], 18432
        $region88: #{tpu_custom_call.1} parent=67 // pred_fallthru
          _
        // Predicated region
        $region89: #{tpu_custom_call.1} parent=67 // pred_check
          %p540 = pneg %p188
        $region90: #{tpu_custom_call.1} parent=67 // pred_check_branch
          %542 = sbr.rel (%p540) target = $region92
        $region91: #{tpu_custom_call.1} parent=67 // pred_region
          %544 = dma.done [#allocation13], 4096
        $region92: #{tpu_custom_call.1} parent=67 // pred_fallthru
          _
        // Predicated region
        $region93: #{tpu_custom_call.1} parent=67 // pred_check
          %p545 = pneg %p209
        $region94: #{tpu_custom_call.1} parent=67 // pred_check_branch
          %547 = sbr.rel (%p545) target = $region96
        $region95: #{tpu_custom_call.1} parent=67 // pred_region
          %549 = dma.done [#allocation13], 4096
        $region96: #{tpu_custom_call.1} parent=67 // pred_fallthru
          _
        // Predicated region
        $region97: #{tpu_custom_call.1} parent=67 // pred_check
          %p550 = pneg %p230
        $region98: #{tpu_custom_call.1} parent=67 // pred_check_branch
          %552 = sbr.rel (%p550) target = $region100
        $region99: #{tpu_custom_call.1} parent=67 // pred_region
          %554 = dma.done [#allocation16], 4096
        $region100: #{tpu_custom_call.1} parent=67 // pred_fallthru
          _
        // Predicated region
        $region101: #{tpu_custom_call.1} parent=67 // pred_check
          %p555 = pneg %p251
        $region102: #{tpu_custom_call.1} parent=67 // pred_check_branch
          %557 = sbr.rel (%p555) target = $region104
        $region103: #{tpu_custom_call.1} parent=67 // pred_region
          %559 = dma.done [#allocation16], 2048
        $region104: #{tpu_custom_call.1} parent=67 // pred_fallthru
          _
        // Predicated region
        $region105: #{tpu_custom_call.1} parent=67 // pred_check
          %p560 = pneg %p272
        $region106: #{tpu_custom_call.1} parent=67 // pred_check_branch
          %562 = sbr.rel (%p560) target = $region108
        $region107: #{tpu_custom_call.1} parent=67 // pred_region
          %564 = dma.done [#allocation19], 256
        $region108: #{tpu_custom_call.1} parent=67 // pred_fallthru
          _
        %s565 = sand.u32 %s44, 1
        %s566 = scalar_lea.sflag [#allocation4], %s565
        %s567 = sand.u32 %s44, 1
        %s568 = smul.addr %s567, 32
        %s569 = scalar_lea.vmem [#allocation3], %s568
        %p570 = pneg %p57
        %p571 = pneg %p54
        %s572 = sand.u32 %s36, 1
        %s573 = scalar_lea.sflag [#allocation7], %s572
        %s574 = sand.u32 %s70, 1
        %s575 = smul.addr %s574, 16
        %s576 = scalar_lea.vmem [#allocation6], %s575
        %p577 = pneg %p83
        %p578 = pneg %p80
        %p579 = pneg %p104
        %p580 = pneg %p101
        %p581 = pneg %p125
        %p582 = pneg %p122
        %p583 = pneg %p146
        %p584 = pneg %p143
        %p585 = pneg %p167
        %p586 = pneg %p164
        %p587 = pneg %p188
        %p588 = pneg %p185
        %p589 = pneg %p209
        %p590 = pneg %p206
        %p591 = pneg %p230
        %p592 = pneg %p227
        %p593 = pneg %p251
        %p594 = pneg %p248
        %p595 = pneg %p272
        %p596 = pneg %p269
        %p597 = pneg %p293
        %p598 = pneg %p290
        %p599 = pneg %p319
        %p600 = pneg %p316
        %s601 = sand.u32 %s306, 1
        %s602 = scalar_lea.sflag [#allocation5], %s601
        %s603 = sand.u32 %s306, 1
        %s604 = smul.addr %s603, 2
        %s605 = scalar_lea.vmem [#allocation20], %s604
        %v607 = vld [vmem:[%s509] sm:$0xff]
        %v608 = vld [vmem:[%s509 + $0x8] sm:$0xff]
        %v609 = vld [vmem:[%s509 + $0x10] sm:$0xff]
        %v610 = vld [vmem:[%s509 + $0x18] sm:$0xff]
        %v611 = vld [vmem:[%s519] sm:$0xf]
        %v612 = vld [vmem:[%s519 + $0x4] sm:$0xf]
        %v613 = vld [vmem:[%s519 + $0x8] sm:$0xf]
        %v614 = vld [vmem:[%s519 + $0xc] sm:$0xf]
        %v615 = vld [vmem:[#allocation18] sm:$0x3f]
        %v616 = vld [vmem:[#allocation18 + $0x8] sm:$0x3f]
        %v617 = vld [vmem:[%s11] sm:$0x7]
        %v618 = vpack.c.bf16 %v608, %v607
        %v619 = vpack.c.bf16 %v610, %v609
        %v620 = vld [vmem:[#allocation8] sm:$0xff]
        %v621 = vld [vmem:[#allocation8 + $0x8] sm:$0xff]
        %v622 = vld [vmem:[#allocation8 + $0x10] sm:$0xff]
        %v623 = vld [vmem:[#allocation8 + $0x18] sm:$0xff]
        %v624 = vperm.slane %v615, 0
        %v625 = vperm.slane %v616, 0
        %v630 = vunpack.c.l.b16 %v620
        %v631 = vunpack.c.h.b16 %v620
        %v632 = vunpack.c.l.b16 %v621
        %v633 = vunpack.c.h.b16 %v621
        %v634 = vunpack.c.l.b16 %v622
        %v635 = vunpack.c.h.b16 %v622
        %v636 = vunpack.c.l.b16 %v623
        %v637 = vunpack.c.h.b16 %v623
        %v638 = vpack.c.b16 %v632, %v630
        %v639 = vpack.c.b16 %v633, %v631
        %v640 = vpack.c.b16 %v636, %v634
        %v641 = vpack.c.b16 %v637, %v635
        %vm646 = vcmask 261120
        %v648 = vsel %vm646, %v618, 0
        %v651 = vsel %vm646, %v619, 0
        %653 = vmatpush.bf16.msra.mxu0 0
        %654 = vmatpush.bf16.msra.mxu0 0
        %655 = vmatpush.bf16.msra.mxu0 0
        %656 = vmatpush.bf16.msra.mxu0 0
        %657 = vmatpush.bf16.msra.mxu0 0
        %658 = vmatpush.bf16.msra.mxu0 0
        %659 = vmatpush.bf16.msra.mxu0 %v640
        %660 = vmatpush.bf16.msra.mxu0 %v638
        %661 = vmatmul.bf16.gmra.mxu0 %v648
        %v662 = vpop.f32.mrf.mxu0
        %v663 = vadd.f32 %v624, %v662
        %v664 = vpop.f32.mrf.mxu0
        %v665 = vadd.f32 %v624, %v664
        %666 = vmatmul.bf16.gmra.mxu0 %v651
        %v667 = vpop.f32.mrf.mxu0
        %v668 = vadd.f32 %v624, %v667
        %v669 = vpop.f32.mrf.mxu0
        %v670 = vadd.f32 %v624, %v669
        %671 = vdwg.mxu0
        %672 = vmatpush.bf16.msra.mxu0 0
        %673 = vmatpush.bf16.msra.mxu0 0
        %674 = vmatpush.bf16.msra.mxu0 0
        %675 = vmatpush.bf16.msra.mxu0 0
        %676 = vmatpush.bf16.msra.mxu0 0
        %677 = vmatpush.bf16.msra.mxu0 0
        %678 = vmatpush.bf16.msra.mxu0 %v641
        %679 = vmatpush.bf16.msra.mxu0 %v639
        %680 = vmatmul.bf16.gmra.mxu0 %v648
        %v681 = vpop.f32.mrf.mxu0
        %v682 = vadd.f32 %v625, %v681
        %v683 = vpop.f32.mrf.mxu0
        %v684 = vadd.f32 %v625, %v683
        %685 = vmatmul.bf16.gmra.mxu0 %v651
        %v686 = vpop.f32.mrf.mxu0
        %v687 = vadd.f32 %v625, %v686
        %v688 = vpop.f32.mrf.mxu0
        %v689 = vadd.f32 %v625, %v688
        %690 = vdwg.mxu0
        %v691 = vmax.f32 %v663, 0.0
        %v692 = vmax.f32 %v682, 0.0
        %v693 = vmax.f32 %v665, 0.0
        %v694 = vmax.f32 %v684, 0.0
        %v695 = vmax.f32 %v668, 0.0
        %v696 = vmax.f32 %v687, 0.0
        %v697 = vmax.f32 %v670, 0.0
        %v698 = vmax.f32 %v689, 0.0
        %v699 = vpack.c.bf16 %v693, %v691
        %v700 = vpack.c.bf16 %v694, %v692
        %v701 = vpack.c.bf16 %v697, %v695
        %v702 = vpack.c.bf16 %v698, %v696
        %v703 = vld [vmem:[#allocation9] sm:$0xff]
        %v704 = vld [vmem:[#allocation9 + $0x8] sm:$0xff]
        %v705 = vld [vmem:[#allocation9 + $0x10] sm:$0xff]
        %v706 = vld [vmem:[#allocation9 + $0x18] sm:$0xff]
        %v707 = vld [vmem:[#allocation9 + $0x20] sm:$0xff]
        %v708 = vld [vmem:[#allocation9 + $0x28] sm:$0xff]
        %v709 = vld [vmem:[#allocation9 + $0x30] sm:$0xff]
        %v710 = vld [vmem:[#allocation9 + $0x38] sm:$0xff]
        %v711 = vld [vmem:[#allocation9 + $0x40] sm:$0xff]
        %v712 = vld [vmem:[#allocation9 + $0x48] sm:$0xff]
        %v713 = vld [vmem:[#allocation9 + $0x50] sm:$0xff]
        %v714 = vld [vmem:[#allocation9 + $0x58] sm:$0xff]
        %v715 = vld [vmem:[#allocation9 + $0x60] sm:$0xff]
        %v716 = vld [vmem:[#allocation9 + $0x68] sm:$0xff]
        %v717 = vld [vmem:[#allocation9 + $0x70] sm:$0xff]
        %v718 = vld [vmem:[#allocation9 + $0x78] sm:$0xff]
        %v719 = vld [vmem:[#allocation9 + $0x80] sm:$0xff]
        %v720 = vld [vmem:[#allocation9 + $0x88] sm:$0xff]
        %v721 = vld [vmem:[#allocation9 + $0x90] sm:$0xff]
        %v722 = vld [vmem:[#allocation9 + $0x98] sm:$0xff]
        %v723 = vld [vmem:[#allocation9 + $0xa0] sm:$0xff]
        %v724 = vld [vmem:[#allocation9 + $0xa8] sm:$0xff]
        %v725 = vld [vmem:[#allocation9 + $0xb0] sm:$0xff]
        %v726 = vld [vmem:[#allocation9 + $0xb8] sm:$0xff]
        %v727 = vld [vmem:[#allocation9 + $0xc0] sm:$0xff]
        %v728 = vld [vmem:[#allocation9 + $0xc8] sm:$0xff]
        %v729 = vld [vmem:[#allocation9 + $0xd0] sm:$0xff]
        %v730 = vld [vmem:[#allocation9 + $0xd8] sm:$0xff]
        %v731 = vld [vmem:[#allocation9 + $0xe0] sm:$0xff]
        %v732 = vld [vmem:[#allocation9 + $0xe8] sm:$0xff]
        %v733 = vld [vmem:[#allocation9 + $0xf0] sm:$0xff]
        %v734 = vld [vmem:[#allocation9 + $0xf8] sm:$0xff]
        %v735 = vperm.slane %v615, 1
        %v736 = vperm.slane %v616, 1
        %v769 = vunpack.c.l.b16 %v703
        %v770 = vunpack.c.h.b16 %v703
        %v771 = vunpack.c.l.b16 %v704
        %v772 = vunpack.c.h.b16 %v704
        %v773 = vunpack.c.l.b16 %v705
        %v774 = vunpack.c.h.b16 %v705
        %v775 = vunpack.c.l.b16 %v706
        %v776 = vunpack.c.h.b16 %v706
        %v777 = vunpack.c.l.b16 %v707
        %v778 = vunpack.c.h.b16 %v707
        %v779 = vunpack.c.l.b16 %v708
        %v780 = vunpack.c.h.b16 %v708
        %v781 = vunpack.c.l.b16 %v709
        %v782 = vunpack.c.h.b16 %v709
        %v783 = vunpack.c.l.b16 %v710
        %v784 = vunpack.c.h.b16 %v710
        %v785 = vunpack.c.l.b16 %v711
        %v786 = vunpack.c.h.b16 %v711
        %v787 = vunpack.c.l.b16 %v712
        %v788 = vunpack.c.h.b16 %v712
        %v789 = vunpack.c.l.b16 %v713
        %v790 = vunpack.c.h.b16 %v713
        %v791 = vunpack.c.l.b16 %v714
        %v792 = vunpack.c.h.b16 %v714
        %v793 = vunpack.c.l.b16 %v715
        %v794 = vunpack.c.h.b16 %v715
        %v795 = vunpack.c.l.b16 %v716
        %v796 = vunpack.c.h.b16 %v716
        %v797 = vunpack.c.l.b16 %v717
        %v798 = vunpack.c.h.b16 %v717
        %v799 = vunpack.c.l.b16 %v718
        %v800 = vunpack.c.h.b16 %v718
        %v801 = vunpack.c.l.b16 %v719
        %v802 = vunpack.c.h.b16 %v719
        %v803 = vunpack.c.l.b16 %v720
        %v804 = vunpack.c.h.b16 %v720
        %v805 = vunpack.c.l.b16 %v721
        %v806 = vunpack.c.h.b16 %v721
        %v807 = vunpack.c.l.b16 %v722
        %v808 = vunpack.c.h.b16 %v722
        %v809 = vunpack.c.l.b16 %v723
        %v810 = vunpack.c.h.b16 %v723
        %v811 = vunpack.c.l.b16 %v724
        %v812 = vunpack.c.h.b16 %v724
        %v813 = vunpack.c.l.b16 %v725
        %v814 = vunpack.c.h.b16 %v725
        %v815 = vunpack.c.l.b16 %v726
        %v816 = vunpack.c.h.b16 %v726
        %v817 = vunpack.c.l.b16 %v727
        %v818 = vunpack.c.h.b16 %v727
        %v819 = vunpack.c.l.b16 %v728
        %v820 = vunpack.c.h.b16 %v728
        %v821 = vunpack.c.l.b16 %v729
        %v822 = vunpack.c.h.b16 %v729
        %v823 = vunpack.c.l.b16 %v730
        %v824 = vunpack.c.h.b16 %v730
        %v825 = vunpack.c.l.b16 %v731
        %v826 = vunpack.c.h.b16 %v731
        %v827 = vunpack.c.l.b16 %v732
        %v828 = vunpack.c.h.b16 %v732
        %v829 = vunpack.c.l.b16 %v733
        %v830 = vunpack.c.h.b16 %v733
        %v831 = vunpack.c.l.b16 %v734
        %v832 = vunpack.c.h.b16 %v734
        %v833 = vpack.c.b16 %v771, %v769
        %v834 = vpack.c.b16 %v772, %v770
        %v835 = vpack.c.b16 %v775, %v773
        %v836 = vpack.c.b16 %v776, %v774
        %v837 = vpack.c.b16 %v779, %v777
        %v838 = vpack.c.b16 %v780, %v778
        %v839 = vpack.c.b16 %v783, %v781
        %v840 = vpack.c.b16 %v784, %v782
        %v841 = vpack.c.b16 %v787, %v785
        %v842 = vpack.c.b16 %v788, %v786
        %v843 = vpack.c.b16 %v791, %v789
        %v844 = vpack.c.b16 %v792, %v790
        %v845 = vpack.c.b16 %v795, %v793
        %v846 = vpack.c.b16 %v796, %v794
        %v847 = vpack.c.b16 %v799, %v797
        %v848 = vpack.c.b16 %v800, %v798
        %v849 = vpack.c.b16 %v803, %v801
        %v850 = vpack.c.b16 %v804, %v802
        %v851 = vpack.c.b16 %v807, %v805
        %v852 = vpack.c.b16 %v808, %v806
        %v853 = vpack.c.b16 %v811, %v809
        %v854 = vpack.c.b16 %v812, %v810
        %v855 = vpack.c.b16 %v815, %v813
        %v856 = vpack.c.b16 %v816, %v814
        %v857 = vpack.c.b16 %v819, %v817
        %v858 = vpack.c.b16 %v820, %v818
        %v859 = vpack.c.b16 %v823, %v821
        %v860 = vpack.c.b16 %v824, %v822
        %v861 = vpack.c.b16 %v827, %v825
        %v862 = vpack.c.b16 %v828, %v826
        %v863 = vpack.c.b16 %v831, %v829
        %v864 = vpack.c.b16 %v832, %v830
        %897 = vmatpush.bf16.msra.mxu0 %v847
        %898 = vmatpush.bf16.msra.mxu0 %v845
        %899 = vmatpush.bf16.msra.mxu0 %v843
        %900 = vmatpush.bf16.msra.mxu0 %v841
        %901 = vmatpush.bf16.msra.mxu0 %v839
        %902 = vmatpush.bf16.msra.mxu0 %v837
        %903 = vmatpush.bf16.msra.mxu0 %v835
        %904 = vmatpush.bf16.msra.mxu0 %v833
        %905 = vmatmul.bf16.gmra.mxu0 %v699
        %v906 = vpop.f32.mrf.mxu0
        %v907 = vadd.f32 %v735, %v906
        %v908 = vpop.f32.mrf.mxu0
        %v909 = vadd.f32 %v735, %v908
        %910 = vmatmul.bf16.gmra.mxu0 %v701
        %v911 = vpop.f32.mrf.mxu0
        %v912 = vadd.f32 %v735, %v911
        %v913 = vpop.f32.mrf.mxu0
        %v914 = vadd.f32 %v735, %v913
        %915 = vdwg.mxu0
        %916 = vmatpush.bf16.msra.mxu0 %v863
        %917 = vmatpush.bf16.msra.mxu0 %v861
        %918 = vmatpush.bf16.msra.mxu0 %v859
        %919 = vmatpush.bf16.msra.mxu0 %v857
        %920 = vmatpush.bf16.msra.mxu0 %v855
        %921 = vmatpush.bf16.msra.mxu0 %v853
        %922 = vmatpush.bf16.msra.mxu0 %v851
        %923 = vmatpush.bf16.msra.mxu0 %v849
        %924 = vmatmul.bf16.gmra.mxu0 %v700
        %v925 = vpop.f32.mrf.mxu0
        %v926 = vadd.f32 %v907, %v925
        %v927 = vpop.f32.mrf.mxu0
        %v928 = vadd.f32 %v909, %v927
        %929 = vmatmul.bf16.gmra.mxu0 %v702
        %v930 = vpop.f32.mrf.mxu0
        %v931 = vadd.f32 %v912, %v930
        %v932 = vpop.f32.mrf.mxu0
        %v933 = vadd.f32 %v914, %v932
        %934 = vdwg.mxu0
        %935 = vmatpush.bf16.msra.mxu0 %v848
        %936 = vmatpush.bf16.msra.mxu0 %v846
        %937 = vmatpush.bf16.msra.mxu0 %v844
        %938 = vmatpush.bf16.msra.mxu0 %v842
        %939 = vmatpush.bf16.msra.mxu0 %v840
        %940 = vmatpush.bf16.msra.mxu0 %v838
        %941 = vmatpush.bf16.msra.mxu0 %v836
        %942 = vmatpush.bf16.msra.mxu0 %v834
        %943 = vmatmul.bf16.gmra.mxu0 %v699
        %v944 = vpop.f32.mrf.mxu0
        %v945 = vadd.f32 %v736, %v944
        %v946 = vpop.f32.mrf.mxu0
        %v947 = vadd.f32 %v736, %v946
        %948 = vmatmul.bf16.gmra.mxu0 %v701
        %v949 = vpop.f32.mrf.mxu0
        %v950 = vadd.f32 %v736, %v949
        %v951 = vpop.f32.mrf.mxu0
        %v952 = vadd.f32 %v736, %v951
        %953 = vdwg.mxu0
        %954 = vmatpush.bf16.msra.mxu0 %v864
        %955 = vmatpush.bf16.msra.mxu0 %v862
        %956 = vmatpush.bf16.msra.mxu0 %v860
        %957 = vmatpush.bf16.msra.mxu0 %v858
        %958 = vmatpush.bf16.msra.mxu0 %v856
        %959 = vmatpush.bf16.msra.mxu0 %v854
        %960 = vmatpush.bf16.msra.mxu0 %v852
        %961 = vmatpush.bf16.msra.mxu0 %v850
        %962 = vmatmul.bf16.gmra.mxu0 %v700
        %v963 = vpop.f32.mrf.mxu0
        %v964 = vadd.f32 %v945, %v963
        %v965 = vpop.f32.mrf.mxu0
        %v966 = vadd.f32 %v947, %v965
        %967 = vmatmul.bf16.gmra.mxu0 %v702
        %v968 = vpop.f32.mrf.mxu0
        %v969 = vadd.f32 %v950, %v968
        %v970 = vpop.f32.mrf.mxu0
        %v971 = vadd.f32 %v952, %v970
        %972 = vdwg.mxu0
        %v973 = vpack.c.bf16 %v928, %v926
        %v974 = vpack.c.bf16 %v966, %v964
        %v975 = vpack.c.bf16 %v933, %v931
        %v976 = vpack.c.bf16 %v971, %v969
        %v977 = vld [vmem:[#allocation11] sm:$0xff]
        %v978 = vld [vmem:[#allocation11 + $0x8] sm:$0xff]
        %v979 = vld [vmem:[#allocation11 + $0x10] sm:$0xff]
        %v980 = vld [vmem:[#allocation11 + $0x18] sm:$0xff]
        %v981 = vld [vmem:[#allocation11 + $0x20] sm:$0xf]
        %v982 = vld [vmem:[#allocation11 + $0x24] sm:$0xff]
        %v983 = vld [vmem:[#allocation11 + $0x2c] sm:$0xff]
        %v984 = vld [vmem:[#allocation11 + $0x34] sm:$0xff]
        %v985 = vld [vmem:[#allocation11 + $0x3c] sm:$0xff]
        %v986 = vld [vmem:[#allocation11 + $0x44] sm:$0xf]
        %v987 = vld [vmem:[#allocation11 + $0x48] sm:$0xff]
        %v988 = vld [vmem:[#allocation11 + $0x50] sm:$0xff]
        %v989 = vld [vmem:[#allocation11 + $0x58] sm:$0xff]
        %v990 = vld [vmem:[#allocation11 + $0x60] sm:$0xff]
        %v991 = vld [vmem:[#allocation11 + $0x68] sm:$0xf]
        %v992 = vld [vmem:[#allocation11 + $0x6c] sm:$0xff]
        %v993 = vld [vmem:[#allocation11 + $0x74] sm:$0xff]
        %v994 = vld [vmem:[#allocation11 + $0x7c] sm:$0xff]
        %v995 = vld [vmem:[#allocation11 + $0x84] sm:$0xff]
        %v996 = vld [vmem:[#allocation11 + $0x8c] sm:$0xf]
        %v997 = vld [vmem:[#allocation11 + $0x90] sm:$0xff]
        %v998 = vld [vmem:[#allocation11 + $0x98] sm:$0xff]
        %v999 = vld [vmem:[#allocation11 + $0xa0] sm:$0xff]
        %v1000 = vld [vmem:[#allocation11 + $0xa8] sm:$0xff]
        %v1001 = vld [vmem:[#allocation11 + $0xb0] sm:$0xf]
        %v1002 = vld [vmem:[#allocation11 + $0xb4] sm:$0xff]
        %v1003 = vld [vmem:[#allocation11 + $0xbc] sm:$0xff]
        %v1004 = vld [vmem:[#allocation11 + $0xc4] sm:$0xff]
        %v1005 = vld [vmem:[#allocation11 + $0xcc] sm:$0xff]
        %v1006 = vld [vmem:[#allocation11 + $0xd4] sm:$0xf]
        %v1007 = vld [vmem:[#allocation11 + $0xd8] sm:$0xff]
        %v1008 = vld [vmem:[#allocation11 + $0xe0] sm:$0xff]
        %v1009 = vld [vmem:[#allocation11 + $0xe8] sm:$0xff]
        %v1010 = vld [vmem:[#allocation11 + $0xf0] sm:$0xff]
        %v1011 = vld [vmem:[#allocation11 + $0xf8] sm:$0xf]
        %v1012 = vld [vmem:[#allocation11 + $0xfc] sm:$0xff]
        %v1013 = vld [vmem:[#allocation11 + $0x104] sm:$0xff]
        %v1014 = vld [vmem:[#allocation11 + $0x10c] sm:$0xff]
        %v1015 = vld [vmem:[#allocation11 + $0x114] sm:$0xff]
        %v1016 = vld [vmem:[#allocation11 + $0x11c] sm:$0xf]
        %v1017 = vld [vmem:[#allocation11 + $0x120] sm:$0xff]
        %v1018 = vld [vmem:[#allocation11 + $0x128] sm:$0xff]
        %v1019 = vld [vmem:[#allocation11 + $0x130] sm:$0xff]
        %v1020 = vld [vmem:[#allocation11 + $0x138] sm:$0xff]
        %v1021 = vld [vmem:[#allocation11 + $0x140] sm:$0xf]
        %v1022 = vld [vmem:[#allocation11 + $0x144] sm:$0xff]
        %v1023 = vld [vmem:[#allocation11 + $0x14c] sm:$0xff]
        %v1024 = vld [vmem:[#allocation11 + $0x154] sm:$0xff]
        %v1025 = vld [vmem:[#allocation11 + $0x15c] sm:$0xff]
        %v1026 = vld [vmem:[#allocation11 + $0x164] sm:$0xf]
        %v1027 = vld [vmem:[#allocation11 + $0x168] sm:$0xff]
        %v1028 = vld [vmem:[#allocation11 + $0x170] sm:$0xff]
        %v1029 = vld [vmem:[#allocation11 + $0x178] sm:$0xff]
        %v1030 = vld [vmem:[#allocation11 + $0x180] sm:$0xff]
        %v1031 = vld [vmem:[#allocation11 + $0x188] sm:$0xf]
        %v1032 = vld [vmem:[#allocation11 + $0x18c] sm:$0xff]
        %v1033 = vld [vmem:[#allocation11 + $0x194] sm:$0xff]
        %v1034 = vld [vmem:[#allocation11 + $0x19c] sm:$0xff]
        %v1035 = vld [vmem:[#allocation11 + $0x1a4] sm:$0xff]
        %v1036 = vld [vmem:[#allocation11 + $0x1ac] sm:$0xf]
        %v1037 = vld [vmem:[#allocation11 + $0x1b0] sm:$0xff]
        %v1038 = vld [vmem:[#allocation11 + $0x1b8] sm:$0xff]
        %v1039 = vld [vmem:[#allocation11 + $0x1c0] sm:$0xff]
        %v1040 = vld [vmem:[#allocation11 + $0x1c8] sm:$0xff]
        %v1041 = vld [vmem:[#allocation11 + $0x1d0] sm:$0xf]
        %v1042 = vld [vmem:[#allocation11 + $0x1d4] sm:$0xff]
        %v1043 = vld [vmem:[#allocation11 + $0x1dc] sm:$0xff]
        %v1044 = vld [vmem:[#allocation11 + $0x1e4] sm:$0xff]
        %v1045 = vld [vmem:[#allocation11 + $0x1ec] sm:$0xff]
        %v1046 = vld [vmem:[#allocation11 + $0x1f4] sm:$0xf]
        %v1047 = vld [vmem:[#allocation11 + $0x1f8] sm:$0xff]
        %v1048 = vld [vmem:[#allocation11 + $0x200] sm:$0xff]
        %v1049 = vld [vmem:[#allocation11 + $0x208] sm:$0xff]
        %v1050 = vld [vmem:[#allocation11 + $0x210] sm:$0xff]
        %v1051 = vld [vmem:[#allocation11 + $0x218] sm:$0xf]
        %v1052 = vld [vmem:[#allocation11 + $0x21c] sm:$0xff]
        %v1053 = vld [vmem:[#allocation11 + $0x224] sm:$0xff]
        %v1054 = vld [vmem:[#allocation11 + $0x22c] sm:$0xff]
        %v1055 = vld [vmem:[#allocation11 + $0x234] sm:$0xff]
        %v1056 = vld [vmem:[#allocation11 + $0x23c] sm:$0xf]
        %v1057 = vld [vmem:[#allocation11 + $0x240] sm:$0xff]
        %v1058 = vld [vmem:[#allocation11 + $0x248] sm:$0xff]
        %v1059 = vld [vmem:[#allocation11 + $0x250] sm:$0xff]
        %v1060 = vld [vmem:[#allocation11 + $0x258] sm:$0xff]
        %v1061 = vld [vmem:[#allocation11 + $0x260] sm:$0xf]
        %v1062 = vld [vmem:[#allocation11 + $0x264] sm:$0xff]
        %v1063 = vld [vmem:[#allocation11 + $0x26c] sm:$0xff]
        %v1064 = vld [vmem:[#allocation11 + $0x274] sm:$0xff]
        %v1065 = vld [vmem:[#allocation11 + $0x27c] sm:$0xff]
        %v1066 = vld [vmem:[#allocation11 + $0x284] sm:$0xf]
        %v1067 = vld [vmem:[#allocation11 + $0x288] sm:$0xff]
        %v1068 = vld [vmem:[#allocation11 + $0x290] sm:$0xff]
        %v1069 = vld [vmem:[#allocation11 + $0x298] sm:$0xff]
        %v1070 = vld [vmem:[#allocation11 + $0x2a0] sm:$0xff]
        %v1071 = vld [vmem:[#allocation11 + $0x2a8] sm:$0xf]
        %v1072 = vld [vmem:[#allocation11 + $0x2ac] sm:$0xff]
        %v1073 = vld [vmem:[#allocation11 + $0x2b4] sm:$0xff]
        %v1074 = vld [vmem:[#allocation11 + $0x2bc] sm:$0xff]
        %v1075 = vld [vmem:[#allocation11 + $0x2c4] sm:$0xff]
        %v1076 = vld [vmem:[#allocation11 + $0x2cc] sm:$0xf]
        %v1077 = vld [vmem:[#allocation11 + $0x2d0] sm:$0xff]
        %v1078 = vld [vmem:[#allocation11 + $0x2d8] sm:$0xff]
        %v1079 = vld [vmem:[#allocation11 + $0x2e0] sm:$0xff]
        %v1080 = vld [vmem:[#allocation11 + $0x2e8] sm:$0xff]
        %v1081 = vld [vmem:[#allocation11 + $0x2f0] sm:$0xf]
        %v1082 = vld [vmem:[#allocation11 + $0x2f4] sm:$0xff]
        %v1083 = vld [vmem:[#allocation11 + $0x2fc] sm:$0xff]
        %v1084 = vld [vmem:[#allocation11 + $0x304] sm:$0xff]
        %v1085 = vld [vmem:[#allocation11 + $0x30c] sm:$0xff]
        %v1086 = vld [vmem:[#allocation11 + $0x314] sm:$0xf]
        %v1087 = vld [vmem:[#allocation11 + $0x318] sm:$0xff]
        %v1088 = vld [vmem:[#allocation11 + $0x320] sm:$0xff]
        %v1089 = vld [vmem:[#allocation11 + $0x328] sm:$0xff]
        %v1090 = vld [vmem:[#allocation11 + $0x330] sm:$0xff]
        %v1091 = vld [vmem:[#allocation11 + $0x338] sm:$0xf]
        %v1092 = vld [vmem:[#allocation11 + $0x33c] sm:$0xff]
        %v1093 = vld [vmem:[#allocation11 + $0x344] sm:$0xff]
        %v1094 = vld [vmem:[#allocation11 + $0x34c] sm:$0xff]
        %v1095 = vld [vmem:[#allocation11 + $0x354] sm:$0xff]
        %v1096 = vld [vmem:[#allocation11 + $0x35c] sm:$0xf]
        %v1097 = vld [vmem:[#allocation11 + $0x360] sm:$0xff]
        %v1098 = vld [vmem:[#allocation11 + $0x368] sm:$0xff]
        %v1099 = vld [vmem:[#allocation11 + $0x370] sm:$0xff]
        %v1100 = vld [vmem:[#allocation11 + $0x378] sm:$0xff]
        %v1101 = vld [vmem:[#allocation11 + $0x380] sm:$0xf]
        %v1102 = vld [vmem:[#allocation11 + $0x384] sm:$0xff]
        %v1103 = vld [vmem:[#allocation11 + $0x38c] sm:$0xff]
        %v1104 = vld [vmem:[#allocation11 + $0x394] sm:$0xff]
        %v1105 = vld [vmem:[#allocation11 + $0x39c] sm:$0xff]
        %v1106 = vld [vmem:[#allocation11 + $0x3a4] sm:$0xf]
        %v1107 = vld [vmem:[#allocation11 + $0x3a8] sm:$0xff]
        %v1108 = vld [vmem:[#allocation11 + $0x3b0] sm:$0xff]
        %v1109 = vld [vmem:[#allocation11 + $0x3b8] sm:$0xff]
        %v1110 = vld [vmem:[#allocation11 + $0x3c0] sm:$0xff]
        %v1111 = vld [vmem:[#allocation11 + $0x3c8] sm:$0xf]
        %v1112 = vld [vmem:[#allocation11 + $0x3cc] sm:$0xff]
        %v1113 = vld [vmem:[#allocation11 + $0x3d4] sm:$0xff]
        %v1114 = vld [vmem:[#allocation11 + $0x3dc] sm:$0xff]
        %v1115 = vld [vmem:[#allocation11 + $0x3e4] sm:$0xff]
        %v1116 = vld [vmem:[#allocation11 + $0x3ec] sm:$0xf]
        %v1117 = vld [vmem:[#allocation11 + $0x3f0] sm:$0xff]
        %v1118 = vld [vmem:[#allocation11 + $0x3f8] sm:$0xff]
        %v1119 = vld [vmem:[#allocation11 + $0x400] sm:$0xff]
        %v1120 = vld [vmem:[#allocation11 + $0x408] sm:$0xff]
        %v1121 = vld [vmem:[#allocation11 + $0x410] sm:$0xf]
        %v1122 = vld [vmem:[#allocation11 + $0x414] sm:$0xff]
        %v1123 = vld [vmem:[#allocation11 + $0x41c] sm:$0xff]
        %v1124 = vld [vmem:[#allocation11 + $0x424] sm:$0xff]
        %v1125 = vld [vmem:[#allocation11 + $0x42c] sm:$0xff]
        %v1126 = vld [vmem:[#allocation11 + $0x434] sm:$0xf]
        %v1127 = vld [vmem:[#allocation11 + $0x438] sm:$0xff]
        %v1128 = vld [vmem:[#allocation11 + $0x440] sm:$0xff]
        %v1129 = vld [vmem:[#allocation11 + $0x448] sm:$0xff]
        %v1130 = vld [vmem:[#allocation11 + $0x450] sm:$0xff]
        %v1131 = vld [vmem:[#allocation11 + $0x458] sm:$0xf]
        %v1132 = vld [vmem:[#allocation11 + $0x45c] sm:$0xff]
        %v1133 = vld [vmem:[#allocation11 + $0x464] sm:$0xff]
        %v1134 = vld [vmem:[#allocation11 + $0x46c] sm:$0xff]
        %v1135 = vld [vmem:[#allocation11 + $0x474] sm:$0xff]
        %v1136 = vld [vmem:[#allocation11 + $0x47c] sm:$0xf]
        %v1297 = vunpack.c.l.b16 %v977
        %v1298 = vunpack.c.h.b16 %v977
        %v1299 = vunpack.c.l.b16 %v978
        %v1300 = vunpack.c.h.b16 %v978
        %v1301 = vunpack.c.l.b16 %v979
        %v1302 = vunpack.c.h.b16 %v979
        %v1303 = vunpack.c.l.b16 %v980
        %v1304 = vunpack.c.h.b16 %v980
        %v1305 = vunpack.c.l.b16 %v981
        %v1306 = vunpack.c.l.b16 %v982
        %v1307 = vunpack.c.h.b16 %v982
        %v1308 = vunpack.c.l.b16 %v983
        %v1309 = vunpack.c.h.b16 %v983
        %v1310 = vunpack.c.l.b16 %v984
        %v1311 = vunpack.c.h.b16 %v984
        %v1312 = vunpack.c.l.b16 %v985
        %v1313 = vunpack.c.h.b16 %v985
        %v1314 = vunpack.c.l.b16 %v986
        %v1315 = vunpack.c.l.b16 %v987
        %v1316 = vunpack.c.h.b16 %v987
        %v1317 = vunpack.c.l.b16 %v988
        %v1318 = vunpack.c.h.b16 %v988
        %v1319 = vunpack.c.l.b16 %v989
        %v1320 = vunpack.c.h.b16 %v989
        %v1321 = vunpack.c.l.b16 %v990
        %v1322 = vunpack.c.h.b16 %v990
        %v1323 = vunpack.c.l.b16 %v991
        %v1324 = vunpack.c.l.b16 %v992
        %v1325 = vunpack.c.h.b16 %v992
        %v1326 = vunpack.c.l.b16 %v993
        %v1327 = vunpack.c.h.b16 %v993
        %v1328 = vunpack.c.l.b16 %v994
        %v1329 = vunpack.c.h.b16 %v994
        %v1330 = vunpack.c.l.b16 %v995
        %v1331 = vunpack.c.h.b16 %v995
        %v1332 = vunpack.c.l.b16 %v996
        %v1333 = vunpack.c.l.b16 %v997
        %v1334 = vunpack.c.h.b16 %v997
        %v1335 = vunpack.c.l.b16 %v998
        %v1336 = vunpack.c.h.b16 %v998
        %v1337 = vunpack.c.l.b16 %v999
        %v1338 = vunpack.c.h.b16 %v999
        %v1339 = vunpack.c.l.b16 %v1000
        %v1340 = vunpack.c.h.b16 %v1000
        %v1341 = vunpack.c.l.b16 %v1001
        %v1342 = vunpack.c.l.b16 %v1002
        %v1343 = vunpack.c.h.b16 %v1002
        %v1344 = vunpack.c.l.b16 %v1003
        %v1345 = vunpack.c.h.b16 %v1003
        %v1346 = vunpack.c.l.b16 %v1004
        %v1347 = vunpack.c.h.b16 %v1004
        %v1348 = vunpack.c.l.b16 %v1005
        %v1349 = vunpack.c.h.b16 %v1005
        %v1350 = vunpack.c.l.b16 %v1006
        %v1351 = vunpack.c.l.b16 %v1007
        %v1352 = vunpack.c.h.b16 %v1007
        %v1353 = vunpack.c.l.b16 %v1008
        %v1354 = vunpack.c.h.b16 %v1008
        %v1355 = vunpack.c.l.b16 %v1009
        %v1356 = vunpack.c.h.b16 %v1009
        %v1357 = vunpack.c.l.b16 %v1010
        %v1358 = vunpack.c.h.b16 %v1010
        %v1359 = vunpack.c.l.b16 %v1011
        %v1360 = vunpack.c.l.b16 %v1012
        %v1361 = vunpack.c.h.b16 %v1012
        %v1362 = vunpack.c.l.b16 %v1013
        %v1363 = vunpack.c.h.b16 %v1013
        %v1364 = vunpack.c.l.b16 %v1014
        %v1365 = vunpack.c.h.b16 %v1014
        %v1366 = vunpack.c.l.b16 %v1015
        %v1367 = vunpack.c.h.b16 %v1015
        %v1368 = vunpack.c.l.b16 %v1016
        %v1369 = vunpack.c.l.b16 %v1017
        %v1370 = vunpack.c.h.b16 %v1017
        %v1371 = vunpack.c.l.b16 %v1018
        %v1372 = vunpack.c.h.b16 %v1018
        %v1373 = vunpack.c.l.b16 %v1019
        %v1374 = vunpack.c.h.b16 %v1019
        %v1375 = vunpack.c.l.b16 %v1020
        %v1376 = vunpack.c.h.b16 %v1020
        %v1377 = vunpack.c.l.b16 %v1021
        %v1378 = vunpack.c.l.b16 %v1022
        %v1379 = vunpack.c.h.b16 %v1022
        %v1380 = vunpack.c.l.b16 %v1023
        %v1381 = vunpack.c.h.b16 %v1023
        %v1382 = vunpack.c.l.b16 %v1024
        %v1383 = vunpack.c.h.b16 %v1024
        %v1384 = vunpack.c.l.b16 %v1025
        %v1385 = vunpack.c.h.b16 %v1025
        %v1386 = vunpack.c.l.b16 %v1026
        %v1387 = vunpack.c.l.b16 %v1027
        %v1388 = vunpack.c.h.b16 %v1027
        %v1389 = vunpack.c.l.b16 %v1028
        %v1390 = vunpack.c.h.b16 %v1028
        %v1391 = vunpack.c.l.b16 %v1029
        %v1392 = vunpack.c.h.b16 %v1029
        %v1393 = vunpack.c.l.b16 %v1030
        %v1394 = vunpack.c.h.b16 %v1030
        %v1395 = vunpack.c.l.b16 %v1031
        %v1396 = vunpack.c.l.b16 %v1032
        %v1397 = vunpack.c.h.b16 %v1032
        %v1398 = vunpack.c.l.b16 %v1033
        %v1399 = vunpack.c.h.b16 %v1033
        %v1400 = vunpack.c.l.b16 %v1034
        %v1401 = vunpack.c.h.b16 %v1034
        %v1402 = vunpack.c.l.b16 %v1035
        %v1403 = vunpack.c.h.b16 %v1035
        %v1404 = vunpack.c.l.b16 %v1036
        %v1405 = vunpack.c.l.b16 %v1037
        %v1406 = vunpack.c.h.b16 %v1037
        %v1407 = vunpack.c.l.b16 %v1038
        %v1408 = vunpack.c.h.b16 %v1038
        %v1409 = vunpack.c.l.b16 %v1039
        %v1410 = vunpack.c.h.b16 %v1039
        %v1411 = vunpack.c.l.b16 %v1040
        %v1412 = vunpack.c.h.b16 %v1040
        %v1413 = vunpack.c.l.b16 %v1041
        %v1414 = vunpack.c.l.b16 %v1042
        %v1415 = vunpack.c.h.b16 %v1042
        %v1416 = vunpack.c.l.b16 %v1043
        %v1417 = vunpack.c.h.b16 %v1043
        %v1418 = vunpack.c.l.b16 %v1044
        %v1419 = vunpack.c.h.b16 %v1044
        %v1420 = vunpack.c.l.b16 %v1045
        %v1421 = vunpack.c.h.b16 %v1045
        %v1422 = vunpack.c.l.b16 %v1046
        %v1423 = vunpack.c.l.b16 %v1047
        %v1424 = vunpack.c.h.b16 %v1047
        %v1425 = vunpack.c.l.b16 %v1048
        %v1426 = vunpack.c.h.b16 %v1048
        %v1427 = vunpack.c.l.b16 %v1049
        %v1428 = vunpack.c.h.b16 %v1049
        %v1429 = vunpack.c.l.b16 %v1050
        %v1430 = vunpack.c.h.b16 %v1050
        %v1431 = vunpack.c.l.b16 %v1051
        %v1432 = vunpack.c.l.b16 %v1052
        %v1433 = vunpack.c.h.b16 %v1052
        %v1434 = vunpack.c.l.b16 %v1053
        %v1435 = vunpack.c.h.b16 %v1053
        %v1436 = vunpack.c.l.b16 %v1054
        %v1437 = vunpack.c.h.b16 %v1054
        %v1438 = vunpack.c.l.b16 %v1055
        %v1439 = vunpack.c.h.b16 %v1055
        %v1440 = vunpack.c.l.b16 %v1056
        %v1441 = vunpack.c.l.b16 %v1057
        %v1442 = vunpack.c.h.b16 %v1057
        %v1443 = vunpack.c.l.b16 %v1058
        %v1444 = vunpack.c.h.b16 %v1058
        %v1445 = vunpack.c.l.b16 %v1059
        %v1446 = vunpack.c.h.b16 %v1059
        %v1447 = vunpack.c.l.b16 %v1060
        %v1448 = vunpack.c.h.b16 %v1060
        %v1449 = vunpack.c.l.b16 %v1061
        %v1450 = vunpack.c.l.b16 %v1062
        %v1451 = vunpack.c.h.b16 %v1062
        %v1452 = vunpack.c.l.b16 %v1063
        %v1453 = vunpack.c.h.b16 %v1063
        %v1454 = vunpack.c.l.b16 %v1064
        %v1455 = vunpack.c.h.b16 %v1064
        %v1456 = vunpack.c.l.b16 %v1065
        %v1457 = vunpack.c.h.b16 %v1065
        %v1458 = vunpack.c.l.b16 %v1066
        %v1459 = vunpack.c.l.b16 %v1067
        %v1460 = vunpack.c.h.b16 %v1067
        %v1461 = vunpack.c.l.b16 %v1068
        %v1462 = vunpack.c.h.b16 %v1068
        %v1463 = vunpack.c.l.b16 %v1069
        %v1464 = vunpack.c.h.b16 %v1069
        %v1465 = vunpack.c.l.b16 %v1070
        %v1466 = vunpack.c.h.b16 %v1070
        %v1467 = vunpack.c.l.b16 %v1071
        %v1468 = vunpack.c.l.b16 %v1072
        %v1469 = vunpack.c.h.b16 %v1072
        %v1470 = vunpack.c.l.b16 %v1073
        %v1471 = vunpack.c.h.b16 %v1073
        %v1472 = vunpack.c.l.b16 %v1074
        %v1473 = vunpack.c.h.b16 %v1074
        %v1474 = vunpack.c.l.b16 %v1075
        %v1475 = vunpack.c.h.b16 %v1075
        %v1476 = vunpack.c.l.b16 %v1076
        %v1477 = vunpack.c.l.b16 %v1077
        %v1478 = vunpack.c.h.b16 %v1077
        %v1479 = vunpack.c.l.b16 %v1078
        %v1480 = vunpack.c.h.b16 %v1078
        %v1481 = vunpack.c.l.b16 %v1079
        %v1482 = vunpack.c.h.b16 %v1079
        %v1483 = vunpack.c.l.b16 %v1080
        %v1484 = vunpack.c.h.b16 %v1080
        %v1485 = vunpack.c.l.b16 %v1081
        %v1486 = vunpack.c.l.b16 %v1082
        %v1487 = vunpack.c.h.b16 %v1082
        %v1488 = vunpack.c.l.b16 %v1083
        %v1489 = vunpack.c.h.b16 %v1083
        %v1490 = vunpack.c.l.b16 %v1084
        %v1491 = vunpack.c.h.b16 %v1084
        %v1492 = vunpack.c.l.b16 %v1085
        %v1493 = vunpack.c.h.b16 %v1085
        %v1494 = vunpack.c.l.b16 %v1086
        %v1495 = vunpack.c.l.b16 %v1087
        %v1496 = vunpack.c.h.b16 %v1087
        %v1497 = vunpack.c.l.b16 %v1088
        %v1498 = vunpack.c.h.b16 %v1088
        %v1499 = vunpack.c.l.b16 %v1089
        %v1500 = vunpack.c.h.b16 %v1089
        %v1501 = vunpack.c.l.b16 %v1090
        %v1502 = vunpack.c.h.b16 %v1090
        %v1503 = vunpack.c.l.b16 %v1091
        %v1504 = vunpack.c.l.b16 %v1092
        %v1505 = vunpack.c.h.b16 %v1092
        %v1506 = vunpack.c.l.b16 %v1093
        %v1507 = vunpack.c.h.b16 %v1093
        %v1508 = vunpack.c.l.b16 %v1094
        %v1509 = vunpack.c.h.b16 %v1094
        %v1510 = vunpack.c.l.b16 %v1095
        %v1511 = vunpack.c.h.b16 %v1095
        %v1512 = vunpack.c.l.b16 %v1096
        %v1513 = vunpack.c.l.b16 %v1097
        %v1514 = vunpack.c.h.b16 %v1097
        %v1515 = vunpack.c.l.b16 %v1098
        %v1516 = vunpack.c.h.b16 %v1098
        %v1517 = vunpack.c.l.b16 %v1099
        %v1518 = vunpack.c.h.b16 %v1099
        %v1519 = vunpack.c.l.b16 %v1100
        %v1520 = vunpack.c.h.b16 %v1100
        %v1521 = vunpack.c.l.b16 %v1101
        %v1522 = vunpack.c.l.b16 %v1102
        %v1523 = vunpack.c.h.b16 %v1102
        %v1524 = vunpack.c.l.b16 %v1103
        %v1525 = vunpack.c.h.b16 %v1103
        %v1526 = vunpack.c.l.b16 %v1104
        %v1527 = vunpack.c.h.b16 %v1104
        %v1528 = vunpack.c.l.b16 %v1105
        %v1529 = vunpack.c.h.b16 %v1105
        %v1530 = vunpack.c.l.b16 %v1106
        %v1531 = vunpack.c.l.b16 %v1107
        %v1532 = vunpack.c.h.b16 %v1107
        %v1533 = vunpack.c.l.b16 %v1108
        %v1534 = vunpack.c.h.b16 %v1108
        %v1535 = vunpack.c.l.b16 %v1109
        %v1536 = vunpack.c.h.b16 %v1109
        %v1537 = vunpack.c.l.b16 %v1110
        %v1538 = vunpack.c.h.b16 %v1110
        %v1539 = vunpack.c.l.b16 %v1111
        %v1540 = vunpack.c.l.b16 %v1112
        %v1541 = vunpack.c.h.b16 %v1112
        %v1542 = vunpack.c.l.b16 %v1113
        %v1543 = vunpack.c.h.b16 %v1113
        %v1544 = vunpack.c.l.b16 %v1114
        %v1545 = vunpack.c.h.b16 %v1114
        %v1546 = vunpack.c.l.b16 %v1115
        %v1547 = vunpack.c.h.b16 %v1115
        %v1548 = vunpack.c.l.b16 %v1116
        %v1549 = vunpack.c.l.b16 %v1117
        %v1550 = vunpack.c.h.b16 %v1117
        %v1551 = vunpack.c.l.b16 %v1118
        %v1552 = vunpack.c.h.b16 %v1118
        %v1553 = vunpack.c.l.b16 %v1119
        %v1554 = vunpack.c.h.b16 %v1119
        %v1555 = vunpack.c.l.b16 %v1120
        %v1556 = vunpack.c.h.b16 %v1120
        %v1557 = vunpack.c.l.b16 %v1121
        %v1558 = vunpack.c.l.b16 %v1122
        %v1559 = vunpack.c.h.b16 %v1122
        %v1560 = vunpack.c.l.b16 %v1123
        %v1561 = vunpack.c.h.b16 %v1123
        %v1562 = vunpack.c.l.b16 %v1124
        %v1563 = vunpack.c.h.b16 %v1124
        %v1564 = vunpack.c.l.b16 %v1125
        %v1565 = vunpack.c.h.b16 %v1125
        %v1566 = vunpack.c.l.b16 %v1126
        %v1567 = vunpack.c.l.b16 %v1127
        %v1568 = vunpack.c.h.b16 %v1127
        %v1569 = vunpack.c.l.b16 %v1128
        %v1570 = vunpack.c.h.b16 %v1128
        %v1571 = vunpack.c.l.b16 %v1129
        %v1572 = vunpack.c.h.b16 %v1129
        %v1573 = vunpack.c.l.b16 %v1130
        %v1574 = vunpack.c.h.b16 %v1130
        %v1575 = vunpack.c.l.b16 %v1131
        %v1576 = vunpack.c.l.b16 %v1132
        %v1577 = vunpack.c.h.b16 %v1132
        %v1578 = vunpack.c.l.b16 %v1133
        %v1579 = vunpack.c.h.b16 %v1133
        %v1580 = vunpack.c.l.b16 %v1134
        %v1581 = vunpack.c.h.b16 %v1134
        %v1582 = vunpack.c.l.b16 %v1135
        %v1583 = vunpack.c.h.b16 %v1135
        %v1584 = vunpack.c.l.b16 %v1136
        %v1585 = vpack.c.b16 %v1306, %v1297
        %v1586 = vpack.c.b16 %v1307, %v1298
        %v1587 = vpack.c.b16 %v1308, %v1299
        %v1588 = vpack.c.b16 %v1309, %v1300
        %v1589 = vpack.c.b16 %v1310, %v1301
        %v1590 = vpack.c.b16 %v1311, %v1302
        %v1591 = vpack.c.b16 %v1312, %v1303
        %v1592 = vpack.c.b16 %v1313, %v1304
        %v1593 = vpack.c.b16 %v1314, %v1305
        %v1594 = vpack.c.b16 %v1324, %v1315
        %v1595 = vpack.c.b16 %v1325, %v1316
        %v1596 = vpack.c.b16 %v1326, %v1317
        %v1597 = vpack.c.b16 %v1327, %v1318
        %v1598 = vpack.c.b16 %v1328, %v1319
        %v1599 = vpack.c.b16 %v1329, %v1320
        %v1600 = vpack.c.b16 %v1330, %v1321
        %v1601 = vpack.c.b16 %v1331, %v1322
        %v1602 = vpack.c.b16 %v1332, %v1323
        %v1603 = vpack.c.b16 %v1342, %v1333
        %v1604 = vpack.c.b16 %v1343, %v1334
        %v1605 = vpack.c.b16 %v1344, %v1335
        %v1606 = vpack.c.b16 %v1345, %v1336
        %v1607 = vpack.c.b16 %v1346, %v1337
        %v1608 = vpack.c.b16 %v1347, %v1338
        %v1609 = vpack.c.b16 %v1348, %v1339
        %v1610 = vpack.c.b16 %v1349, %v1340
        %v1611 = vpack.c.b16 %v1350, %v1341
        %v1612 = vpack.c.b16 %v1360, %v1351
        %v1613 = vpack.c.b16 %v1361, %v1352
        %v1614 = vpack.c.b16 %v1362, %v1353
        %v1615 = vpack.c.b16 %v1363, %v1354
        %v1616 = vpack.c.b16 %v1364, %v1355
        %v1617 = vpack.c.b16 %v1365, %v1356
        %v1618 = vpack.c.b16 %v1366, %v1357
        %v1619 = vpack.c.b16 %v1367, %v1358
        %v1620 = vpack.c.b16 %v1368, %v1359
        %v1621 = vpack.c.b16 %v1378, %v1369
        %v1622 = vpack.c.b16 %v1379, %v1370
        %v1623 = vpack.c.b16 %v1380, %v1371
        %v1624 = vpack.c.b16 %v1381, %v1372
        %v1625 = vpack.c.b16 %v1382, %v1373
        %v1626 = vpack.c.b16 %v1383, %v1374
        %v1627 = vpack.c.b16 %v1384, %v1375
        %v1628 = vpack.c.b16 %v1385, %v1376
        %v1629 = vpack.c.b16 %v1386, %v1377
        %v1630 = vpack.c.b16 %v1396, %v1387
        %v1631 = vpack.c.b16 %v1397, %v1388
        %v1632 = vpack.c.b16 %v1398, %v1389
        %v1633 = vpack.c.b16 %v1399, %v1390
        %v1634 = vpack.c.b16 %v1400, %v1391
        %v1635 = vpack.c.b16 %v1401, %v1392
        %v1636 = vpack.c.b16 %v1402, %v1393
        %v1637 = vpack.c.b16 %v1403, %v1394
        %v1638 = vpack.c.b16 %v1404, %v1395
        %v1639 = vpack.c.b16 %v1414, %v1405
        %v1640 = vpack.c.b16 %v1415, %v1406
        %v1641 = vpack.c.b16 %v1416, %v1407
        %v1642 = vpack.c.b16 %v1417, %v1408
        %v1643 = vpack.c.b16 %v1418, %v1409
        %v1644 = vpack.c.b16 %v1419, %v1410
        %v1645 = vpack.c.b16 %v1420, %v1411
        %v1646 = vpack.c.b16 %v1421, %v1412
        %v1647 = vpack.c.b16 %v1422, %v1413
        %v1648 = vpack.c.b16 %v1432, %v1423
        %v1649 = vpack.c.b16 %v1433, %v1424
        %v1650 = vpack.c.b16 %v1434, %v1425
        %v1651 = vpack.c.b16 %v1435, %v1426
        %v1652 = vpack.c.b16 %v1436, %v1427
        %v1653 = vpack.c.b16 %v1437, %v1428
        %v1654 = vpack.c.b16 %v1438, %v1429
        %v1655 = vpack.c.b16 %v1439, %v1430
        %v1656 = vpack.c.b16 %v1440, %v1431
        %v1657 = vpack.c.b16 %v1450, %v1441
        %v1658 = vpack.c.b16 %v1451, %v1442
        %v1659 = vpack.c.b16 %v1452, %v1443
        %v1660 = vpack.c.b16 %v1453, %v1444
        %v1661 = vpack.c.b16 %v1454, %v1445
        %v1662 = vpack.c.b16 %v1455, %v1446
        %v1663 = vpack.c.b16 %v1456, %v1447
        %v1664 = vpack.c.b16 %v1457, %v1448
        %v1665 = vpack.c.b16 %v1458, %v1449
        %v1666 = vpack.c.b16 %v1468, %v1459
        %v1667 = vpack.c.b16 %v1469, %v1460
        %v1668 = vpack.c.b16 %v1470, %v1461
        %v1669 = vpack.c.b16 %v1471, %v1462
        %v1670 = vpack.c.b16 %v1472, %v1463
        %v1671 = vpack.c.b16 %v1473, %v1464
        %v1672 = vpack.c.b16 %v1474, %v1465
        %v1673 = vpack.c.b16 %v1475, %v1466
        %v1674 = vpack.c.b16 %v1476, %v1467
        %v1675 = vpack.c.b16 %v1486, %v1477
        %v1676 = vpack.c.b16 %v1487, %v1478
        %v1677 = vpack.c.b16 %v1488, %v1479
        %v1678 = vpack.c.b16 %v1489, %v1480
        %v1679 = vpack.c.b16 %v1490, %v1481
        %v1680 = vpack.c.b16 %v1491, %v1482
        %v1681 = vpack.c.b16 %v1492, %v1483
        %v1682 = vpack.c.b16 %v1493, %v1484
        %v1683 = vpack.c.b16 %v1494, %v1485
        %v1684 = vpack.c.b16 %v1504, %v1495
        %v1685 = vpack.c.b16 %v1505, %v1496
        %v1686 = vpack.c.b16 %v1506, %v1497
        %v1687 = vpack.c.b16 %v1507, %v1498
        %v1688 = vpack.c.b16 %v1508, %v1499
        %v1689 = vpack.c.b16 %v1509, %v1500
        %v1690 = vpack.c.b16 %v1510, %v1501
        %v1691 = vpack.c.b16 %v1511, %v1502
        %v1692 = vpack.c.b16 %v1512, %v1503
        %v1693 = vpack.c.b16 %v1522, %v1513
        %v1694 = vpack.c.b16 %v1523, %v1514
        %v1695 = vpack.c.b16 %v1524, %v1515
        %v1696 = vpack.c.b16 %v1525, %v1516
        %v1697 = vpack.c.b16 %v1526, %v1517
        %v1698 = vpack.c.b16 %v1527, %v1518
        %v1699 = vpack.c.b16 %v1528, %v1519
        %v1700 = vpack.c.b16 %v1529, %v1520
        %v1701 = vpack.c.b16 %v1530, %v1521
        %v1702 = vpack.c.b16 %v1540, %v1531
        %v1703 = vpack.c.b16 %v1541, %v1532
        %v1704 = vpack.c.b16 %v1542, %v1533
        %v1705 = vpack.c.b16 %v1543, %v1534
        %v1706 = vpack.c.b16 %v1544, %v1535
        %v1707 = vpack.c.b16 %v1545, %v1536
        %v1708 = vpack.c.b16 %v1546, %v1537
        %v1709 = vpack.c.b16 %v1547, %v1538
        %v1710 = vpack.c.b16 %v1548, %v1539
        %v1711 = vpack.c.b16 %v1558, %v1549
        %v1712 = vpack.c.b16 %v1559, %v1550
        %v1713 = vpack.c.b16 %v1560, %v1551
        %v1714 = vpack.c.b16 %v1561, %v1552
        %v1715 = vpack.c.b16 %v1562, %v1553
        %v1716 = vpack.c.b16 %v1563, %v1554
        %v1717 = vpack.c.b16 %v1564, %v1555
        %v1718 = vpack.c.b16 %v1565, %v1556
        %v1719 = vpack.c.b16 %v1566, %v1557
        %v1720 = vpack.c.b16 %v1576, %v1567
        %v1721 = vpack.c.b16 %v1577, %v1568
        %v1722 = vpack.c.b16 %v1578, %v1569
        %v1723 = vpack.c.b16 %v1579, %v1570
        %v1724 = vpack.c.b16 %v1580, %v1571
        %v1725 = vpack.c.b16 %v1581, %v1572
        %v1726 = vpack.c.b16 %v1582, %v1573
        %v1727 = vpack.c.b16 %v1583, %v1574
        %v1728 = vpack.c.b16 %v1584, %v1575
        %1873 = vmatpush.bf16.msra.mxu0 %v1648
        %1874 = vmatpush.bf16.msra.mxu0 %v1639
        %1875 = vmatpush.bf16.msra.mxu0 %v1630
        %1876 = vmatpush.bf16.msra.mxu0 %v1621
        %1877 = vmatpush.bf16.msra.mxu0 %v1612
        %1878 = vmatpush.bf16.msra.mxu0 %v1603
        %1879 = vmatpush.bf16.msra.mxu0 %v1594
        %1880 = vmatpush.bf16.msra.mxu0 %v1585
        %1881 = vmatmul.bf16.gmra.mxu0 %v973
        %v1882 = vpop.f32.mrf.mxu0
        %v1883 = vadd.f32 0.0, %v1882
        %v1884 = vpop.f32.mrf.mxu0
        %v1885 = vadd.f32 0.0, %v1884
        %1886 = vmatmul.bf16.gmra.mxu0 %v975
        %v1887 = vpop.f32.mrf.mxu0
        %v1888 = vadd.f32 0.0, %v1887
        %v1889 = vpop.f32.mrf.mxu0
        %v1890 = vadd.f32 0.0, %v1889
        %1891 = vdwg.mxu0
        %1892 = vmatpush.bf16.msra.mxu0 %v1720
        %1893 = vmatpush.bf16.msra.mxu0 %v1711
        %1894 = vmatpush.bf16.msra.mxu0 %v1702
        %1895 = vmatpush.bf16.msra.mxu0 %v1693
        %1896 = vmatpush.bf16.msra.mxu0 %v1684
        %1897 = vmatpush.bf16.msra.mxu0 %v1675
        %1898 = vmatpush.bf16.msra.mxu0 %v1666
        %1899 = vmatpush.bf16.msra.mxu0 %v1657
        %1900 = vmatmul.bf16.gmra.mxu0 %v974
        %v1901 = vpop.f32.mrf.mxu0
        %v1902 = vadd.f32 %v1883, %v1901
        %v1903 = vpop.f32.mrf.mxu0
        %v1904 = vadd.f32 %v1885, %v1903
        %1905 = vmatmul.bf16.gmra.mxu0 %v976
        %v1906 = vpop.f32.mrf.mxu0
        %v1907 = vadd.f32 %v1888, %v1906
        %v1908 = vpop.f32.mrf.mxu0
        %v1909 = vadd.f32 %v1890, %v1908
        %1910 = vdwg.mxu0
        %1911 = vmatpush.bf16.msra.mxu0 %v1649
        %1912 = vmatpush.bf16.msra.mxu0 %v1640
        %1913 = vmatpush.bf16.msra.mxu0 %v1631
        %1914 = vmatpush.bf16.msra.mxu0 %v1622
        %1915 = vmatpush.bf16.msra.mxu0 %v1613
        %1916 = vmatpush.bf16.msra.mxu0 %v1604
        %1917 = vmatpush.bf16.msra.mxu0 %v1595
        %1918 = vmatpush.bf16.msra.mxu0 %v1586
        %1919 = vmatmul.bf16.gmra.mxu0 %v973
        %v1920 = vpop.f32.mrf.mxu0
        %v1921 = vadd.f32 0.0, %v1920
        %v1922 = vpop.f32.mrf.mxu0
        %v1923 = vadd.f32 0.0, %v1922
        %1924 = vmatmul.bf16.gmra.mxu0 %v975
        %v1925 = vpop.f32.mrf.mxu0
        %v1926 = vadd.f32 0.0, %v1925
        %v1927 = vpop.f32.mrf.mxu0
        %v1928 = vadd.f32 0.0, %v1927
        %1929 = vdwg.mxu0
        %1930 = vmatpush.bf16.msra.mxu0 %v1721
        %1931 = vmatpush.bf16.msra.mxu0 %v1712
        %1932 = vmatpush.bf16.msra.mxu0 %v1703
        %1933 = vmatpush.bf16.msra.mxu0 %v1694
        %1934 = vmatpush.bf16.msra.mxu0 %v1685
        %1935 = vmatpush.bf16.msra.mxu0 %v1676
        %1936 = vmatpush.bf16.msra.mxu0 %v1667
        %1937 = vmatpush.bf16.msra.mxu0 %v1658
        %1938 = vmatmul.bf16.gmra.mxu0 %v974
        %v1939 = vpop.f32.mrf.mxu0
        %v1940 = vadd.f32 %v1921, %v1939
        %v1941 = vpop.f32.mrf.mxu0
        %v1942 = vadd.f32 %v1923, %v1941
        %1943 = vmatmul.bf16.gmra.mxu0 %v976
        %v1944 = vpop.f32.mrf.mxu0
        %v1945 = vadd.f32 %v1926, %v1944
        %v1946 = vpop.f32.mrf.mxu0
        %v1947 = vadd.f32 %v1928, %v1946
        %1948 = vdwg.mxu0
        %1949 = vmatpush.bf16.msra.mxu0 %v1650
        %1950 = vmatpush.bf16.msra.mxu0 %v1641
        %1951 = vmatpush.bf16.msra.mxu0 %v1632
        %1952 = vmatpush.bf16.msra.mxu0 %v1623
        %1953 = vmatpush.bf16.msra.mxu0 %v1614
        %1954 = vmatpush.bf16.msra.mxu0 %v1605
        %1955 = vmatpush.bf16.msra.mxu0 %v1596
        %1956 = vmatpush.bf16.msra.mxu0 %v1587
        %1957 = vmatmul.bf16.gmra.mxu0 %v973
        %v1958 = vpop.f32.mrf.mxu0
        %v1959 = vadd.f32 0.0, %v1958
        %v1960 = vpop.f32.mrf.mxu0
        %v1961 = vadd.f32 0.0, %v1960
        %1962 = vmatmul.bf16.gmra.mxu0 %v975
        %v1963 = vpop.f32.mrf.mxu0
        %v1964 = vadd.f32 0.0, %v1963
        %v1965 = vpop.f32.mrf.mxu0
        %v1966 = vadd.f32 0.0, %v1965
        %1967 = vdwg.mxu0
        %1968 = vmatpush.bf16.msra.mxu0 %v1722
        %1969 = vmatpush.bf16.msra.mxu0 %v1713
        %1970 = vmatpush.bf16.msra.mxu0 %v1704
        %1971 = vmatpush.bf16.msra.mxu0 %v1695
        %1972 = vmatpush.bf16.msra.mxu0 %v1686
        %1973 = vmatpush.bf16.msra.mxu0 %v1677
        %1974 = vmatpush.bf16.msra.mxu0 %v1668
        %1975 = vmatpush.bf16.msra.mxu0 %v1659
        %1976 = vmatmul.bf16.gmra.mxu0 %v974
        %v1977 = vpop.f32.mrf.mxu0
        %v1978 = vadd.f32 %v1959, %v1977
        %v1979 = vpop.f32.mrf.mxu0
        %v1980 = vadd.f32 %v1961, %v1979
        %1981 = vmatmul.bf16.gmra.mxu0 %v976
        %v1982 = vpop.f32.mrf.mxu0
        %v1983 = vadd.f32 %v1964, %v1982
        %v1984 = vpop.f32.mrf.mxu0
        %v1985 = vadd.f32 %v1966, %v1984
        %1986 = vdwg.mxu0
        %1987 = vmatpush.bf16.msra.mxu0 %v1651
        %1988 = vmatpush.bf16.msra.mxu0 %v1642
        %1989 = vmatpush.bf16.msra.mxu0 %v1633
        %1990 = vmatpush.bf16.msra.mxu0 %v1624
        %1991 = vmatpush.bf16.msra.mxu0 %v1615
        %1992 = vmatpush.bf16.msra.mxu0 %v1606
        %1993 = vmatpush.bf16.msra.mxu0 %v1597
        %1994 = vmatpush.bf16.msra.mxu0 %v1588
        %1995 = vmatmul.bf16.gmra.mxu0 %v973
        %v1996 = vpop.f32.mrf.mxu0
        %v1997 = vadd.f32 0.0, %v1996
        %v1998 = vpop.f32.mrf.mxu0
        %v1999 = vadd.f32 0.0, %v1998
        %2000 = vmatmul.bf16.gmra.mxu0 %v975
        %v2001 = vpop.f32.mrf.mxu0
        %v2002 = vadd.f32 0.0, %v2001
        %v2003 = vpop.f32.mrf.mxu0
        %v2004 = vadd.f32 0.0, %v2003
        %2005 = vdwg.mxu0
        %2006 = vmatpush.bf16.msra.mxu0 %v1723
        %2007 = vmatpush.bf16.msra.mxu0 %v1714
        %2008 = vmatpush.bf16.msra.mxu0 %v1705
        %2009 = vmatpush.bf16.msra.mxu0 %v1696
        %2010 = vmatpush.bf16.msra.mxu0 %v1687
        %2011 = vmatpush.bf16.msra.mxu0 %v1678
        %2012 = vmatpush.bf16.msra.mxu0 %v1669
        %2013 = vmatpush.bf16.msra.mxu0 %v1660
        %2014 = vmatmul.bf16.gmra.mxu0 %v974
        %v2015 = vpop.f32.mrf.mxu0
        %v2016 = vadd.f32 %v1997, %v2015
        %v2017 = vpop.f32.mrf.mxu0
        %v2018 = vadd.f32 %v1999, %v2017
        %2019 = vmatmul.bf16.gmra.mxu0 %v976
        %v2020 = vpop.f32.mrf.mxu0
        %v2021 = vadd.f32 %v2002, %v2020
        %v2022 = vpop.f32.mrf.mxu0
        %v2023 = vadd.f32 %v2004, %v2022
        %2024 = vdwg.mxu0
        %2025 = vmatpush.bf16.msra.mxu0 %v1652
        %2026 = vmatpush.bf16.msra.mxu0 %v1643
        %2027 = vmatpush.bf16.msra.mxu0 %v1634
        %2028 = vmatpush.bf16.msra.mxu0 %v1625
        %2029 = vmatpush.bf16.msra.mxu0 %v1616
        %2030 = vmatpush.bf16.msra.mxu0 %v1607
        %2031 = vmatpush.bf16.msra.mxu0 %v1598
        %2032 = vmatpush.bf16.msra.mxu0 %v1589
        %2033 = vmatmul.bf16.gmra.mxu0 %v973
        %v2034 = vpop.f32.mrf.mxu0
        %v2035 = vadd.f32 0.0, %v2034
        %v2036 = vpop.f32.mrf.mxu0
        %v2037 = vadd.f32 0.0, %v2036
        %2038 = vmatmul.bf16.gmra.mxu0 %v975
        %v2039 = vpop.f32.mrf.mxu0
        %v2040 = vadd.f32 0.0, %v2039
        %v2041 = vpop.f32.mrf.mxu0
        %v2042 = vadd.f32 0.0, %v2041
        %2043 = vdwg.mxu0
        %2044 = vmatpush.bf16.msra.mxu0 %v1724
        %2045 = vmatpush.bf16.msra.mxu0 %v1715
        %2046 = vmatpush.bf16.msra.mxu0 %v1706
        %2047 = vmatpush.bf16.msra.mxu0 %v1697
        %2048 = vmatpush.bf16.msra.mxu0 %v1688
        %2049 = vmatpush.bf16.msra.mxu0 %v1679
        %2050 = vmatpush.bf16.msra.mxu0 %v1670
        %2051 = vmatpush.bf16.msra.mxu0 %v1661
        %2052 = vmatmul.bf16.gmra.mxu0 %v974
        %v2053 = vpop.f32.mrf.mxu0
        %v2054 = vadd.f32 %v2035, %v2053
        %v2055 = vpop.f32.mrf.mxu0
        %v2056 = vadd.f32 %v2037, %v2055
        %2057 = vmatmul.bf16.gmra.mxu0 %v976
        %v2058 = vpop.f32.mrf.mxu0
        %v2059 = vadd.f32 %v2040, %v2058
        %v2060 = vpop.f32.mrf.mxu0
        %v2061 = vadd.f32 %v2042, %v2060
        %2062 = vdwg.mxu0
        %2063 = vmatpush.bf16.msra.mxu0 %v1653
        %2064 = vmatpush.bf16.msra.mxu0 %v1644
        %2065 = vmatpush.bf16.msra.mxu0 %v1635
        %2066 = vmatpush.bf16.msra.mxu0 %v1626
        %2067 = vmatpush.bf16.msra.mxu0 %v1617
        %2068 = vmatpush.bf16.msra.mxu0 %v1608
        %2069 = vmatpush.bf16.msra.mxu0 %v1599
        %2070 = vmatpush.bf16.msra.mxu0 %v1590
        %2071 = vmatmul.bf16.gmra.mxu0 %v973
        %v2072 = vpop.f32.mrf.mxu0
        %v2073 = vadd.f32 0.0, %v2072
        %v2074 = vpop.f32.mrf.mxu0
        %v2075 = vadd.f32 0.0, %v2074
        %2076 = vmatmul.bf16.gmra.mxu0 %v975
        %v2077 = vpop.f32.mrf.mxu0
        %v2078 = vadd.f32 0.0, %v2077
        %v2079 = vpop.f32.mrf.mxu0
        %v2080 = vadd.f32 0.0, %v2079
        %2081 = vdwg.mxu0
        %2082 = vmatpush.bf16.msra.mxu0 %v1725
        %2083 = vmatpush.bf16.msra.mxu0 %v1716
        %2084 = vmatpush.bf16.msra.mxu0 %v1707
        %2085 = vmatpush.bf16.msra.mxu0 %v1698
        %2086 = vmatpush.bf16.msra.mxu0 %v1689
        %2087 = vmatpush.bf16.msra.mxu0 %v1680
        %2088 = vmatpush.bf16.msra.mxu0 %v1671
        %2089 = vmatpush.bf16.msra.mxu0 %v1662
        %2090 = vmatmul.bf16.gmra.mxu0 %v974
        %v2091 = vpop.f32.mrf.mxu0
        %v2092 = vadd.f32 %v2073, %v2091
        %v2093 = vpop.f32.mrf.mxu0
        %v2094 = vadd.f32 %v2075, %v2093
        %2095 = vmatmul.bf16.gmra.mxu0 %v976
        %v2096 = vpop.f32.mrf.mxu0
        %v2097 = vadd.f32 %v2078, %v2096
        %v2098 = vpop.f32.mrf.mxu0
        %v2099 = vadd.f32 %v2080, %v2098
        %2100 = vdwg.mxu0
        %2101 = vmatpush.bf16.msra.mxu0 %v1654
        %2102 = vmatpush.bf16.msra.mxu0 %v1645
        %2103 = vmatpush.bf16.msra.mxu0 %v1636
        %2104 = vmatpush.bf16.msra.mxu0 %v1627
        %2105 = vmatpush.bf16.msra.mxu0 %v1618
        %2106 = vmatpush.bf16.msra.mxu0 %v1609
        %2107 = vmatpush.bf16.msra.mxu0 %v1600
        %2108 = vmatpush.bf16.msra.mxu0 %v1591
        %2109 = vmatmul.bf16.gmra.mxu0 %v973
        %v2110 = vpop.f32.mrf.mxu0
        %v2111 = vadd.f32 0.0, %v2110
        %v2112 = vpop.f32.mrf.mxu0
        %v2113 = vadd.f32 0.0, %v2112
        %2114 = vmatmul.bf16.gmra.mxu0 %v975
        %v2115 = vpop.f32.mrf.mxu0
        %v2116 = vadd.f32 0.0, %v2115
        %v2117 = vpop.f32.mrf.mxu0
        %v2118 = vadd.f32 0.0, %v2117
        %2119 = vdwg.mxu0
        %2120 = vmatpush.bf16.msra.mxu0 %v1726
        %2121 = vmatpush.bf16.msra.mxu0 %v1717
        %2122 = vmatpush.bf16.msra.mxu0 %v1708
        %2123 = vmatpush.bf16.msra.mxu0 %v1699
        %2124 = vmatpush.bf16.msra.mxu0 %v1690
        %2125 = vmatpush.bf16.msra.mxu0 %v1681
        %2126 = vmatpush.bf16.msra.mxu0 %v1672
        %2127 = vmatpush.bf16.msra.mxu0 %v1663
        %2128 = vmatmul.bf16.gmra.mxu0 %v974
        %v2129 = vpop.f32.mrf.mxu0
        %v2130 = vadd.f32 %v2111, %v2129
        %v2131 = vpop.f32.mrf.mxu0
        %v2132 = vadd.f32 %v2113, %v2131
        %2133 = vmatmul.bf16.gmra.mxu0 %v976
        %v2134 = vpop.f32.mrf.mxu0
        %v2135 = vadd.f32 %v2116, %v2134
        %v2136 = vpop.f32.mrf.mxu0
        %v2137 = vadd.f32 %v2118, %v2136
        %2138 = vdwg.mxu0
        %2139 = vmatpush.bf16.msra.mxu0 %v1655
        %2140 = vmatpush.bf16.msra.mxu0 %v1646
        %2141 = vmatpush.bf16.msra.mxu0 %v1637
        %2142 = vmatpush.bf16.msra.mxu0 %v1628
        %2143 = vmatpush.bf16.msra.mxu0 %v1619
        %2144 = vmatpush.bf16.msra.mxu0 %v1610
        %2145 = vmatpush.bf16.msra.mxu0 %v1601
        %2146 = vmatpush.bf16.msra.mxu0 %v1592
        %2147 = vmatmul.bf16.gmra.mxu0 %v973
        %v2148 = vpop.f32.mrf.mxu0
        %v2149 = vadd.f32 0.0, %v2148
        %v2150 = vpop.f32.mrf.mxu0
        %v2151 = vadd.f32 0.0, %v2150
        %2152 = vmatmul.bf16.gmra.mxu0 %v975
        %v2153 = vpop.f32.mrf.mxu0
        %v2154 = vadd.f32 0.0, %v2153
        %v2155 = vpop.f32.mrf.mxu0
        %v2156 = vadd.f32 0.0, %v2155
        %2157 = vdwg.mxu0
        %2158 = vmatpush.bf16.msra.mxu0 %v1727
        %2159 = vmatpush.bf16.msra.mxu0 %v1718
        %2160 = vmatpush.bf16.msra.mxu0 %v1709
        %2161 = vmatpush.bf16.msra.mxu0 %v1700
        %2162 = vmatpush.bf16.msra.mxu0 %v1691
        %2163 = vmatpush.bf16.msra.mxu0 %v1682
        %2164 = vmatpush.bf16.msra.mxu0 %v1673
        %2165 = vmatpush.bf16.msra.mxu0 %v1664
        %2166 = vmatmul.bf16.gmra.mxu0 %v974
        %v2167 = vpop.f32.mrf.mxu0
        %v2168 = vadd.f32 %v2149, %v2167
        %v2169 = vpop.f32.mrf.mxu0
        %v2170 = vadd.f32 %v2151, %v2169
        %2171 = vmatmul.bf16.gmra.mxu0 %v976
        %v2172 = vpop.f32.mrf.mxu0
        %v2173 = vadd.f32 %v2154, %v2172
        %v2174 = vpop.f32.mrf.mxu0
        %v2175 = vadd.f32 %v2156, %v2174
        %2176 = vdwg.mxu0
        %2177 = vmatpush.bf16.msra.mxu0 %v1656
        %2178 = vmatpush.bf16.msra.mxu0 %v1647
        %2179 = vmatpush.bf16.msra.mxu0 %v1638
        %2180 = vmatpush.bf16.msra.mxu0 %v1629
        %2181 = vmatpush.bf16.msra.mxu0 %v1620
        %2182 = vmatpush.bf16.msra.mxu0 %v1611
        %2183 = vmatpush.bf16.msra.mxu0 %v1602
        %2184 = vmatpush.bf16.msra.mxu0 %v1593
        %2185 = vmatmul.bf16.gmra.mxu0 %v973
        %v2186 = vpop.f32.mrf.mxu0
        %v2187 = vadd.f32 0.0, %v2186
        %v2188 = vpop.f32.mrf.mxu0
        %v2189 = vadd.f32 0.0, %v2188
        %2190 = vmatmul.bf16.gmra.mxu0 %v975
        %v2191 = vpop.f32.mrf.mxu0
        %v2192 = vadd.f32 0.0, %v2191
        %v2193 = vpop.f32.mrf.mxu0
        %v2194 = vadd.f32 0.0, %v2193
        %2195 = vdwg.mxu0
        %2196 = vmatpush.bf16.msra.mxu0 %v1728
        %2197 = vmatpush.bf16.msra.mxu0 %v1719
        %2198 = vmatpush.bf16.msra.mxu0 %v1710
        %2199 = vmatpush.bf16.msra.mxu0 %v1701
        %2200 = vmatpush.bf16.msra.mxu0 %v1692
        %2201 = vmatpush.bf16.msra.mxu0 %v1683
        %2202 = vmatpush.bf16.msra.mxu0 %v1674
        %2203 = vmatpush.bf16.msra.mxu0 %v1665
        %2204 = vmatmul.bf16.gmra.mxu0 %v974
        %v2205 = vpop.f32.mrf.mxu0
        %v2206 = vadd.f32 %v2187, %v2205
        %v2207 = vpop.f32.mrf.mxu0
        %v2208 = vadd.f32 %v2189, %v2207
        %2209 = vmatmul.bf16.gmra.mxu0 %v976
        %v2210 = vpop.f32.mrf.mxu0
        %v2211 = vadd.f32 %v2192, %v2210
        %v2212 = vpop.f32.mrf.mxu0
        %v2213 = vadd.f32 %v2194, %v2212
        %2214 = vdwg.mxu0
        %v2215 = vpack.c.bf16 %v1940, %v1902
        %v2216 = vpack.c.bf16 %v2016, %v1978
        %v2217 = vpack.c.bf16 %v2092, %v2054
        %v2218 = vpack.c.bf16 %v2168, %v2130
        %v2219 = vpack.c.bf16 %v1942, %v1904
        %v2220 = vpack.c.bf16 %v2018, %v1980
        %v2221 = vpack.c.bf16 %v2094, %v2056
        %v2222 = vpack.c.bf16 %v2170, %v2132
        %v2223 = vpack.c.bf16 %v1945, %v1907
        %v2224 = vpack.c.bf16 %v2021, %v1983
        %v2225 = vpack.c.bf16 %v2097, %v2059
        %v2226 = vpack.c.bf16 %v2173, %v2135
        %v2227 = vpack.c.bf16 %v1947, %v1909
        %v2228 = vpack.c.bf16 %v2023, %v1985
        %v2229 = vpack.c.bf16 %v2099, %v2061
        %v2230 = vpack.c.bf16 %v2175, %v2137
        %v2231 = vld [vmem:[%s5] sm:$0xf]
        %2233 = vst [vmem:[#allocation1] ss:$4 sm:$0xff] %v2231
        %v2234 = vld.sshfl [vmem:[#allocation1] sm:$0xff pattern:$0x73625140]
        %v2235 = vld.sshfl [vmem:[#allocation1 + $0x8] sm:$0xff pattern:$0x73625140]
        %2238 = vmatpush.bf16.xpose.msra.mxu0 0
        %2239 = vmatpush.bf16.xpose.msra.mxu0 0
        %2240 = vmatpush.bf16.xpose.msra.mxu0 0
        %2241 = vmatpush.bf16.xpose.msra.mxu0 0
        %2242 = vmatpush.bf16.xpose.msra.mxu0 0
        %2243 = vmatpush.bf16.xpose.msra.mxu0 0
        %2244 = vmatpush.bf16.xpose.msra.mxu0 %v975
        %2245 = vmatpush.bf16.xpose.msra.mxu0 %v973
        %2246 = vmatmul.bf16.gmra.mxu0 %v2234
        %v2247 = vpop.f32.mrf.mxu0
        %v2248 = vadd.f32 0.0, %v2247
        %v2249 = vpop.f32.mrf.mxu0
        %2250 = vdwg.mxu0
        %2251 = vmatpush.bf16.xpose.msra.mxu0 0
        %2252 = vmatpush.bf16.xpose.msra.mxu0 0
        %2253 = vmatpush.bf16.xpose.msra.mxu0 0
        %2254 = vmatpush.bf16.xpose.msra.mxu0 0
        %2255 = vmatpush.bf16.xpose.msra.mxu0 0
        %2256 = vmatpush.bf16.xpose.msra.mxu0 0
        %2257 = vmatpush.bf16.xpose.msra.mxu0 %v976
        %2258 = vmatpush.bf16.xpose.msra.mxu0 %v974
        %2259 = vmatmul.bf16.gmra.mxu0 %v2235
        %v2260 = vpop.f32.mrf.mxu0
        %v2261 = vadd.f32 %v2248, %v2260
        %v2262 = vpop.f32.mrf.mxu0
        %2263 = vdwg.mxu0
        %v2264 = vunpack.c.l.bf16 %v611
        %v2265 = vunpack.c.l.bf16 %v612
        %v2266 = vunpack.c.l.bf16 %v613
        %v2267 = vunpack.c.l.bf16 %v614
        %vm2268 = vcmp.gt.f32.partialorder %v2264, 0.5
        %vm2269 = vcmp.gt.f32.partialorder %v2265, 0.5
        %vm2270 = vcmp.gt.f32.partialorder %v2266, 0.5
        %vm2271 = vcmp.gt.f32.partialorder %v2267, 0.5
        %v2272 = vsel %vm2268, 0.0, -1e+09
        %v2273 = vsel %vm2269, 0.0, -1e+09
        %v2274 = vsel %vm2270, 0.0, -1e+09
        %v2275 = vsel %vm2271, 0.0, -1e+09
        %2277 = vset.pattern.permute.xlu0 0
        %2278 = vperm.xlu0 %2277, %v2206
        %v2279 = vpop.permute.xlu0 %2278
        %2282 = vset.pattern.permute.xlu0 0
        %2283 = vperm.xlu0 %2282, %v2208
        %v2284 = vpop.permute.xlu0 %2283
        %2287 = vset.pattern.permute.xlu0 0
        %2288 = vperm.xlu0 %2287, %v2211
        %v2289 = vpop.permute.xlu0 %2288
        %2292 = vset.pattern.permute.xlu0 0
        %2293 = vperm.xlu0 %2292, %v2213
        %v2294 = vpop.permute.xlu0 %2293
        %v2296 = vperm.slane %v2261, 0
        %v2297 = vadd.f32 %v2279, %v2296
        %v2298 = vadd.f32 %v2284, %v2296
        %v2299 = vadd.f32 %v2289, %v2296
        %v2300 = vadd.f32 %v2294, %v2296
        %vm2301 = vcmp.gt.f32.partialorder %v2297, 0.0
        %vm2302 = vcmp.gt.f32.partialorder %v2298, 0.0
        %vm2303 = vcmp.gt.f32.partialorder %v2299, 0.0
        %vm2304 = vcmp.gt.f32.partialorder %v2300, 0.0
        %v2305 = vmul.f32 %v2297, 0.2
        %v2306 = vmul.f32 %v2298, 0.2
        %v2307 = vmul.f32 %v2299, 0.2
        %v2308 = vmul.f32 %v2300, 0.2
        %v2309 = vsel %vm2301, %v2297, %v2305
        %v2310 = vsel %vm2302, %v2298, %v2306
        %v2311 = vsel %vm2303, %v2299, %v2307
        %v2312 = vsel %vm2304, %v2300, %v2308
        %v2313 = vadd.f32 %v2309, %v2272
        %v2314 = vadd.f32 %v2310, %v2273
        %v2315 = vadd.f32 %v2311, %v2274
        %v2316 = vadd.f32 %v2312, %v2275
        %v2317 = vsel %vm646, %v2313, -inf
        %2318 = vmax.xlane.f32.xlu0 %v2317
        %v2319 = vpop.xlane.xlu0 %2318
        %v2320 = vsel %vm646, %v2314, -inf
        %2321 = vmax.xlane.f32.xlu0 %v2320
        %v2322 = vpop.xlane.xlu0 %2321
        %v2323 = vsel %vm646, %v2315, -inf
        %2324 = vmax.xlane.f32.xlu0 %v2323
        %v2325 = vpop.xlane.xlu0 %2324
        %v2326 = vsel %vm646, %v2316, -inf
        %2327 = vmax.xlane.f32.xlu0 %v2326
        %v2328 = vpop.xlane.xlu0 %2327
        %v2329 = vsub.f32 %v2313, %v2319
        %v2330 = vsub.f32 %v2314, %v2322
        %v2331 = vsub.f32 %v2315, %v2325
        %v2332 = vsub.f32 %v2316, %v2328
        %v2333 = vmul.f32 %v2329, 1.442695
        %v2334 = vpow.pop %v2333
        %v2335 = vmul.f32 %v2330, 1.442695
        %v2336 = vpow.pop %v2335
        %v2337 = vmul.f32 %v2331, 1.442695
        %v2338 = vpow.pop %v2337
        %v2339 = vmul.f32 %v2332, 1.442695
        %v2340 = vpow.pop %v2339
        %v2341 = vsel %vm646, %v2334, 0.0
        %2342 = vadd.xlane.f32.xlu0 %v2341
        %v2343 = vpop.xlane.xlu0 %2342
        %v2344 = vsel %vm646, %v2336, 0.0
        %2345 = vadd.xlane.f32.xlu0 %v2344
        %v2346 = vpop.xlane.xlu0 %2345
        %v2347 = vsel %vm646, %v2338, 0.0
        %2348 = vadd.xlane.f32.xlu0 %v2347
        %v2349 = vpop.xlane.xlu0 %2348
        %v2350 = vsel %vm646, %v2340, 0.0
        %2351 = vadd.xlane.f32.xlu0 %v2350
        %v2352 = vpop.xlane.xlu0 %2351
        %v2353 = vrcp.pop %v2343
        %v2354 = vrcp.pop %v2346
        %v2355 = vrcp.pop %v2349
        %v2356 = vrcp.pop %v2352
        %v2357 = vmul.f32 %v2334, %v2353
        %v2358 = vmul.f32 %v2336, %v2354
        %v2359 = vmul.f32 %v2338, %v2355
        %v2360 = vmul.f32 %v2340, %v2356
        %v2361 = vpack.c.bf16 %v2357, %v2357
        %v2362 = vpack.c.bf16 %v2358, %v2358
        %v2363 = vpack.c.bf16 %v2359, %v2359
        %v2364 = vpack.c.bf16 %v2360, %v2360
        %2365 = vst [vmem:[#allocation2] sm:$0xff] %v2215
        %2366 = vst [vmem:[#allocation2 + $0x8] sm:$0xff] %v2219
        %2367 = vst [vmem:[#allocation2 + $0x10] sm:$0xff] %v2223
        %2368 = vst [vmem:[#allocation2 + $0x18] sm:$0xff] %v2227
        %2369 = vset.pattern.permute.xlu0 1
        %2370 = vperm.xlu0 %2369, %v2206
        %v2371 = vpop.permute.xlu0 %2370
        %2373 = vset.pattern.permute.xlu0 1
        %2374 = vperm.xlu0 %2373, %v2208
        %v2375 = vpop.permute.xlu0 %2374
        %2377 = vset.pattern.permute.xlu0 1
        %2378 = vperm.xlu0 %2377, %v2211
        %v2379 = vpop.permute.xlu0 %2378
        %2381 = vset.pattern.permute.xlu0 1
        %2382 = vperm.xlu0 %2381, %v2213
        %v2383 = vpop.permute.xlu0 %2382
        %v2385 = vperm.slane %v2261, 1
        %v2386 = vadd.f32 %v2371, %v2385
        %v2387 = vadd.f32 %v2375, %v2385
        %v2388 = vadd.f32 %v2379, %v2385
        %v2389 = vadd.f32 %v2383, %v2385
        %vm2390 = vcmp.gt.f32.partialorder %v2386, 0.0
        %vm2391 = vcmp.gt.f32.partialorder %v2387, 0.0
        %vm2392 = vcmp.gt.f32.partialorder %v2388, 0.0
        %vm2393 = vcmp.gt.f32.partialorder %v2389, 0.0
        %v2394 = vmul.f32 %v2386, 0.2
        %v2395 = vmul.f32 %v2387, 0.2
        %v2396 = vmul.f32 %v2388, 0.2
        %v2397 = vmul.f32 %v2389, 0.2
        %v2398 = vsel %vm2390, %v2386, %v2394
        %v2399 = vsel %vm2391, %v2387, %v2395
        %v2400 = vsel %vm2392, %v2388, %v2396
        %v2401 = vsel %vm2393, %v2389, %v2397
        %v2402 = vadd.f32 %v2398, %v2272
        %v2403 = vadd.f32 %v2399, %v2273
        %v2404 = vadd.f32 %v2400, %v2274
        %v2405 = vadd.f32 %v2401, %v2275
        %v2406 = vsel %vm646, %v2402, -inf
        %2407 = vmax.xlane.f32.xlu0 %v2406
        %v2408 = vpop.xlane.xlu0 %2407
        %v2409 = vsel %vm646, %v2403, -inf
        %2410 = vmax.xlane.f32.xlu0 %v2409
        %v2411 = vpop.xlane.xlu0 %2410
        %v2412 = vsel %vm646, %v2404, -inf
        %2413 = vmax.xlane.f32.xlu0 %v2412
        %v2414 = vpop.xlane.xlu0 %2413
        %v2415 = vsel %vm646, %v2405, -inf
        %2416 = vmax.xlane.f32.xlu0 %v2415
        %v2417 = vpop.xlane.xlu0 %2416
        %v2418 = vsub.f32 %v2402, %v2408
        %v2419 = vsub.f32 %v2403, %v2411
        %v2420 = vsub.f32 %v2404, %v2414
        %v2421 = vsub.f32 %v2405, %v2417
        %v2422 = vmul.f32 %v2418, 1.442695
        %v2423 = vpow.pop %v2422
        %v2424 = vmul.f32 %v2419, 1.442695
        %v2425 = vpow.pop %v2424
        %v2426 = vmul.f32 %v2420, 1.442695
        %v2427 = vpow.pop %v2426
        %v2428 = vmul.f32 %v2421, 1.442695
        %v2429 = vpow.pop %v2428
        %v2430 = vsel %vm646, %v2423, 0.0
        %2431 = vadd.xlane.f32.xlu0 %v2430
        %v2432 = vpop.xlane.xlu0 %2431
        %v2433 = vsel %vm646, %v2425, 0.0
        %2434 = vadd.xlane.f32.xlu0 %v2433
        %v2435 = vpop.xlane.xlu0 %2434
        %v2436 = vsel %vm646, %v2427, 0.0
        %2437 = vadd.xlane.f32.xlu0 %v2436
        %v2438 = vpop.xlane.xlu0 %2437
        %v2439 = vsel %vm646, %v2429, 0.0
        %2440 = vadd.xlane.f32.xlu0 %v2439
        %v2441 = vpop.xlane.xlu0 %2440
        %v2442 = vrcp.pop %v2432
        %v2443 = vrcp.pop %v2435
        %v2444 = vrcp.pop %v2438
        %v2445 = vrcp.pop %v2441
        %v2446 = vmul.f32 %v2423, %v2442
        %v2447 = vmul.f32 %v2425, %v2443
        %v2448 = vmul.f32 %v2427, %v2444
        %v2449 = vmul.f32 %v2429, %v2445
        %v2450 = vpack.c.bf16 %v2446, %v2446
        %v2451 = vpack.c.bf16 %v2447, %v2447
        %v2452 = vpack.c.bf16 %v2448, %v2448
        %v2453 = vpack.c.bf16 %v2449, %v2449
        %2454 = vst [vmem:[#allocation2 + $0x20] sm:$0xff] %v2216
        %2455 = vst [vmem:[#allocation2 + $0x28] sm:$0xff] %v2220
        %2456 = vst [vmem:[#allocation2 + $0x30] sm:$0xff] %v2224
        %2457 = vst [vmem:[#allocation2 + $0x38] sm:$0xff] %v2228
        %2458 = vset.pattern.permute.xlu0 2
        %2459 = vperm.xlu0 %2458, %v2206
        %v2460 = vpop.permute.xlu0 %2459
        %2462 = vset.pattern.permute.xlu0 2
        %2463 = vperm.xlu0 %2462, %v2208
        %v2464 = vpop.permute.xlu0 %2463
        %2466 = vset.pattern.permute.xlu0 2
        %2467 = vperm.xlu0 %2466, %v2211
        %v2468 = vpop.permute.xlu0 %2467
        %2470 = vset.pattern.permute.xlu0 2
        %2471 = vperm.xlu0 %2470, %v2213
        %v2472 = vpop.permute.xlu0 %2471
        %v2474 = vperm.slane %v2261, 2
        %v2475 = vadd.f32 %v2460, %v2474
        %v2476 = vadd.f32 %v2464, %v2474
        %v2477 = vadd.f32 %v2468, %v2474
        %v2478 = vadd.f32 %v2472, %v2474
        %vm2479 = vcmp.gt.f32.partialorder %v2475, 0.0
        %vm2480 = vcmp.gt.f32.partialorder %v2476, 0.0
        %vm2481 = vcmp.gt.f32.partialorder %v2477, 0.0
        %vm2482 = vcmp.gt.f32.partialorder %v2478, 0.0
        %v2483 = vmul.f32 %v2475, 0.2
        %v2484 = vmul.f32 %v2476, 0.2
        %v2485 = vmul.f32 %v2477, 0.2
        %v2486 = vmul.f32 %v2478, 0.2
        %v2487 = vsel %vm2479, %v2475, %v2483
        %v2488 = vsel %vm2480, %v2476, %v2484
        %v2489 = vsel %vm2481, %v2477, %v2485
        %v2490 = vsel %vm2482, %v2478, %v2486
        %v2491 = vadd.f32 %v2487, %v2272
        %v2492 = vadd.f32 %v2488, %v2273
        %v2493 = vadd.f32 %v2489, %v2274
        %v2494 = vadd.f32 %v2490, %v2275
        %v2495 = vsel %vm646, %v2491, -inf
        %2496 = vmax.xlane.f32.xlu0 %v2495
        %v2497 = vpop.xlane.xlu0 %2496
        %v2498 = vsel %vm646, %v2492, -inf
        %2499 = vmax.xlane.f32.xlu0 %v2498
        %v2500 = vpop.xlane.xlu0 %2499
        %v2501 = vsel %vm646, %v2493, -inf
        %2502 = vmax.xlane.f32.xlu0 %v2501
        %v2503 = vpop.xlane.xlu0 %2502
        %v2504 = vsel %vm646, %v2494, -inf
        %2505 = vmax.xlane.f32.xlu0 %v2504
        %v2506 = vpop.xlane.xlu0 %2505
        %v2507 = vsub.f32 %v2491, %v2497
        %v2508 = vsub.f32 %v2492, %v2500
        %v2509 = vsub.f32 %v2493, %v2503
        %v2510 = vsub.f32 %v2494, %v2506
        %v2511 = vmul.f32 %v2507, 1.442695
        %v2512 = vpow.pop %v2511
        %v2513 = vmul.f32 %v2508, 1.442695
        %v2514 = vpow.pop %v2513
        %v2515 = vmul.f32 %v2509, 1.442695
        %v2516 = vpow.pop %v2515
        %v2517 = vmul.f32 %v2510, 1.442695
        %v2518 = vpow.pop %v2517
        %v2519 = vsel %vm646, %v2512, 0.0
        %2520 = vadd.xlane.f32.xlu0 %v2519
        %v2521 = vpop.xlane.xlu0 %2520
        %v2522 = vsel %vm646, %v2514, 0.0
        %2523 = vadd.xlane.f32.xlu0 %v2522
        %v2524 = vpop.xlane.xlu0 %2523
        %v2525 = vsel %vm646, %v2516, 0.0
        %2526 = vadd.xlane.f32.xlu0 %v2525
        %v2527 = vpop.xlane.xlu0 %2526
        %v2528 = vsel %vm646, %v2518, 0.0
        %2529 = vadd.xlane.f32.xlu0 %v2528
        %v2530 = vpop.xlane.xlu0 %2529
        %v2531 = vrcp.pop %v2521
        %v2532 = vrcp.pop %v2524
        %v2533 = vrcp.pop %v2527
        %v2534 = vrcp.pop %v2530
        %v2535 = vmul.f32 %v2512, %v2531
        %v2536 = vmul.f32 %v2514, %v2532
        %v2537 = vmul.f32 %v2516, %v2533
        %v2538 = vmul.f32 %v2518, %v2534
        %v2539 = vpack.c.bf16 %v2535, %v2535
        %v2540 = vpack.c.bf16 %v2536, %v2536
        %v2541 = vpack.c.bf16 %v2537, %v2537
        %v2542 = vpack.c.bf16 %v2538, %v2538
        %2543 = vst [vmem:[#allocation2 + $0x40] sm:$0xff] %v2217
        %2544 = vst [vmem:[#allocation2 + $0x48] sm:$0xff] %v2221
        %2545 = vst [vmem:[#allocation2 + $0x50] sm:$0xff] %v2225
        %2546 = vst [vmem:[#allocation2 + $0x58] sm:$0xff] %v2229
        %2547 = vset.pattern.permute.xlu0 3
        %2548 = vperm.xlu0 %2547, %v2206
        %v2549 = vpop.permute.xlu0 %2548
        %2551 = vset.pattern.permute.xlu0 3
        %2552 = vperm.xlu0 %2551, %v2208
        %v2553 = vpop.permute.xlu0 %2552
        %2555 = vset.pattern.permute.xlu0 3
        %2556 = vperm.xlu0 %2555, %v2211
        %v2557 = vpop.permute.xlu0 %2556
        %2559 = vset.pattern.permute.xlu0 3
        %2560 = vperm.xlu0 %2559, %v2213
        %v2561 = vpop.permute.xlu0 %2560
        %v2563 = vperm.slane %v2261, 3
        %v2564 = vadd.f32 %v2549, %v2563
        %v2565 = vadd.f32 %v2553, %v2563
        %v2566 = vadd.f32 %v2557, %v2563
        %v2567 = vadd.f32 %v2561, %v2563
        %vm2568 = vcmp.gt.f32.partialorder %v2564, 0.0
        %vm2569 = vcmp.gt.f32.partialorder %v2565, 0.0
        %vm2570 = vcmp.gt.f32.partialorder %v2566, 0.0
        %vm2571 = vcmp.gt.f32.partialorder %v2567, 0.0
        %v2572 = vmul.f32 %v2564, 0.2
        %v2573 = vmul.f32 %v2565, 0.2
        %v2574 = vmul.f32 %v2566, 0.2
        %v2575 = vmul.f32 %v2567, 0.2
        %v2576 = vsel %vm2568, %v2564, %v2572
        %v2577 = vsel %vm2569, %v2565, %v2573
        %v2578 = vsel %vm2570, %v2566, %v2574
        %v2579 = vsel %vm2571, %v2567, %v2575
        %v2580 = vadd.f32 %v2576, %v2272
        %v2581 = vadd.f32 %v2577, %v2273
        %v2582 = vadd.f32 %v2578, %v2274
        %v2583 = vadd.f32 %v2579, %v2275
        %v2584 = vsel %vm646, %v2580, -inf
        %2585 = vmax.xlane.f32.xlu0 %v2584
        %v2586 = vpop.xlane.xlu0 %2585
        %v2587 = vsel %vm646, %v2581, -inf
        %2588 = vmax.xlane.f32.xlu0 %v2587
        %v2589 = vpop.xlane.xlu0 %2588
        %v2590 = vsel %vm646, %v2582, -inf
        %2591 = vmax.xlane.f32.xlu0 %v2590
        %v2592 = vpop.xlane.xlu0 %2591
        %v2593 = vsel %vm646, %v2583, -inf
        %2594 = vmax.xlane.f32.xlu0 %v2593
        %v2595 = vpop.xlane.xlu0 %2594
        %v2596 = vsub.f32 %v2580, %v2586
        %v2597 = vsub.f32 %v2581, %v2589
        %v2598 = vsub.f32 %v2582, %v2592
        %v2599 = vsub.f32 %v2583, %v2595
        %v2600 = vmul.f32 %v2596, 1.442695
        %v2601 = vpow.pop %v2600
        %v2602 = vmul.f32 %v2597, 1.442695
        %v2603 = vpow.pop %v2602
        %v2604 = vmul.f32 %v2598, 1.442695
        %v2605 = vpow.pop %v2604
        %v2606 = vmul.f32 %v2599, 1.442695
        %v2607 = vpow.pop %v2606
        %v2608 = vsel %vm646, %v2601, 0.0
        %2609 = vadd.xlane.f32.xlu0 %v2608
        %v2610 = vpop.xlane.xlu0 %2609
        %v2611 = vsel %vm646, %v2603, 0.0
        %2612 = vadd.xlane.f32.xlu0 %v2611
        %v2613 = vpop.xlane.xlu0 %2612
        %v2614 = vsel %vm646, %v2605, 0.0
        %2615 = vadd.xlane.f32.xlu0 %v2614
        %v2616 = vpop.xlane.xlu0 %2615
        %v2617 = vsel %vm646, %v2607, 0.0
        %2618 = vadd.xlane.f32.xlu0 %v2617
        %v2619 = vpop.xlane.xlu0 %2618
        %v2620 = vrcp.pop %v2610
        %v2621 = vrcp.pop %v2613
        %v2622 = vrcp.pop %v2616
        %v2623 = vrcp.pop %v2619
        %v2624 = vmul.f32 %v2601, %v2620
        %v2625 = vmul.f32 %v2603, %v2621
        %v2626 = vmul.f32 %v2605, %v2622
        %v2627 = vmul.f32 %v2607, %v2623
        %v2628 = vpack.c.bf16 %v2624, %v2624
        %v2629 = vpack.c.bf16 %v2625, %v2625
        %v2630 = vpack.c.bf16 %v2626, %v2626
        %v2631 = vpack.c.bf16 %v2627, %v2627
        %2632 = vst [vmem:[#allocation2 + $0x60] sm:$0xff] %v2218
        %2633 = vst [vmem:[#allocation2 + $0x68] sm:$0xff] %v2222
        %2634 = vst [vmem:[#allocation2 + $0x70] sm:$0xff] %v2226
        %2635 = vst [vmem:[#allocation2 + $0x78] sm:$0xff] %v2230
        %v2640 = vunpack.c.l.b16 %v2361
        %v2641 = vunpack.c.l.b16 %v2362
        %v2642 = vunpack.c.l.b16 %v2363
        %v2643 = vunpack.c.l.b16 %v2364
        %v2644 = vpack.c.b16 %v2641, %v2640
        %v2645 = vpack.c.b16 %v2643, %v2642
        %v2650 = vunpack.c.l.b16 %v2450
        %v2651 = vunpack.c.l.b16 %v2451
        %v2652 = vunpack.c.l.b16 %v2452
        %v2653 = vunpack.c.l.b16 %v2453
        %v2654 = vpack.c.b16 %v2651, %v2650
        %v2655 = vpack.c.b16 %v2653, %v2652
        %2656 = vrot.lane.b32.xlu0 %v2654, 32
        %v2657 = vpop.permute.xlu0 %2656
        %2658 = vrot.lane.b32.xlu0 %v2655, 32
        %v2659 = vpop.permute.xlu0 %2658
        %v2664 = vunpack.c.l.b16 %v2539
        %v2665 = vunpack.c.l.b16 %v2540
        %v2666 = vunpack.c.l.b16 %v2541
        %v2667 = vunpack.c.l.b16 %v2542
        %v2668 = vpack.c.b16 %v2665, %v2664
        %v2669 = vpack.c.b16 %v2667, %v2666
        %2670 = vrot.lane.b32.xlu0 %v2668, 64
        %v2671 = vpop.permute.xlu0 %2670
        %2672 = vrot.lane.b32.xlu0 %v2669, 64
        %v2673 = vpop.permute.xlu0 %2672
        %v2678 = vunpack.c.l.b16 %v2628
        %v2679 = vunpack.c.l.b16 %v2629
        %v2680 = vunpack.c.l.b16 %v2630
        %v2681 = vunpack.c.l.b16 %v2631
        %v2682 = vpack.c.b16 %v2679, %v2678
        %v2683 = vpack.c.b16 %v2681, %v2680
        %2684 = vrot.lane.b32.xlu0 %v2682, 96
        %v2685 = vpop.permute.xlu0 %2684
        %2686 = vrot.lane.b32.xlu0 %v2683, 96
        %v2687 = vpop.permute.xlu0 %2686
        %v2690 = vsel %vm646, %v2644, %v2657
        %v2693 = vsel %vm646, %v2645, %v2659
        %vm2694 = vcmask 523264
        %v2696 = vsel %vm2694, %v2690, %v2671
        %v2698 = vsel %vm2694, %v2693, %v2673
        %vm2699 = vcmask 785408
        %v2701 = vsel %vm2699, %v2696, %v2685
        %v2704 = vsel %vm2699, %v2698, %v2687
        %v2706 = vld [vmem:[#allocation2] sm:$0xff]
        %v2707 = vld [vmem:[#allocation2 + $0x8] sm:$0xff]
        %v2708 = vld [vmem:[#allocation2 + $0x10] sm:$0xff]
        %v2709 = vld [vmem:[#allocation2 + $0x18] sm:$0xff]
        %v2710 = vld [vmem:[#allocation2 + $0x20] sm:$0xff]
        %v2711 = vld [vmem:[#allocation2 + $0x28] sm:$0xff]
        %v2712 = vld [vmem:[#allocation2 + $0x30] sm:$0xff]
        %v2713 = vld [vmem:[#allocation2 + $0x38] sm:$0xff]
        %v2714 = vld [vmem:[#allocation2 + $0x40] sm:$0xff]
        %v2715 = vld [vmem:[#allocation2 + $0x48] sm:$0xff]
        %v2716 = vld [vmem:[#allocation2 + $0x50] sm:$0xff]
        %v2717 = vld [vmem:[#allocation2 + $0x58] sm:$0xff]
        %v2718 = vld [vmem:[#allocation2 + $0x60] sm:$0xff]
        %v2719 = vld [vmem:[#allocation2 + $0x68] sm:$0xff]
        %v2720 = vld [vmem:[#allocation2 + $0x70] sm:$0xff]
        %v2721 = vld [vmem:[#allocation2 + $0x78] sm:$0xff]
        %v2722 = vperm.slane %v615, 2
        %v2723 = vperm.slane %v616, 2
        %v2740 = vunpack.c.l.b16 %v2706
        %v2741 = vunpack.c.h.b16 %v2706
        %v2742 = vunpack.c.l.b16 %v2707
        %v2743 = vunpack.c.h.b16 %v2707
        %v2744 = vunpack.c.l.b16 %v2708
        %v2745 = vunpack.c.h.b16 %v2708
        %v2746 = vunpack.c.l.b16 %v2709
        %v2747 = vunpack.c.h.b16 %v2709
        %v2748 = vunpack.c.l.b16 %v2710
        %v2749 = vunpack.c.h.b16 %v2710
        %v2750 = vunpack.c.l.b16 %v2711
        %v2751 = vunpack.c.h.b16 %v2711
        %v2752 = vunpack.c.l.b16 %v2712
        %v2753 = vunpack.c.h.b16 %v2712
        %v2754 = vunpack.c.l.b16 %v2713
        %v2755 = vunpack.c.h.b16 %v2713
        %v2756 = vunpack.c.l.b16 %v2714
        %v2757 = vunpack.c.h.b16 %v2714
        %v2758 = vunpack.c.l.b16 %v2715
        %v2759 = vunpack.c.h.b16 %v2715
        %v2760 = vunpack.c.l.b16 %v2716
        %v2761 = vunpack.c.h.b16 %v2716
        %v2762 = vunpack.c.l.b16 %v2717
        %v2763 = vunpack.c.h.b16 %v2717
        %v2764 = vunpack.c.l.b16 %v2718
        %v2765 = vunpack.c.h.b16 %v2718
        %v2766 = vunpack.c.l.b16 %v2719
        %v2767 = vunpack.c.h.b16 %v2719
        %v2768 = vunpack.c.l.b16 %v2720
        %v2769 = vunpack.c.h.b16 %v2720
        %v2770 = vunpack.c.l.b16 %v2721
        %v2771 = vunpack.c.h.b16 %v2721
        %v2772 = vpack.c.b16 %v2742, %v2740
        %v2773 = vpack.c.b16 %v2743, %v2741
        %v2774 = vpack.c.b16 %v2746, %v2744
        %v2775 = vpack.c.b16 %v2747, %v2745
        %v2776 = vpack.c.b16 %v2750, %v2748
        %v2777 = vpack.c.b16 %v2751, %v2749
        %v2778 = vpack.c.b16 %v2754, %v2752
        %v2779 = vpack.c.b16 %v2755, %v2753
        %v2780 = vpack.c.b16 %v2758, %v2756
        %v2781 = vpack.c.b16 %v2759, %v2757
        %v2782 = vpack.c.b16 %v2762, %v2760
        %v2783 = vpack.c.b16 %v2763, %v2761
        %v2784 = vpack.c.b16 %v2766, %v2764
        %v2785 = vpack.c.b16 %v2767, %v2765
        %v2786 = vpack.c.b16 %v2770, %v2768
        %v2787 = vpack.c.b16 %v2771, %v2769
        %2804 = vmatpush.bf16.msra.mxu0 %v2786
        %2805 = vmatpush.bf16.msra.mxu0 %v2784
        %2806 = vmatpush.bf16.msra.mxu0 %v2782
        %2807 = vmatpush.bf16.msra.mxu0 %v2780
        %2808 = vmatpush.bf16.msra.mxu0 %v2778
        %2809 = vmatpush.bf16.msra.mxu0 %v2776
        %2810 = vmatpush.bf16.msra.mxu0 %v2774
        %2811 = vmatpush.bf16.msra.mxu0 %v2772
        %2812 = vmatmul.bf16.gmra.mxu0 %v2701
        %v2813 = vpop.f32.mrf.mxu0
        %v2814 = vadd.f32 %v2722, %v2813
        %v2815 = vpop.f32.mrf.mxu0
        %v2816 = vadd.f32 %v2722, %v2815
        %2817 = vmatmul.bf16.gmra.mxu0 %v2704
        %v2818 = vpop.f32.mrf.mxu0
        %v2819 = vadd.f32 %v2722, %v2818
        %v2820 = vpop.f32.mrf.mxu0
        %v2821 = vadd.f32 %v2722, %v2820
        %2822 = vdwg.mxu0
        %2823 = vmatpush.bf16.msra.mxu0 %v2787
        %2824 = vmatpush.bf16.msra.mxu0 %v2785
        %2825 = vmatpush.bf16.msra.mxu0 %v2783
        %2826 = vmatpush.bf16.msra.mxu0 %v2781
        %2827 = vmatpush.bf16.msra.mxu0 %v2779
        %2828 = vmatpush.bf16.msra.mxu0 %v2777
        %2829 = vmatpush.bf16.msra.mxu0 %v2775
        %2830 = vmatpush.bf16.msra.mxu0 %v2773
        %2831 = vmatmul.bf16.gmra.mxu0 %v2701
        %v2832 = vpop.f32.mrf.mxu0
        %v2833 = vadd.f32 %v2723, %v2832
        %v2834 = vpop.f32.mrf.mxu0
        %v2835 = vadd.f32 %v2723, %v2834
        %2836 = vmatmul.bf16.gmra.mxu0 %v2704
        %v2837 = vpop.f32.mrf.mxu0
        %v2838 = vadd.f32 %v2723, %v2837
        %v2839 = vpop.f32.mrf.mxu0
        %v2840 = vadd.f32 %v2723, %v2839
        %2841 = vdwg.mxu0
        %v2842 = vmax.f32 %v2814, 0.0
        %v2843 = vmax.f32 %v2833, 0.0
        %v2844 = vmax.f32 %v2816, 0.0
        %v2845 = vmax.f32 %v2835, 0.0
        %v2846 = vmax.f32 %v2819, 0.0
        %v2847 = vmax.f32 %v2838, 0.0
        %v2848 = vmax.f32 %v2821, 0.0
        %v2849 = vmax.f32 %v2840, 0.0
        %v2850 = vsel %vm646, %v2264, 0.0
        %2851 = vadd.xlane.f32.xlu0 %v2850
        %v2852 = vpop.xlane.xlu0 %2851
        %v2853 = vsel %vm646, %v2265, 0.0
        %2854 = vadd.xlane.f32.xlu0 %v2853
        %v2855 = vpop.xlane.xlu0 %2854
        %v2856 = vsel %vm646, %v2266, 0.0
        %2857 = vadd.xlane.f32.xlu0 %v2856
        %v2858 = vpop.xlane.xlu0 %2857
        %v2859 = vsel %vm646, %v2267, 0.0
        %2860 = vadd.xlane.f32.xlu0 %v2859
        %v2861 = vpop.xlane.xlu0 %2860
        %v2862 = vadd.f32 %v2850, %v2853
        %v2863 = vadd.f32 %v2862, %v2856
        %v2864 = vadd.f32 %v2863, %v2859
        %v2865 = vrot.slane %v2864, 4
        %v2866 = vadd.f32 %v2864, %v2865
        %v2867 = vrot.slane %v2866, 2
        %v2868 = vadd.f32 %v2866, %v2867
        %v2869 = vrot.slane %v2868, 1
        %v2870 = vadd.f32 %v2868, %v2869
        %v2871 = vrsqrt.pop %v2852
        %v2872 = vmul.f32 %v2871, %v2852
        %v2873 = vmul.f32 %v2872, %v2871
        %v2874 = vmul.f32 0.5, %v2873
        %v2875 = vsub.f32 1.5, %v2874
        %v2876 = vmul.f32 %v2871, %v2875
        %vm2877 = vweird.f32 %v2852
        %vm2878 = vweird.f32 %v2871
        %vm2879 = vmor %vm2877, %vm2878
        %v2880 = vsel %vm2879, %v2871, %v2876
        %v2881 = vrsqrt.pop %v2855
        %v2882 = vmul.f32 %v2881, %v2855
        %v2883 = vmul.f32 %v2882, %v2881
        %v2884 = vmul.f32 0.5, %v2883
        %v2885 = vsub.f32 1.5, %v2884
        %v2886 = vmul.f32 %v2881, %v2885
        %vm2887 = vweird.f32 %v2855
        %vm2888 = vweird.f32 %v2881
        %vm2889 = vmor %vm2887, %vm2888
        %v2890 = vsel %vm2889, %v2881, %v2886
        %v2891 = vrsqrt.pop %v2858
        %v2892 = vmul.f32 %v2891, %v2858
        %v2893 = vmul.f32 %v2892, %v2891
        %v2894 = vmul.f32 0.5, %v2893
        %v2895 = vsub.f32 1.5, %v2894
        %v2896 = vmul.f32 %v2891, %v2895
        %vm2897 = vweird.f32 %v2858
        %vm2898 = vweird.f32 %v2891
        %vm2899 = vmor %vm2897, %vm2898
        %v2900 = vsel %vm2899, %v2891, %v2896
        %v2901 = vrsqrt.pop %v2861
        %v2902 = vmul.f32 %v2901, %v2861
        %v2903 = vmul.f32 %v2902, %v2901
        %v2904 = vmul.f32 0.5, %v2903
        %v2905 = vsub.f32 1.5, %v2904
        %v2906 = vmul.f32 %v2901, %v2905
        %vm2907 = vweird.f32 %v2861
        %vm2908 = vweird.f32 %v2901
        %vm2909 = vmor %vm2907, %vm2908
        %v2910 = vsel %vm2909, %v2901, %v2906
        %v2911 = vmul.f32 %v2264, %v2880
        %v2912 = vmul.f32 %v2265, %v2890
        %v2913 = vmul.f32 %v2266, %v2900
        %v2914 = vmul.f32 %v2267, %v2910
        %v2915 = vrsqrt.pop %v2870
        %v2916 = vmul.f32 %v2915, %v2870
        %v2917 = vmul.f32 %v2916, %v2915
        %v2918 = vmul.f32 0.5, %v2917
        %v2919 = vsub.f32 1.5, %v2918
        %v2920 = vmul.f32 %v2915, %v2919
        %vm2921 = vweird.f32 %v2870
        %vm2922 = vweird.f32 %v2915
        %vm2923 = vmor %vm2921, %vm2922
        %v2924 = vsel %vm2923, %v2915, %v2920
        %v2925 = vmul.f32 %v2911, %v2924
        %v2926 = vmul.f32 %v2912, %v2924
        %v2927 = vmul.f32 %v2913, %v2924
        %v2928 = vmul.f32 %v2914, %v2924
        %v2929 = vpack.c.bf16 %v2926, %v2925
        %v2930 = vpack.c.bf16 %v2928, %v2927
        %v2931 = vld [vmem:[#allocation12] sm:$0xff]
        %v2932 = vld [vmem:[#allocation12 + $0x8] sm:$0xff]
        %v2933 = vld [vmem:[#allocation12 + $0x10] sm:$0xff]
        %v2934 = vld [vmem:[#allocation12 + $0x18] sm:$0xff]
        %v2935 = vld [vmem:[#allocation12 + $0x20] sm:$0xff]
        %v2936 = vld [vmem:[#allocation12 + $0x28] sm:$0xff]
        %v2937 = vld [vmem:[#allocation12 + $0x30] sm:$0xff]
        %v2938 = vld [vmem:[#allocation12 + $0x38] sm:$0xff]
        %v2939 = vld [vmem:[#allocation12 + $0x40] sm:$0xff]
        %v2940 = vld [vmem:[#allocation12 + $0x48] sm:$0xff]
        %v2941 = vld [vmem:[#allocation12 + $0x50] sm:$0xff]
        %v2942 = vld [vmem:[#allocation12 + $0x58] sm:$0xff]
        %v2943 = vld [vmem:[#allocation12 + $0x60] sm:$0xff]
        %v2944 = vld [vmem:[#allocation12 + $0x68] sm:$0xff]
        %v2945 = vld [vmem:[#allocation12 + $0x70] sm:$0xff]
        %v2946 = vld [vmem:[#allocation12 + $0x78] sm:$0xff]
        %v2947 = vld [vmem:[#allocation12 + $0x80] sm:$0xff]
        %v2948 = vld [vmem:[#allocation12 + $0x88] sm:$0xff]
        %v2949 = vld [vmem:[#allocation12 + $0x90] sm:$0xff]
        %v2950 = vld [vmem:[#allocation12 + $0x98] sm:$0xff]
        %v2951 = vld [vmem:[#allocation12 + $0xa0] sm:$0xff]
        %v2952 = vld [vmem:[#allocation12 + $0xa8] sm:$0xff]
        %v2953 = vld [vmem:[#allocation12 + $0xb0] sm:$0xff]
        %v2954 = vld [vmem:[#allocation12 + $0xb8] sm:$0xff]
        %v2955 = vld [vmem:[#allocation12 + $0xc0] sm:$0xff]
        %v2956 = vld [vmem:[#allocation12 + $0xc8] sm:$0xff]
        %v2957 = vld [vmem:[#allocation12 + $0xd0] sm:$0xff]
        %v2958 = vld [vmem:[#allocation12 + $0xd8] sm:$0xff]
        %v2959 = vld [vmem:[#allocation12 + $0xe0] sm:$0xff]
        %v2960 = vld [vmem:[#allocation12 + $0xe8] sm:$0xff]
        %v2961 = vld [vmem:[#allocation12 + $0xf0] sm:$0xff]
        %v2962 = vld [vmem:[#allocation12 + $0xf8] sm:$0xff]
        %v2995 = vunpack.c.l.b16 %v2931
        %v2996 = vunpack.c.h.b16 %v2931
        %v2997 = vunpack.c.l.b16 %v2932
        %v2998 = vunpack.c.h.b16 %v2932
        %v2999 = vunpack.c.l.b16 %v2933
        %v3000 = vunpack.c.h.b16 %v2933
        %v3001 = vunpack.c.l.b16 %v2934
        %v3002 = vunpack.c.h.b16 %v2934
        %v3003 = vunpack.c.l.b16 %v2935
        %v3004 = vunpack.c.h.b16 %v2935
        %v3005 = vunpack.c.l.b16 %v2936
        %v3006 = vunpack.c.h.b16 %v2936
        %v3007 = vunpack.c.l.b16 %v2937
        %v3008 = vunpack.c.h.b16 %v2937
        %v3009 = vunpack.c.l.b16 %v2938
        %v3010 = vunpack.c.h.b16 %v2938
        %v3011 = vunpack.c.l.b16 %v2939
        %v3012 = vunpack.c.h.b16 %v2939
        %v3013 = vunpack.c.l.b16 %v2940
        %v3014 = vunpack.c.h.b16 %v2940
        %v3015 = vunpack.c.l.b16 %v2941
        %v3016 = vunpack.c.h.b16 %v2941
        %v3017 = vunpack.c.l.b16 %v2942
        %v3018 = vunpack.c.h.b16 %v2942
        %v3019 = vunpack.c.l.b16 %v2943
        %v3020 = vunpack.c.h.b16 %v2943
        %v3021 = vunpack.c.l.b16 %v2944
        %v3022 = vunpack.c.h.b16 %v2944
        %v3023 = vunpack.c.l.b16 %v2945
        %v3024 = vunpack.c.h.b16 %v2945
        %v3025 = vunpack.c.l.b16 %v2946
        %v3026 = vunpack.c.h.b16 %v2946
        %v3027 = vunpack.c.l.b16 %v2947
        %v3028 = vunpack.c.h.b16 %v2947
        %v3029 = vunpack.c.l.b16 %v2948
        %v3030 = vunpack.c.h.b16 %v2948
        %v3031 = vunpack.c.l.b16 %v2949
        %v3032 = vunpack.c.h.b16 %v2949
        %v3033 = vunpack.c.l.b16 %v2950
        %v3034 = vunpack.c.h.b16 %v2950
        %v3035 = vunpack.c.l.b16 %v2951
        %v3036 = vunpack.c.h.b16 %v2951
        %v3037 = vunpack.c.l.b16 %v2952
        %v3038 = vunpack.c.h.b16 %v2952
        %v3039 = vunpack.c.l.b16 %v2953
        %v3040 = vunpack.c.h.b16 %v2953
        %v3041 = vunpack.c.l.b16 %v2954
        %v3042 = vunpack.c.h.b16 %v2954
        %v3043 = vunpack.c.l.b16 %v2955
        %v3044 = vunpack.c.h.b16 %v2955
        %v3045 = vunpack.c.l.b16 %v2956
        %v3046 = vunpack.c.h.b16 %v2956
        %v3047 = vunpack.c.l.b16 %v2957
        %v3048 = vunpack.c.h.b16 %v2957
        %v3049 = vunpack.c.l.b16 %v2958
        %v3050 = vunpack.c.h.b16 %v2958
        %v3051 = vunpack.c.l.b16 %v2959
        %v3052 = vunpack.c.h.b16 %v2959
        %v3053 = vunpack.c.l.b16 %v2960
        %v3054 = vunpack.c.h.b16 %v2960
        %v3055 = vunpack.c.l.b16 %v2961
        %v3056 = vunpack.c.h.b16 %v2961
        %v3057 = vunpack.c.l.b16 %v2962
        %v3058 = vunpack.c.h.b16 %v2962
        %v3059 = vpack.c.b16 %v2997, %v2995
        %v3060 = vpack.c.b16 %v2998, %v2996
        %v3061 = vpack.c.b16 %v3001, %v2999
        %v3062 = vpack.c.b16 %v3002, %v3000
        %v3063 = vpack.c.b16 %v3005, %v3003
        %v3064 = vpack.c.b16 %v3006, %v3004
        %v3065 = vpack.c.b16 %v3009, %v3007
        %v3066 = vpack.c.b16 %v3010, %v3008
        %v3067 = vpack.c.b16 %v3013, %v3011
        %v3068 = vpack.c.b16 %v3014, %v3012
        %v3069 = vpack.c.b16 %v3017, %v3015
        %v3070 = vpack.c.b16 %v3018, %v3016
        %v3071 = vpack.c.b16 %v3021, %v3019
        %v3072 = vpack.c.b16 %v3022, %v3020
        %v3073 = vpack.c.b16 %v3025, %v3023
        %v3074 = vpack.c.b16 %v3026, %v3024
        %v3075 = vpack.c.b16 %v3029, %v3027
        %v3076 = vpack.c.b16 %v3030, %v3028
        %v3077 = vpack.c.b16 %v3033, %v3031
        %v3078 = vpack.c.b16 %v3034, %v3032
        %v3079 = vpack.c.b16 %v3037, %v3035
        %v3080 = vpack.c.b16 %v3038, %v3036
        %v3081 = vpack.c.b16 %v3041, %v3039
        %v3082 = vpack.c.b16 %v3042, %v3040
        %v3083 = vpack.c.b16 %v3045, %v3043
        %v3084 = vpack.c.b16 %v3046, %v3044
        %v3085 = vpack.c.b16 %v3049, %v3047
        %v3086 = vpack.c.b16 %v3050, %v3048
        %v3087 = vpack.c.b16 %v3053, %v3051
        %v3088 = vpack.c.b16 %v3054, %v3052
        %v3089 = vpack.c.b16 %v3057, %v3055
        %v3090 = vpack.c.b16 %v3058, %v3056
        %3123 = vmatpush.bf16.msra.mxu0 %v3073
        %3124 = vmatpush.bf16.msra.mxu0 %v3071
        %3125 = vmatpush.bf16.msra.mxu0 %v3069
        %3126 = vmatpush.bf16.msra.mxu0 %v3067
        %3127 = vmatpush.bf16.msra.mxu0 %v3065
        %3128 = vmatpush.bf16.msra.mxu0 %v3063
        %3129 = vmatpush.bf16.msra.mxu0 %v3061
        %3130 = vmatpush.bf16.msra.mxu0 %v3059
        %3131 = vmatmul.bf16.gmra.mxu0 %v973
        %v3132 = vpop.f32.mrf.mxu0
        %v3133 = vadd.f32 0.0, %v3132
        %v3134 = vpop.f32.mrf.mxu0
        %v3135 = vadd.f32 0.0, %v3134
        %3136 = vmatmul.bf16.gmra.mxu0 %v975
        %v3137 = vpop.f32.mrf.mxu0
        %v3138 = vadd.f32 0.0, %v3137
        %v3139 = vpop.f32.mrf.mxu0
        %v3140 = vadd.f32 0.0, %v3139
        %3141 = vdwg.mxu0
        %3142 = vmatpush.bf16.msra.mxu0 %v3089
        %3143 = vmatpush.bf16.msra.mxu0 %v3087
        %3144 = vmatpush.bf16.msra.mxu0 %v3085
        %3145 = vmatpush.bf16.msra.mxu0 %v3083
        %3146 = vmatpush.bf16.msra.mxu0 %v3081
        %3147 = vmatpush.bf16.msra.mxu0 %v3079
        %3148 = vmatpush.bf16.msra.mxu0 %v3077
        %3149 = vmatpush.bf16.msra.mxu0 %v3075
        %3150 = vmatmul.bf16.gmra.mxu0 %v974
        %v3151 = vpop.f32.mrf.mxu0
        %v3152 = vadd.f32 %v3133, %v3151
        %v3153 = vpop.f32.mrf.mxu0
        %v3154 = vadd.f32 %v3135, %v3153
        %3155 = vmatmul.bf16.gmra.mxu0 %v976
        %v3156 = vpop.f32.mrf.mxu0
        %v3157 = vadd.f32 %v3138, %v3156
        %v3158 = vpop.f32.mrf.mxu0
        %v3159 = vadd.f32 %v3140, %v3158
        %3160 = vdwg.mxu0
        %3161 = vmatpush.bf16.msra.mxu0 %v3074
        %3162 = vmatpush.bf16.msra.mxu0 %v3072
        %3163 = vmatpush.bf16.msra.mxu0 %v3070
        %3164 = vmatpush.bf16.msra.mxu0 %v3068
        %3165 = vmatpush.bf16.msra.mxu0 %v3066
        %3166 = vmatpush.bf16.msra.mxu0 %v3064
        %3167 = vmatpush.bf16.msra.mxu0 %v3062
        %3168 = vmatpush.bf16.msra.mxu0 %v3060
        %3169 = vmatmul.bf16.gmra.mxu0 %v973
        %v3170 = vpop.f32.mrf.mxu0
        %v3171 = vadd.f32 0.0, %v3170
        %v3172 = vpop.f32.mrf.mxu0
        %v3173 = vadd.f32 0.0, %v3172
        %3174 = vmatmul.bf16.gmra.mxu0 %v975
        %v3175 = vpop.f32.mrf.mxu0
        %v3176 = vadd.f32 0.0, %v3175
        %v3177 = vpop.f32.mrf.mxu0
        %v3178 = vadd.f32 0.0, %v3177
        %3179 = vdwg.mxu0
        %3180 = vmatpush.bf16.msra.mxu0 %v3090
        %3181 = vmatpush.bf16.msra.mxu0 %v3088
        %3182 = vmatpush.bf16.msra.mxu0 %v3086
        %3183 = vmatpush.bf16.msra.mxu0 %v3084
        %3184 = vmatpush.bf16.msra.mxu0 %v3082
        %3185 = vmatpush.bf16.msra.mxu0 %v3080
        %3186 = vmatpush.bf16.msra.mxu0 %v3078
        %3187 = vmatpush.bf16.msra.mxu0 %v3076
        %3188 = vmatmul.bf16.gmra.mxu0 %v974
        %v3189 = vpop.f32.mrf.mxu0
        %v3190 = vadd.f32 %v3171, %v3189
        %v3191 = vpop.f32.mrf.mxu0
        %v3192 = vadd.f32 %v3173, %v3191
        %3193 = vmatmul.bf16.gmra.mxu0 %v976
        %v3194 = vpop.f32.mrf.mxu0
        %v3195 = vadd.f32 %v3176, %v3194
        %v3196 = vpop.f32.mrf.mxu0
        %v3197 = vadd.f32 %v3178, %v3196
        %3198 = vdwg.mxu0
        %v3199 = vpack.c.bf16 %v3154, %v3152
        %v3200 = vpack.c.bf16 %v3192, %v3190
        %v3201 = vpack.c.bf16 %v3159, %v3157
        %v3202 = vpack.c.bf16 %v3197, %v3195
        %v3203 = vperm.slane %v615, 3
        %v3204 = vperm.slane %v616, 3
        %v3206 = vsel %vm646, %v2929, 0
        %v3209 = vsel %vm646, %v2930, 0
        %3211 = vmatpush.bf16.msra.mxu0 0
        %3212 = vmatpush.bf16.msra.mxu0 0
        %3213 = vmatpush.bf16.msra.mxu0 0
        %3214 = vmatpush.bf16.msra.mxu0 0
        %3215 = vmatpush.bf16.msra.mxu0 0
        %3216 = vmatpush.bf16.msra.mxu0 0
        %3217 = vmatpush.bf16.msra.mxu0 %v3201
        %3218 = vmatpush.bf16.msra.mxu0 %v3199
        %3219 = vmatmul.bf16.gmra.mxu0 %v3206
        %v3220 = vpop.f32.mrf.mxu0
        %v3221 = vadd.f32 %v3203, %v3220
        %v3222 = vpop.f32.mrf.mxu0
        %v3223 = vadd.f32 %v3203, %v3222
        %3224 = vmatmul.bf16.gmra.mxu0 %v3209
        %v3225 = vpop.f32.mrf.mxu0
        %v3226 = vadd.f32 %v3203, %v3225
        %v3227 = vpop.f32.mrf.mxu0
        %v3228 = vadd.f32 %v3203, %v3227
        %3229 = vdwg.mxu0
        %3230 = vmatpush.bf16.msra.mxu0 0
        %3231 = vmatpush.bf16.msra.mxu0 0
        %3232 = vmatpush.bf16.msra.mxu0 0
        %3233 = vmatpush.bf16.msra.mxu0 0
        %3234 = vmatpush.bf16.msra.mxu0 0
        %3235 = vmatpush.bf16.msra.mxu0 0
        %3236 = vmatpush.bf16.msra.mxu0 %v3202
        %3237 = vmatpush.bf16.msra.mxu0 %v3200
        %3238 = vmatmul.bf16.gmra.mxu0 %v3206
        %v3239 = vpop.f32.mrf.mxu0
        %v3240 = vadd.f32 %v3204, %v3239
        %v3241 = vpop.f32.mrf.mxu0
        %v3242 = vadd.f32 %v3204, %v3241
        %3243 = vmatmul.bf16.gmra.mxu0 %v3209
        %v3244 = vpop.f32.mrf.mxu0
        %v3245 = vadd.f32 %v3204, %v3244
        %v3246 = vpop.f32.mrf.mxu0
        %v3247 = vadd.f32 %v3204, %v3246
        %3248 = vdwg.mxu0
        %v3249 = vmax.f32 %v3221, 0.0
        %v3250 = vmax.f32 %v3240, 0.0
        %v3251 = vmax.f32 %v3223, 0.0
        %v3252 = vmax.f32 %v3242, 0.0
        %v3253 = vmax.f32 %v3226, 0.0
        %v3254 = vmax.f32 %v3245, 0.0
        %v3255 = vmax.f32 %v3228, 0.0
        %v3256 = vmax.f32 %v3247, 0.0
        %v3257 = vpack.c.bf16 %v3251, %v3249
        %v3258 = vpack.c.bf16 %v3252, %v3250
        %v3259 = vpack.c.bf16 %v3255, %v3253
        %v3260 = vpack.c.bf16 %v3256, %v3254
        %v3261 = vld [vmem:[#allocation14] sm:$0xff]
        %v3262 = vld [vmem:[#allocation14 + $0x8] sm:$0xff]
        %v3263 = vld [vmem:[#allocation14 + $0x10] sm:$0xff]
        %v3264 = vld [vmem:[#allocation14 + $0x18] sm:$0xff]
        %v3265 = vld [vmem:[#allocation14 + $0x20] sm:$0xff]
        %v3266 = vld [vmem:[#allocation14 + $0x28] sm:$0xff]
        %v3267 = vld [vmem:[#allocation14 + $0x30] sm:$0xff]
        %v3268 = vld [vmem:[#allocation14 + $0x38] sm:$0xff]
        %v3269 = vld [vmem:[#allocation14 + $0x40] sm:$0xff]
        %v3270 = vld [vmem:[#allocation14 + $0x48] sm:$0xff]
        %v3271 = vld [vmem:[#allocation14 + $0x50] sm:$0xff]
        %v3272 = vld [vmem:[#allocation14 + $0x58] sm:$0xff]
        %v3273 = vld [vmem:[#allocation14 + $0x60] sm:$0xff]
        %v3274 = vld [vmem:[#allocation14 + $0x68] sm:$0xff]
        %v3275 = vld [vmem:[#allocation14 + $0x70] sm:$0xff]
        %v3276 = vld [vmem:[#allocation14 + $0x78] sm:$0xff]
        %v3277 = vld [vmem:[#allocation14 + $0x80] sm:$0xff]
        %v3278 = vld [vmem:[#allocation14 + $0x88] sm:$0xff]
        %v3279 = vld [vmem:[#allocation14 + $0x90] sm:$0xff]
        %v3280 = vld [vmem:[#allocation14 + $0x98] sm:$0xff]
        %v3281 = vld [vmem:[#allocation14 + $0xa0] sm:$0xff]
        %v3282 = vld [vmem:[#allocation14 + $0xa8] sm:$0xff]
        %v3283 = vld [vmem:[#allocation14 + $0xb0] sm:$0xff]
        %v3284 = vld [vmem:[#allocation14 + $0xb8] sm:$0xff]
        %v3285 = vld [vmem:[#allocation14 + $0xc0] sm:$0xff]
        %v3286 = vld [vmem:[#allocation14 + $0xc8] sm:$0xff]
        %v3287 = vld [vmem:[#allocation14 + $0xd0] sm:$0xff]
        %v3288 = vld [vmem:[#allocation14 + $0xd8] sm:$0xff]
        %v3289 = vld [vmem:[#allocation14 + $0xe0] sm:$0xff]
        %v3290 = vld [vmem:[#allocation14 + $0xe8] sm:$0xff]
        %v3291 = vld [vmem:[#allocation14 + $0xf0] sm:$0xff]
        %v3292 = vld [vmem:[#allocation14 + $0xf8] sm:$0xff]
        %v3325 = vunpack.c.l.b16 %v3261
        %v3326 = vunpack.c.h.b16 %v3261
        %v3327 = vunpack.c.l.b16 %v3262
        %v3328 = vunpack.c.h.b16 %v3262
        %v3329 = vunpack.c.l.b16 %v3263
        %v3330 = vunpack.c.h.b16 %v3263
        %v3331 = vunpack.c.l.b16 %v3264
        %v3332 = vunpack.c.h.b16 %v3264
        %v3333 = vunpack.c.l.b16 %v3265
        %v3334 = vunpack.c.h.b16 %v3265
        %v3335 = vunpack.c.l.b16 %v3266
        %v3336 = vunpack.c.h.b16 %v3266
        %v3337 = vunpack.c.l.b16 %v3267
        %v3338 = vunpack.c.h.b16 %v3267
        %v3339 = vunpack.c.l.b16 %v3268
        %v3340 = vunpack.c.h.b16 %v3268
        %v3341 = vunpack.c.l.b16 %v3269
        %v3342 = vunpack.c.h.b16 %v3269
        %v3343 = vunpack.c.l.b16 %v3270
        %v3344 = vunpack.c.h.b16 %v3270
        %v3345 = vunpack.c.l.b16 %v3271
        %v3346 = vunpack.c.h.b16 %v3271
        %v3347 = vunpack.c.l.b16 %v3272
        %v3348 = vunpack.c.h.b16 %v3272
        %v3349 = vunpack.c.l.b16 %v3273
        %v3350 = vunpack.c.h.b16 %v3273
        %v3351 = vunpack.c.l.b16 %v3274
        %v3352 = vunpack.c.h.b16 %v3274
        %v3353 = vunpack.c.l.b16 %v3275
        %v3354 = vunpack.c.h.b16 %v3275
        %v3355 = vunpack.c.l.b16 %v3276
        %v3356 = vunpack.c.h.b16 %v3276
        %v3357 = vunpack.c.l.b16 %v3277
        %v3358 = vunpack.c.h.b16 %v3277
        %v3359 = vunpack.c.l.b16 %v3278
        %v3360 = vunpack.c.h.b16 %v3278
        %v3361 = vunpack.c.l.b16 %v3279
        %v3362 = vunpack.c.h.b16 %v3279
        %v3363 = vunpack.c.l.b16 %v3280
        %v3364 = vunpack.c.h.b16 %v3280
        %v3365 = vunpack.c.l.b16 %v3281
        %v3366 = vunpack.c.h.b16 %v3281
        %v3367 = vunpack.c.l.b16 %v3282
        %v3368 = vunpack.c.h.b16 %v3282
        %v3369 = vunpack.c.l.b16 %v3283
        %v3370 = vunpack.c.h.b16 %v3283
        %v3371 = vunpack.c.l.b16 %v3284
        %v3372 = vunpack.c.h.b16 %v3284
        %v3373 = vunpack.c.l.b16 %v3285
        %v3374 = vunpack.c.h.b16 %v3285
        %v3375 = vunpack.c.l.b16 %v3286
        %v3376 = vunpack.c.h.b16 %v3286
        %v3377 = vunpack.c.l.b16 %v3287
        %v3378 = vunpack.c.h.b16 %v3287
        %v3379 = vunpack.c.l.b16 %v3288
        %v3380 = vunpack.c.h.b16 %v3288
        %v3381 = vunpack.c.l.b16 %v3289
        %v3382 = vunpack.c.h.b16 %v3289
        %v3383 = vunpack.c.l.b16 %v3290
        %v3384 = vunpack.c.h.b16 %v3290
        %v3385 = vunpack.c.l.b16 %v3291
        %v3386 = vunpack.c.h.b16 %v3291
        %v3387 = vunpack.c.l.b16 %v3292
        %v3388 = vunpack.c.h.b16 %v3292
        %v3389 = vpack.c.b16 %v3327, %v3325
        %v3390 = vpack.c.b16 %v3328, %v3326
        %v3391 = vpack.c.b16 %v3331, %v3329
        %v3392 = vpack.c.b16 %v3332, %v3330
        %v3393 = vpack.c.b16 %v3335, %v3333
        %v3394 = vpack.c.b16 %v3336, %v3334
        %v3395 = vpack.c.b16 %v3339, %v3337
        %v3396 = vpack.c.b16 %v3340, %v3338
        %v3397 = vpack.c.b16 %v3343, %v3341
        %v3398 = vpack.c.b16 %v3344, %v3342
        %v3399 = vpack.c.b16 %v3347, %v3345
        %v3400 = vpack.c.b16 %v3348, %v3346
        %v3401 = vpack.c.b16 %v3351, %v3349
        %v3402 = vpack.c.b16 %v3352, %v3350
        %v3403 = vpack.c.b16 %v3355, %v3353
        %v3404 = vpack.c.b16 %v3356, %v3354
        %v3405 = vpack.c.b16 %v3359, %v3357
        %v3406 = vpack.c.b16 %v3360, %v3358
        %v3407 = vpack.c.b16 %v3363, %v3361
        %v3408 = vpack.c.b16 %v3364, %v3362
        %v3409 = vpack.c.b16 %v3367, %v3365
        %v3410 = vpack.c.b16 %v3368, %v3366
        %v3411 = vpack.c.b16 %v3371, %v3369
        %v3412 = vpack.c.b16 %v3372, %v3370
        %v3413 = vpack.c.b16 %v3375, %v3373
        %v3414 = vpack.c.b16 %v3376, %v3374
        %v3415 = vpack.c.b16 %v3379, %v3377
        %v3416 = vpack.c.b16 %v3380, %v3378
        %v3417 = vpack.c.b16 %v3383, %v3381
        %v3418 = vpack.c.b16 %v3384, %v3382
        %v3419 = vpack.c.b16 %v3387, %v3385
        %v3420 = vpack.c.b16 %v3388, %v3386
        %3453 = vmatpush.bf16.msra.mxu0 %v3403
        %3454 = vmatpush.bf16.msra.mxu0 %v3401
        %3455 = vmatpush.bf16.msra.mxu0 %v3399
        %3456 = vmatpush.bf16.msra.mxu0 %v3397
        %3457 = vmatpush.bf16.msra.mxu0 %v3395
        %3458 = vmatpush.bf16.msra.mxu0 %v3393
        %3459 = vmatpush.bf16.msra.mxu0 %v3391
        %3460 = vmatpush.bf16.msra.mxu0 %v3389
        %3461 = vmatmul.bf16.gmra.mxu0 %v3257
        %v3462 = vpop.f32.mrf.mxu0
        %v3463 = vadd.f32 0.0, %v3462
        %v3464 = vpop.f32.mrf.mxu0
        %v3465 = vadd.f32 0.0, %v3464
        %3466 = vmatmul.bf16.gmra.mxu0 %v3259
        %v3467 = vpop.f32.mrf.mxu0
        %v3468 = vadd.f32 0.0, %v3467
        %v3469 = vpop.f32.mrf.mxu0
        %v3470 = vadd.f32 0.0, %v3469
        %3471 = vdwg.mxu0
        %3472 = vmatpush.bf16.msra.mxu0 %v3419
        %3473 = vmatpush.bf16.msra.mxu0 %v3417
        %3474 = vmatpush.bf16.msra.mxu0 %v3415
        %3475 = vmatpush.bf16.msra.mxu0 %v3413
        %3476 = vmatpush.bf16.msra.mxu0 %v3411
        %3477 = vmatpush.bf16.msra.mxu0 %v3409
        %3478 = vmatpush.bf16.msra.mxu0 %v3407
        %3479 = vmatpush.bf16.msra.mxu0 %v3405
        %3480 = vmatmul.bf16.gmra.mxu0 %v3258
        %v3481 = vpop.f32.mrf.mxu0
        %v3482 = vadd.f32 %v3463, %v3481
        %v3483 = vpop.f32.mrf.mxu0
        %v3484 = vadd.f32 %v3465, %v3483
        %3485 = vmatmul.bf16.gmra.mxu0 %v3260
        %v3486 = vpop.f32.mrf.mxu0
        %v3487 = vadd.f32 %v3468, %v3486
        %v3488 = vpop.f32.mrf.mxu0
        %v3489 = vadd.f32 %v3470, %v3488
        %3490 = vdwg.mxu0
        %3491 = vmatpush.bf16.msra.mxu0 %v3404
        %3492 = vmatpush.bf16.msra.mxu0 %v3402
        %3493 = vmatpush.bf16.msra.mxu0 %v3400
        %3494 = vmatpush.bf16.msra.mxu0 %v3398
        %3495 = vmatpush.bf16.msra.mxu0 %v3396
        %3496 = vmatpush.bf16.msra.mxu0 %v3394
        %3497 = vmatpush.bf16.msra.mxu0 %v3392
        %3498 = vmatpush.bf16.msra.mxu0 %v3390
        %3499 = vmatmul.bf16.gmra.mxu0 %v3257
        %v3500 = vpop.f32.mrf.mxu0
        %v3501 = vadd.f32 0.0, %v3500
        %v3502 = vpop.f32.mrf.mxu0
        %v3503 = vadd.f32 0.0, %v3502
        %3504 = vmatmul.bf16.gmra.mxu0 %v3259
        %v3505 = vpop.f32.mrf.mxu0
        %v3506 = vadd.f32 0.0, %v3505
        %v3507 = vpop.f32.mrf.mxu0
        %v3508 = vadd.f32 0.0, %v3507
        %3509 = vdwg.mxu0
        %3510 = vmatpush.bf16.msra.mxu0 %v3420
        %3511 = vmatpush.bf16.msra.mxu0 %v3418
        %3512 = vmatpush.bf16.msra.mxu0 %v3416
        %3513 = vmatpush.bf16.msra.mxu0 %v3414
        %3514 = vmatpush.bf16.msra.mxu0 %v3412
        %3515 = vmatpush.bf16.msra.mxu0 %v3410
        %3516 = vmatpush.bf16.msra.mxu0 %v3408
        %3517 = vmatpush.bf16.msra.mxu0 %v3406
        %3518 = vmatmul.bf16.gmra.mxu0 %v3258
        %v3519 = vpop.f32.mrf.mxu0
        %v3520 = vadd.f32 %v3501, %v3519
        %v3521 = vpop.f32.mrf.mxu0
        %v3522 = vadd.f32 %v3503, %v3521
        %3523 = vmatmul.bf16.gmra.mxu0 %v3260
        %v3524 = vpop.f32.mrf.mxu0
        %v3525 = vadd.f32 %v3506, %v3524
        %v3526 = vpop.f32.mrf.mxu0
        %v3527 = vadd.f32 %v3508, %v3526
        %3528 = vdwg.mxu0
        %v3529 = vpack.c.bf16 %v3484, %v3482
        %v3530 = vpack.c.bf16 %v3522, %v3520
        %v3531 = vpack.c.bf16 %v3489, %v3487
        %v3532 = vpack.c.bf16 %v3527, %v3525
        %v3533 = vperm.slane %v615, 4
        %v3534 = vperm.slane %v616, 4
        %3535 = vmatpush.bf16.msra.mxu0 0
        %3536 = vmatpush.bf16.msra.mxu0 0
        %3537 = vmatpush.bf16.msra.mxu0 0
        %3538 = vmatpush.bf16.msra.mxu0 0
        %3539 = vmatpush.bf16.msra.mxu0 0
        %3540 = vmatpush.bf16.msra.mxu0 0
        %3541 = vmatpush.bf16.msra.mxu0 %v3531
        %3542 = vmatpush.bf16.msra.mxu0 %v3529
        %3543 = vmatmul.bf16.gmra.mxu0 %v3206
        %v3544 = vpop.f32.mrf.mxu0
        %v3545 = vadd.f32 %v3533, %v3544
        %v3546 = vpop.f32.mrf.mxu0
        %v3547 = vadd.f32 %v3533, %v3546
        %3548 = vmatmul.bf16.gmra.mxu0 %v3209
        %v3549 = vpop.f32.mrf.mxu0
        %v3550 = vadd.f32 %v3533, %v3549
        %v3551 = vpop.f32.mrf.mxu0
        %v3552 = vadd.f32 %v3533, %v3551
        %3553 = vdwg.mxu0
        %3554 = vmatpush.bf16.msra.mxu0 0
        %3555 = vmatpush.bf16.msra.mxu0 0
        %3556 = vmatpush.bf16.msra.mxu0 0
        %3557 = vmatpush.bf16.msra.mxu0 0
        %3558 = vmatpush.bf16.msra.mxu0 0
        %3559 = vmatpush.bf16.msra.mxu0 0
        %3560 = vmatpush.bf16.msra.mxu0 %v3532
        %3561 = vmatpush.bf16.msra.mxu0 %v3530
        %3562 = vmatmul.bf16.gmra.mxu0 %v3206
        %v3563 = vpop.f32.mrf.mxu0
        %v3564 = vadd.f32 %v3534, %v3563
        %v3565 = vpop.f32.mrf.mxu0
        %v3566 = vadd.f32 %v3534, %v3565
        %3567 = vmatmul.bf16.gmra.mxu0 %v3209
        %v3568 = vpop.f32.mrf.mxu0
        %v3569 = vadd.f32 %v3534, %v3568
        %v3570 = vpop.f32.mrf.mxu0
        %v3571 = vadd.f32 %v3534, %v3570
        %3572 = vdwg.mxu0
        %v3573 = vmax.f32 %v3545, 0.0
        %v3574 = vmax.f32 %v3564, 0.0
        %v3575 = vmax.f32 %v3547, 0.0
        %v3576 = vmax.f32 %v3566, 0.0
        %v3577 = vmax.f32 %v3550, 0.0
        %v3578 = vmax.f32 %v3569, 0.0
        %v3579 = vmax.f32 %v3552, 0.0
        %v3580 = vmax.f32 %v3571, 0.0
        %v3581 = vadd.f32 %v2842, %v3573
        %v3582 = vadd.f32 %v2843, %v3574
        %v3583 = vadd.f32 %v2844, %v3575
        %v3584 = vadd.f32 %v2845, %v3576
        %v3585 = vadd.f32 %v2846, %v3577
        %v3586 = vadd.f32 %v2847, %v3578
        %v3587 = vadd.f32 %v2848, %v3579
        %v3588 = vadd.f32 %v2849, %v3580
        %v3589 = vpack.c.bf16 %v3583, %v3581
        %v3590 = vpack.c.bf16 %v3584, %v3582
        %v3591 = vpack.c.bf16 %v3587, %v3585
        %v3592 = vpack.c.bf16 %v3588, %v3586
        %v3593 = vlaneseq
        %v3594 = vshrl.u32 %v3593, 7
        %v3595 = vlaneseq
        %v3596 = vand.u32 %v3595, 127
        %v3597 = vmul.u32 %v3594, 16
        %vm3598 = vcmp.ge.s32.totalorder %v3596, %v3597
        %v3599 = vadd.s32 %v3594, 1
        %v3600 = vmul.u32 %v3599, 16
        %vm3601 = vcmp.lt.s32.totalorder %v3596, %v3600
        %vm3602 = vmand %vm3598, %vm3601
        %v3603 = vsel %vm3602, 1.0, 0.0
        %v3604 = vpack.c.bf16 %v3603, %v3603
        %v3606 = vsel %vm646, %v3604, 0
        %3608 = vmatpush.bf16.msra.mxu0 0
        %3609 = vmatpush.bf16.msra.mxu0 0
        %3610 = vmatpush.bf16.msra.mxu0 0
        %3611 = vmatpush.bf16.msra.mxu0 0
        %3612 = vmatpush.bf16.msra.mxu0 0
        %3613 = vmatpush.bf16.msra.mxu0 0
        %3614 = vmatpush.bf16.msra.mxu0 %v3591
        %3615 = vmatpush.bf16.msra.mxu0 %v3589
        %3616 = vmatmul.bf16.gmra.mxu0 %v3606
        %v3617 = vpop.f32.mrf.mxu0
        %v3618 = vadd.f32 0.0, %v3617
        %v3619 = vpop.f32.mrf.mxu0
        %3620 = vdwg.mxu0
        %3621 = vmatpush.bf16.msra.mxu0 0
        %3622 = vmatpush.bf16.msra.mxu0 0
        %3623 = vmatpush.bf16.msra.mxu0 0
        %3624 = vmatpush.bf16.msra.mxu0 0
        %3625 = vmatpush.bf16.msra.mxu0 0
        %3626 = vmatpush.bf16.msra.mxu0 0
        %3627 = vmatpush.bf16.msra.mxu0 %v3592
        %3628 = vmatpush.bf16.msra.mxu0 %v3590
        %3629 = vmatmul.bf16.gmra.mxu0 %v3606
        %v3630 = vpop.f32.mrf.mxu0
        %v3631 = vadd.f32 0.0, %v3630
        %v3632 = vpop.f32.mrf.mxu0
        %3633 = vdwg.mxu0
        %v3634 = vmul.f32 %v3618, 0.0625
        %v3635 = vmul.f32 %v3631, 0.0625
        %v3636 = vpack.c.bf16 %v3634, %v3634
        %v3637 = vpack.c.bf16 %v3635, %v3635
        %v3638 = vld [vmem:[#allocation15] sm:$0xff]
        %v3639 = vld [vmem:[#allocation15 + $0x8] sm:$0xff]
        %v3640 = vld [vmem:[#allocation15 + $0x10] sm:$0xff]
        %v3641 = vld [vmem:[#allocation15 + $0x18] sm:$0xff]
        %v3642 = vld [vmem:[#allocation15 + $0x20] sm:$0xff]
        %v3643 = vld [vmem:[#allocation15 + $0x28] sm:$0xff]
        %v3644 = vld [vmem:[#allocation15 + $0x30] sm:$0xff]
        %v3645 = vld [vmem:[#allocation15 + $0x38] sm:$0xff]
        %v3646 = vld [vmem:[#allocation15 + $0x40] sm:$0xff]
        %v3647 = vld [vmem:[#allocation15 + $0x48] sm:$0xff]
        %v3648 = vld [vmem:[#allocation15 + $0x50] sm:$0xff]
        %v3649 = vld [vmem:[#allocation15 + $0x58] sm:$0xff]
        %v3650 = vld [vmem:[#allocation15 + $0x60] sm:$0xff]
        %v3651 = vld [vmem:[#allocation15 + $0x68] sm:$0xff]
        %v3652 = vld [vmem:[#allocation15 + $0x70] sm:$0xff]
        %v3653 = vld [vmem:[#allocation15 + $0x78] sm:$0xff]
        %v3654 = vld [vmem:[#allocation15 + $0x80] sm:$0xff]
        %v3655 = vld [vmem:[#allocation15 + $0x88] sm:$0xff]
        %v3656 = vld [vmem:[#allocation15 + $0x90] sm:$0xff]
        %v3657 = vld [vmem:[#allocation15 + $0x98] sm:$0xff]
        %v3658 = vld [vmem:[#allocation15 + $0xa0] sm:$0xff]
        %v3659 = vld [vmem:[#allocation15 + $0xa8] sm:$0xff]
        %v3660 = vld [vmem:[#allocation15 + $0xb0] sm:$0xff]
        %v3661 = vld [vmem:[#allocation15 + $0xb8] sm:$0xff]
        %v3662 = vld [vmem:[#allocation15 + $0xc0] sm:$0xff]
        %v3663 = vld [vmem:[#allocation15 + $0xc8] sm:$0xff]
        %v3664 = vld [vmem:[#allocation15 + $0xd0] sm:$0xff]
        %v3665 = vld [vmem:[#allocation15 + $0xd8] sm:$0xff]
        %v3666 = vld [vmem:[#allocation15 + $0xe0] sm:$0xff]
        %v3667 = vld [vmem:[#allocation15 + $0xe8] sm:$0xff]
        %v3668 = vld [vmem:[#allocation15 + $0xf0] sm:$0xff]
        %v3669 = vld [vmem:[#allocation15 + $0xf8] sm:$0xff]
        %v3670 = vperm.slane %v615, 5
        %v3671 = vperm.slane %v616, 5
        %v3704 = vunpack.c.l.b16 %v3638
        %v3705 = vunpack.c.h.b16 %v3638
        %v3706 = vunpack.c.l.b16 %v3639
        %v3707 = vunpack.c.h.b16 %v3639
        %v3708 = vunpack.c.l.b16 %v3640
        %v3709 = vunpack.c.h.b16 %v3640
        %v3710 = vunpack.c.l.b16 %v3641
        %v3711 = vunpack.c.h.b16 %v3641
        %v3712 = vunpack.c.l.b16 %v3642
        %v3713 = vunpack.c.h.b16 %v3642
        %v3714 = vunpack.c.l.b16 %v3643
        %v3715 = vunpack.c.h.b16 %v3643
        %v3716 = vunpack.c.l.b16 %v3644
        %v3717 = vunpack.c.h.b16 %v3644
        %v3718 = vunpack.c.l.b16 %v3645
        %v3719 = vunpack.c.h.b16 %v3645
        %v3720 = vunpack.c.l.b16 %v3646
        %v3721 = vunpack.c.h.b16 %v3646
        %v3722 = vunpack.c.l.b16 %v3647
        %v3723 = vunpack.c.h.b16 %v3647
        %v3724 = vunpack.c.l.b16 %v3648
        %v3725 = vunpack.c.h.b16 %v3648
        %v3726 = vunpack.c.l.b16 %v3649
        %v3727 = vunpack.c.h.b16 %v3649
        %v3728 = vunpack.c.l.b16 %v3650
        %v3729 = vunpack.c.h.b16 %v3650
        %v3730 = vunpack.c.l.b16 %v3651
        %v3731 = vunpack.c.h.b16 %v3651
        %v3732 = vunpack.c.l.b16 %v3652
        %v3733 = vunpack.c.h.b16 %v3652
        %v3734 = vunpack.c.l.b16 %v3653
        %v3735 = vunpack.c.h.b16 %v3653
        %v3736 = vunpack.c.l.b16 %v3654
        %v3737 = vunpack.c.h.b16 %v3654
        %v3738 = vunpack.c.l.b16 %v3655
        %v3739 = vunpack.c.h.b16 %v3655
        %v3740 = vunpack.c.l.b16 %v3656
        %v3741 = vunpack.c.h.b16 %v3656
        %v3742 = vunpack.c.l.b16 %v3657
        %v3743 = vunpack.c.h.b16 %v3657
        %v3744 = vunpack.c.l.b16 %v3658
        %v3745 = vunpack.c.h.b16 %v3658
        %v3746 = vunpack.c.l.b16 %v3659
        %v3747 = vunpack.c.h.b16 %v3659
        %v3748 = vunpack.c.l.b16 %v3660
        %v3749 = vunpack.c.h.b16 %v3660
        %v3750 = vunpack.c.l.b16 %v3661
        %v3751 = vunpack.c.h.b16 %v3661
        %v3752 = vunpack.c.l.b16 %v3662
        %v3753 = vunpack.c.h.b16 %v3662
        %v3754 = vunpack.c.l.b16 %v3663
        %v3755 = vunpack.c.h.b16 %v3663
        %v3756 = vunpack.c.l.b16 %v3664
        %v3757 = vunpack.c.h.b16 %v3664
        %v3758 = vunpack.c.l.b16 %v3665
        %v3759 = vunpack.c.h.b16 %v3665
        %v3760 = vunpack.c.l.b16 %v3666
        %v3761 = vunpack.c.h.b16 %v3666
        %v3762 = vunpack.c.l.b16 %v3667
        %v3763 = vunpack.c.h.b16 %v3667
        %v3764 = vunpack.c.l.b16 %v3668
        %v3765 = vunpack.c.h.b16 %v3668
        %v3766 = vunpack.c.l.b16 %v3669
        %v3767 = vunpack.c.h.b16 %v3669
        %v3768 = vpack.c.b16 %v3706, %v3704
        %v3769 = vpack.c.b16 %v3707, %v3705
        %v3770 = vpack.c.b16 %v3710, %v3708
        %v3771 = vpack.c.b16 %v3711, %v3709
        %v3772 = vpack.c.b16 %v3714, %v3712
        %v3773 = vpack.c.b16 %v3715, %v3713
        %v3774 = vpack.c.b16 %v3718, %v3716
        %v3775 = vpack.c.b16 %v3719, %v3717
        %v3776 = vpack.c.b16 %v3722, %v3720
        %v3777 = vpack.c.b16 %v3723, %v3721
        %v3778 = vpack.c.b16 %v3726, %v3724
        %v3779 = vpack.c.b16 %v3727, %v3725
        %v3780 = vpack.c.b16 %v3730, %v3728
        %v3781 = vpack.c.b16 %v3731, %v3729
        %v3782 = vpack.c.b16 %v3734, %v3732
        %v3783 = vpack.c.b16 %v3735, %v3733
        %v3784 = vpack.c.b16 %v3738, %v3736
        %v3785 = vpack.c.b16 %v3739, %v3737
        %v3786 = vpack.c.b16 %v3742, %v3740
        %v3787 = vpack.c.b16 %v3743, %v3741
        %v3788 = vpack.c.b16 %v3746, %v3744
        %v3789 = vpack.c.b16 %v3747, %v3745
        %v3790 = vpack.c.b16 %v3750, %v3748
        %v3791 = vpack.c.b16 %v3751, %v3749
        %v3792 = vpack.c.b16 %v3754, %v3752
        %v3793 = vpack.c.b16 %v3755, %v3753
        %v3794 = vpack.c.b16 %v3758, %v3756
        %v3795 = vpack.c.b16 %v3759, %v3757
        %v3796 = vpack.c.b16 %v3762, %v3760
        %v3797 = vpack.c.b16 %v3763, %v3761
        %v3798 = vpack.c.b16 %v3766, %v3764
        %v3799 = vpack.c.b16 %v3767, %v3765
        %3832 = vmatpush.bf16.msra.mxu0 %v3782
        %3833 = vmatpush.bf16.msra.mxu0 %v3780
        %3834 = vmatpush.bf16.msra.mxu0 %v3778
        %3835 = vmatpush.bf16.msra.mxu0 %v3776
        %3836 = vmatpush.bf16.msra.mxu0 %v3774
        %3837 = vmatpush.bf16.msra.mxu0 %v3772
        %3838 = vmatpush.bf16.msra.mxu0 %v3770
        %3839 = vmatpush.bf16.msra.mxu0 %v3768
        %3840 = vmatmul.bf16.gmra.mxu0 %v3636
        %v3841 = vpop.f32.mrf.mxu0
        %v3842 = vadd.f32 %v3670, %v3841
        %v3843 = vpop.f32.mrf.mxu0
        %3844 = vdwg.mxu0
        %3845 = vmatpush.bf16.msra.mxu0 %v3798
        %3846 = vmatpush.bf16.msra.mxu0 %v3796
        %3847 = vmatpush.bf16.msra.mxu0 %v3794
        %3848 = vmatpush.bf16.msra.mxu0 %v3792
        %3849 = vmatpush.bf16.msra.mxu0 %v3790
        %3850 = vmatpush.bf16.msra.mxu0 %v3788
        %3851 = vmatpush.bf16.msra.mxu0 %v3786
        %3852 = vmatpush.bf16.msra.mxu0 %v3784
        %3853 = vmatmul.bf16.gmra.mxu0 %v3637
        %v3854 = vpop.f32.mrf.mxu0
        %v3855 = vadd.f32 %v3842, %v3854
        %v3856 = vpop.f32.mrf.mxu0
        %3857 = vdwg.mxu0
        %3858 = vmatpush.bf16.msra.mxu0 %v3783
        %3859 = vmatpush.bf16.msra.mxu0 %v3781
        %3860 = vmatpush.bf16.msra.mxu0 %v3779
        %3861 = vmatpush.bf16.msra.mxu0 %v3777
        %3862 = vmatpush.bf16.msra.mxu0 %v3775
        %3863 = vmatpush.bf16.msra.mxu0 %v3773
        %3864 = vmatpush.bf16.msra.mxu0 %v3771
        %3865 = vmatpush.bf16.msra.mxu0 %v3769
        %3866 = vmatmul.bf16.gmra.mxu0 %v3636
        %v3867 = vpop.f32.mrf.mxu0
        %v3868 = vadd.f32 %v3671, %v3867
        %v3869 = vpop.f32.mrf.mxu0
        %3870 = vdwg.mxu0
        %3871 = vmatpush.bf16.msra.mxu0 %v3799
        %3872 = vmatpush.bf16.msra.mxu0 %v3797
        %3873 = vmatpush.bf16.msra.mxu0 %v3795
        %3874 = vmatpush.bf16.msra.mxu0 %v3793
        %3875 = vmatpush.bf16.msra.mxu0 %v3791
        %3876 = vmatpush.bf16.msra.mxu0 %v3789
        %3877 = vmatpush.bf16.msra.mxu0 %v3787
        %3878 = vmatpush.bf16.msra.mxu0 %v3785
        %3879 = vmatmul.bf16.gmra.mxu0 %v3637
        %v3880 = vpop.f32.mrf.mxu0
        %v3881 = vadd.f32 %v3868, %v3880
        %v3882 = vpop.f32.mrf.mxu0
        %3883 = vdwg.mxu0
        %v3884 = vmax.f32 %v3855, 0.0
        %v3885 = vmax.f32 %v3881, 0.0
        %v3886 = vpack.c.bf16 %v3884, %v3884
        %v3887 = vpack.c.bf16 %v3885, %v3885
        %v3888 = vld [vmem:[#allocation17] sm:$0xf]
        %v3889 = vld [vmem:[#allocation17 + $0x4] sm:$0xf]
        %v3890 = vld [vmem:[#allocation17 + $0x8] sm:$0xf]
        %v3891 = vld [vmem:[#allocation17 + $0xc] sm:$0xf]
        %v3892 = vld [vmem:[#allocation17 + $0x10] sm:$0xf]
        %v3893 = vld [vmem:[#allocation17 + $0x14] sm:$0xf]
        %v3894 = vld [vmem:[#allocation17 + $0x18] sm:$0xf]
        %v3895 = vld [vmem:[#allocation17 + $0x1c] sm:$0xf]
        %v3896 = vld [vmem:[#allocation17 + $0x20] sm:$0xf]
        %v3897 = vld [vmem:[#allocation17 + $0x24] sm:$0xf]
        %v3898 = vld [vmem:[#allocation17 + $0x28] sm:$0xf]
        %v3899 = vld [vmem:[#allocation17 + $0x2c] sm:$0xf]
        %v3900 = vld [vmem:[#allocation17 + $0x30] sm:$0xf]
        %v3901 = vld [vmem:[#allocation17 + $0x34] sm:$0xf]
        %v3902 = vld [vmem:[#allocation17 + $0x38] sm:$0xf]
        %v3903 = vld [vmem:[#allocation17 + $0x3c] sm:$0xf]
        %v3904 = vld [vmem:[#allocation17 + $0x40] sm:$0xf]
        %v3905 = vld [vmem:[#allocation17 + $0x44] sm:$0xf]
        %v3906 = vld [vmem:[#allocation17 + $0x48] sm:$0xf]
        %v3907 = vld [vmem:[#allocation17 + $0x4c] sm:$0xf]
        %v3908 = vld [vmem:[#allocation17 + $0x50] sm:$0xf]
        %v3909 = vld [vmem:[#allocation17 + $0x54] sm:$0xf]
        %v3910 = vld [vmem:[#allocation17 + $0x58] sm:$0xf]
        %v3911 = vld [vmem:[#allocation17 + $0x5c] sm:$0xf]
        %v3912 = vld [vmem:[#allocation17 + $0x60] sm:$0xf]
        %v3913 = vld [vmem:[#allocation17 + $0x64] sm:$0xf]
        %v3914 = vld [vmem:[#allocation17 + $0x68] sm:$0xf]
        %v3915 = vld [vmem:[#allocation17 + $0x6c] sm:$0xf]
        %v3916 = vld [vmem:[#allocation17 + $0x70] sm:$0xf]
        %v3917 = vld [vmem:[#allocation17 + $0x74] sm:$0xf]
        %v3918 = vld [vmem:[#allocation17 + $0x78] sm:$0xf]
        %v3919 = vld [vmem:[#allocation17 + $0x7c] sm:$0xf]
        %v3920 = vperm.slane %v617, 0
        %v3953 = vunpack.c.l.b16 %v3888
        %v3954 = vunpack.c.l.b16 %v3889
        %v3955 = vunpack.c.l.b16 %v3890
        %v3956 = vunpack.c.l.b16 %v3891
        %v3957 = vunpack.c.l.b16 %v3892
        %v3958 = vunpack.c.l.b16 %v3893
        %v3959 = vunpack.c.l.b16 %v3894
        %v3960 = vunpack.c.l.b16 %v3895
        %v3961 = vunpack.c.l.b16 %v3896
        %v3962 = vunpack.c.l.b16 %v3897
        %v3963 = vunpack.c.l.b16 %v3898
        %v3964 = vunpack.c.l.b16 %v3899
        %v3965 = vunpack.c.l.b16 %v3900
        %v3966 = vunpack.c.l.b16 %v3901
        %v3967 = vunpack.c.l.b16 %v3902
        %v3968 = vunpack.c.l.b16 %v3903
        %v3969 = vunpack.c.l.b16 %v3904
        %v3970 = vunpack.c.l.b16 %v3905
        %v3971 = vunpack.c.l.b16 %v3906
        %v3972 = vunpack.c.l.b16 %v3907
        %v3973 = vunpack.c.l.b16 %v3908
        %v3974 = vunpack.c.l.b16 %v3909
        %v3975 = vunpack.c.l.b16 %v3910
        %v3976 = vunpack.c.l.b16 %v3911
        %v3977 = vunpack.c.l.b16 %v3912
        %v3978 = vunpack.c.l.b16 %v3913
        %v3979 = vunpack.c.l.b16 %v3914
        %v3980 = vunpack.c.l.b16 %v3915
        %v3981 = vunpack.c.l.b16 %v3916
        %v3982 = vunpack.c.l.b16 %v3917
        %v3983 = vunpack.c.l.b16 %v3918
        %v3984 = vunpack.c.l.b16 %v3919
        %v3985 = vpack.c.b16 %v3954, %v3953
        %v3986 = vpack.c.b16 %v3956, %v3955
        %v3987 = vpack.c.b16 %v3958, %v3957
        %v3988 = vpack.c.b16 %v3960, %v3959
        %v3989 = vpack.c.b16 %v3962, %v3961
        %v3990 = vpack.c.b16 %v3964, %v3963
        %v3991 = vpack.c.b16 %v3966, %v3965
        %v3992 = vpack.c.b16 %v3968, %v3967
        %v3993 = vpack.c.b16 %v3970, %v3969
        %v3994 = vpack.c.b16 %v3972, %v3971
        %v3995 = vpack.c.b16 %v3974, %v3973
        %v3996 = vpack.c.b16 %v3976, %v3975
        %v3997 = vpack.c.b16 %v3978, %v3977
        %v3998 = vpack.c.b16 %v3980, %v3979
        %v3999 = vpack.c.b16 %v3982, %v3981
        %v4000 = vpack.c.b16 %v3984, %v3983
        %4017 = vmatpush.bf16.msra.mxu0 %v3992
        %4018 = vmatpush.bf16.msra.mxu0 %v3991
        %4019 = vmatpush.bf16.msra.mxu0 %v3990
        %4020 = vmatpush.bf16.msra.mxu0 %v3989
        %4021 = vmatpush.bf16.msra.mxu0 %v3988
        %4022 = vmatpush.bf16.msra.mxu0 %v3987
        %4023 = vmatpush.bf16.msra.mxu0 %v3986
        %4024 = vmatpush.bf16.msra.mxu0 %v3985
        %4025 = vmatmul.bf16.gmra.mxu0 %v3886
        %v4026 = vpop.f32.mrf.mxu0
        %v4027 = vadd.f32 %v3920, %v4026
        %v4028 = vpop.f32.mrf.mxu0
        %4029 = vdwg.mxu0
        %4030 = vmatpush.bf16.msra.mxu0 %v4000
        %4031 = vmatpush.bf16.msra.mxu0 %v3999
        %4032 = vmatpush.bf16.msra.mxu0 %v3998
        %4033 = vmatpush.bf16.msra.mxu0 %v3997
        %4034 = vmatpush.bf16.msra.mxu0 %v3996
        %4035 = vmatpush.bf16.msra.mxu0 %v3995
        %4036 = vmatpush.bf16.msra.mxu0 %v3994
        %4037 = vmatpush.bf16.msra.mxu0 %v3993
        %4038 = vmatmul.bf16.gmra.mxu0 %v3887
        %v4039 = vpop.f32.mrf.mxu0
        %v4040 = vadd.f32 %v4027, %v4039
        %v4041 = vpop.f32.mrf.mxu0
        %4042 = vdwg.mxu0
        %vm4043 = vcmp.lt.s32.totalorder %v3596, 64
        %v4044 = vsel %vm4043, 1, 0
        %v4045 = vcvt.s32.f32 %v4044
        %vm4046 = vcmask 1041408
        %v4047 = vsel %vm4046, %v4040, 0.0
        %4048 = vadd.xlane.f32.xlu0 %v4047
        %v4049 = vpop.xlane.xlu0 %4048
        %v4050 = vmul.f32 %v4049, 0.015625
        %v4051 = vsub.f32 %v4040, %v4050
        %v4052 = vmul.f32 %v4051, %v4045
        %v4053 = vmul.f32 %v4052, %v4052
        %v4054 = vsel %vm4046, %v4053, 0.0
        %4055 = vadd.xlane.f32.xlu0 %v4054
        %v4056 = vpop.xlane.xlu0 %4055
        %v4057 = vmul.f32 %v4056, 0.015625
        %v4058 = vadd.f32 %v4057, 1e-05
        %v4059 = vrsqrt.pop %v4058
        %v4060 = vmul.f32 %v4059, %v4058
        %v4061 = vmul.f32 %v4060, %v4059
        %v4062 = vmul.f32 0.5, %v4061
        %v4063 = vsub.f32 1.5, %v4062
        %v4064 = vmul.f32 %v4059, %v4063
        %vm4065 = vweird.f32 %v4058
        %vm4066 = vweird.f32 %v4059
        %vm4067 = vmor %vm4065, %vm4066
        %v4068 = vsel %vm4067, %v4059, %v4064
        %v4069 = vmul.f32 %v4052, %v4068
        %v4070 = vperm.slane %v617, 1
        %v4071 = vmul.f32 %v4069, %v4070
        %v4072 = vperm.slane %v617, 2
        %v4073 = vadd.f32 %v4071, %v4072
        %4074 = vst [vmem:[%s605] sm:$0x3] %v4073
        %s4075 = sand.u32 %s306, 1
        %s4076 = scalar_lea.sflag [#allocation5], %s4075
        %s4077 = sand.u32 %s306, 1
        %s4078 = smul.addr %s4077, 2
        %s4079 = scalar_lea.vmem [#allocation20], %s4078
        // Predicated region
        $region109: #{tpu_custom_call.1} parent=67 // pred_check
          %p4080 = pneg %p316
        $region110: #{tpu_custom_call.1} parent=67 // pred_check_branch
          %4082 = sbr.rel (%p4080) target = $region112
        $region111: #{tpu_custom_call.1} parent=67 // pred_region
          %4084 = vsyncadd %s4076, 0
          %s4085 = smul.addr %s36, 2
          %s4086 = scalar_lea.hbm %s12, %s4085
          %s4088 = sshll.u32 %s4079, 4
          %s4089 = int_to_ptr.vmem [resolvable:$true] %s4088
          %s4090 = sshll.u32 %s4086, 4
          %s4091 = int_to_ptr.hbm [resolvable:$true] %s4090
          %4093 = dma.vmem_to_hbm [thread:$0]  %s4089, 32, %s4091, %s4076
        $region112: #{tpu_custom_call.1} parent=67 // pred_fallthru
          _
      $region68: #{tpu_custom_call.1} parent=5 // pred_fallthru
        _
      %p4094 = scmp.le.s32.totalorder 2, %s31
      // Predicated region
      $region113: #{tpu_custom_call.1} parent=5 // pred_check
        %p4095 = pneg %p4094
      $region114: #{tpu_custom_call.1} parent=5 // pred_check_branch
        %4097 = sbr.rel (%p4095) target = $region116
      $region115: #{tpu_custom_call.1} parent=5 // pred_region
        %s4098 = ssub.s32 %s31, 2
        // Predicated region
        $region117: #{tpu_custom_call.1} parent=115 // pred_check
          %p4099 = pneg %p322
        $region118: #{tpu_custom_call.1} parent=115 // pred_check_branch
          %4101 = sbr.rel (%p4099) target = $region120
        $region119: #{tpu_custom_call.1} parent=115 // pred_region
          %s4102 = sand.u32 %s307, 1
          %s4103 = scalar_lea.sflag [#allocation5], %s4102
          %s4104 = sand.u32 %s307, 1
          %s4105 = smul.addr %s4104, 2
          %s4106 = scalar_lea.vmem [#allocation20], %s4105
          %4108 = dma.done %s4103, 32
        $region120: #{tpu_custom_call.1} parent=115 // pred_fallthru
          _
      $region116: #{tpu_custom_call.1} parent=5 // pred_fallthru
        _
    $region6: #{tpu_custom_call.1} parent=1 // loop_footer
      %s35 = sadd.s32 1, %s31
    $region7: #{tpu_custom_call.1} parent=1 // loop_footer_branch
      %30 = sbr.rel target = $region3
    $region8: #{tpu_custom_call.1} parent=1 // loop_exit
      _
    %4109 = vsyncpa [#allocation4], 1
    %s4110 = scalar_lea.sflag [#allocation4], 1
    %4111 = vsyncpa %s4110, 1
    %4112 = vsyncpa [#allocation7], 1
    %s4113 = scalar_lea.sflag [#allocation7], 1
    %4114 = vsyncpa %s4113, 1
    %4115 = vsyncpa [#allocation10], 1
    %4116 = vsyncpa [#allocation13], 1
    %4117 = vsyncpa [#allocation16], 1
    %4118 = vsyncpa [#allocation19], 1
    %4119 = vsyncpa [#allocation5], 1
    %s4120 = scalar_lea.sflag [#allocation5], 1
    %4121 = vsyncpa %s4120, 1

</llo_original>
